<compile_context>
chip_gen: v7x
topology: tpu7x:2x2x1
jax: 0.10.0
libtpu: 0.0.40
codegen_flags: <defaults>
</compile_context>

<pallas_src>
import functools

import jax
import jax.numpy as jnp
from jax.experimental import pallas as pl
from jax.experimental.pallas import tpu as pltpu

EPS = 1e-5  # PyTorch LayerNorm default eps


def _layer_norm(x, w, b):
    # f32 LayerNorm over the last dim; w, b are (1, C) and broadcast.
    mu = jnp.mean(x, axis=-1, keepdims=True)
    var = jnp.mean(jnp.square(x - mu), axis=-1, keepdims=True)
    return (x - mu) * jax.lax.rsqrt(var + EPS) * w + b


def transformer_encoder_kernel(num_heads, exp_dtype,
                               xq_ref, xkv_ref,
                               vec_ref,
                               q_w_ref, kv_w_ref, kv_b_ref,
                               out_w_ref,
                               fc1_w_ref, fc1_b_ref, fc2_w_ref,
                               o_ref,
                               k_scratch, v_scratch):
    xq = xq_ref[...]                         # (Tq, C) query rows / residual (current seq tile)
    Tq, C = xq.shape
    N = xkv_ref.shape[0]
    H = num_heads
    d = C // H
    mm_dtype = q_w_ref.dtype                 # bf16 matmul operands, f32 accumulation

    # Packed small vectors: rows = [ln1_w, ln1_b, ln2_w, ln2_b, q_b(scaled), out_b, fc2_b, pad].
    vecs = vec_ref[...]                      # (8, C) f32
    ln1_w, ln1_b = vecs[0:1, :], vecs[1:2, :]
    ln2_w, ln2_b = vecs[2:3, :], vecs[3:4, :]
    q_b, out_b, fc2_b = vecs[4:5, :], vecs[5:6, :], vecs[6:7, :]

    # ---- hoisted: full-sequence LayerNorm + KV projection, once per batch (n == 0) ----
    @pl.when(pl.program_id(1) == 0)
    def _():
        xkv = xkv_ref[...]                                             # (N, C) f32
        xkv_n = _layer_norm(xkv, ln1_w, ln1_b)
        kv = jnp.dot(xkv_n.astype(mm_dtype), kv_w_ref[...],
                     preferred_element_type=jnp.float32) + kv_b_ref[...]   # (N, 2C) f32
        k = kv[:, :C].astype(mm_dtype)
        v = kv[:, C:].astype(mm_dtype)
        # Head relayout done once per batch (not per query tile).
        k_scratch[...] = jnp.swapaxes(k.reshape(N, H, d), 0, 1)        # (H, N, d)
        v_scratch[...] = jnp.swapaxes(v.reshape(N, H, d), 0, 1)        # (H, N, d)

    kh = k_scratch[...]                      # (H, N, d) bf16
    vh = v_scratch[...]                      # (H, N, d) bf16

    # ---------------- pre_norm_mha: LayerNorm -> MHSA -> (dropout = identity) ----------------
    xq_n = _layer_norm(xq, ln1_w, ln1_b)
    # 1/sqrt(d) is pre-folded into q_w / q_b (see prepare_params): no per-step q scaling.
    q = jnp.dot(xq_n.astype(mm_dtype), q_w_ref[...],
                preferred_element_type=jnp.float32) + q_b               # (Tq, C) f32
    qh = jnp.swapaxes(q.reshape(Tq, H, d), 0, 1).astype(mm_dtype)       # (H, Tq, d)

    s = jnp.einsum("hqd,hkd->hqk", qh, kh,
                   preferred_element_type=jnp.float32)                  # (H, Tq, N) f32
    m = jnp.max(s, axis=-1, keepdims=True)
    p = jnp.exp((s - m).astype(exp_dtype))                              # bf16 exp on v6e/v7x
    l = jnp.sum(p, axis=-1, keepdims=True, dtype=jnp.float32)           # (H, Tq, 1) f32

    # Unnormalized PV matmul; normalization deferred to the (H, Tq, d) result (N/d smaller).
    ctx = jnp.einsum("hqk,hkd->hqd", p.astype(mm_dtype), vh,
                     preferred_element_type=jnp.float32)                # (H, Tq, d) f32
    ctx = ctx * pl.reciprocal(l, approx=True)
    attn = jnp.swapaxes(ctx, 0, 1).reshape(Tq, C)

    mha = jnp.dot(attn.astype(mm_dtype), out_w_ref[...],
                  preferred_element_type=jnp.float32) + out_b
    # TODO(synk): dropout / attn_dropout / ffn_dropout are identity at inference; not emulated.
    x1 = xq + mha

    # ---------------- pre_norm_ffn: LayerNorm -> Linear -> ReLU -> Linear ----------------
    yn = _layer_norm(x1, ln2_w, ln2_b)
    h1 = jnp.dot(yn.astype(mm_dtype), fc1_w_ref[...],
                 preferred_element_type=jnp.float32) + fc1_b_ref[...]
    h1 = jnp.maximum(h1, 0.0)   # default activation in build_act_layer is 'relu'
    h2 = jnp.dot(h1.astype(mm_dtype), fc2_w_ref[...],
                 preferred_element_type=jnp.float32) + fc2_b
    o_ref[...] = (x1 + h2).astype(o_ref.dtype)


def prepare_params(params, num_heads, matmul_dtype=jnp.bfloat16):
    """One-time (load-time) weight transform for the kernel:
       - split qkv into q / kv and fold 1/sqrt(head_dim) into the q projection (weight + bias),
       - pack the eight small (1,C) vectors into a single (8,C) f32 input,
       - cast matmul weight matrices to bf16 (kernel accumulates in f32)."""
    C = params["qkv_w"].shape[0]
    d = C // num_heads
    scale = float(d) ** -0.5
    vecs = jnp.concatenate(
        [params["ln1_w"], params["ln1_b"],
         params["ln2_w"], params["ln2_b"],
         params["qkv_b"][:, :C] * scale,   # q bias (scale folded in)
         params["out_b"], params["fc2_b"],
         jnp.zeros((1, C), jnp.float32)],  # pad to 8 sublanes
        axis=0).astype(jnp.float32)        # (8, C)
    return {
        "vecs": vecs,
        "q_w": (params["qkv_w"][:, :C] * scale).astype(matmul_dtype),
        "kv_w": params["qkv_w"][:, C:].astype(matmul_dtype),
        "kv_b": params["qkv_b"][:, C:],
        "out_w": params["out_w"].astype(matmul_dtype),
        "fc1_w": params["fc1_w"].astype(matmul_dtype),
        "fc1_b": params["fc1_b"],
        "fc2_w": params["fc2_w"].astype(matmul_dtype),
    }


PARAM_ORDER = ["vecs", "q_w", "kv_w", "kv_b", "out_w", "fc1_w", "fc1_b", "fc2_w"]


def _device_kind():
    try:
        return jax.devices()[0].device_kind.lower()
    except Exception:
        return ""


def _default_exp_dtype():
    # bf16 exp ~doubles EUP throughput on v6e/v7x; older parts have no bf16 EUP/VPU.
    kind = _device_kind()
    return jnp.bfloat16 if ("v6" in kind or "v7" in kind) else jnp.float32


def _default_tile_n():
    # 256-row query tiles feed v6e's 256x256 MXU and halve grid steps; 128 elsewhere.
    return 256 if "v6" in _device_kind() else 128


def _vmem_limit_bytes():
    # Generation-aware scoped-VMEM budget with headroom (128 MiB parts -> ~100 MiB, v7x -> ~48 MiB).
    try:
        cap = int(pltpu.get_tpu_info().vmem_capacity_bytes)
    except Exception:
        cap = 64 * 1024 * 1024
    return max(32 * 1024 * 1024, min(cap - (16 << 20), 100 * 1024 * 1024))


def _block_spec(shape, index_map, pipeline_mode=None):
    if pipeline_mode is None:
        return pl.BlockSpec(shape, index_map)
    return pl.BlockSpec(shape, index_map, pipeline_mode=pipeline_mode)


def transformer_encoder(x, kparams, num_heads, tile_n=None, exp_dtype=None):
    B, N, C = x.shape
    assert C % num_heads == 0, "embed_dim must be divisible by num_heads"
    if tile_n is None:
        tile_n = _default_tile_n()
    tile_n = min(tile_n, N)
    assert N % tile_n == 0, "sequence length must be divisible by the sequence tile"
    H = num_heads
    d = C // H
    ffn = kparams["fc1_w"].shape[1]
    mm_dtype = kparams["q_w"].dtype
    if exp_dtype is None:
        exp_dtype = _default_exp_dtype()

    weights = [kparams[n] for n in PARAM_ORDER]

    def build(single_buffer_resident):
        resident_mode = pl.Buffered(1) if single_buffer_resident else None

        def weight_spec(w):
            nd = w.ndim
            return _block_spec(w.shape, lambda b, n, _nd=nd: (0,) * _nd, resident_mode)

        # Q rows / residual / output tiled over the sequence; K/V see the full sequence.
        xq_spec = pl.BlockSpec((pl.Squeezed(), tile_n, C), lambda b, n: (b, n, 0))
        xkv_spec = _block_spec((pl.Squeezed(), N, C), lambda b, n: (b, 0, 0), resident_mode)
        out_spec = pl.BlockSpec((pl.Squeezed(), tile_n, C), lambda b, n: (b, n, 0))

        # Advisory cost hint (KV projection counted once per batch, output bytes included).
        flops = 2 * B * N * (4 * C * C + 2 * N * C + 2 * C * ffn)
        transcendentals = B * H * N * N + 3 * B * N + B * H * N
        bytes_accessed = 3 * x.size * x.dtype.itemsize + sum(
            int(w.size) * jnp.dtype(w.dtype).itemsize for w in weights)
        cost = pl.CostEstimate(flops=flops, transcendentals=transcendentals,
                               bytes_accessed=bytes_accessed)

        kernel = functools.partial(transformer_encoder_kernel, num_heads, exp_dtype)
        return pl.pallas_call(
            kernel,
            out_shape=jax.ShapeDtypeStruct((B, N, C), x.dtype),
            grid_spec=pltpu.PrefetchScalarGridSpec(
                num_scalar_prefetch=0,
                grid=(B, N // tile_n),
                in_specs=[xq_spec, xkv_spec] + [weight_spec(w) for w in weights],
                out_specs=out_spec,
                scratch_shapes=[pltpu.VMEM((H, N, d), mm_dtype),   # K, head-major, per batch
                                pltpu.VMEM((H, N, d), mm_dtype)],  # V, head-major, per batch
            ),
            compiler_params=pltpu.CompilerParams(
                # B stays "parallel" (2 TensorCores on v7x shard over batch); the sequence axis
                # MUST be "arbitrary" because the hoisted K/V scratch carries across it.
                dimension_semantics=("parallel", "arbitrary"),
                vmem_limit_bytes=_vmem_limit_bytes(),
            ),
            cost_estimate=cost,
        )

    try:
        return build(True)(x, x, *weights)
    except Exception:
        # Fallback if this jax build rejects pl.Buffered(1) on pallas_call BlockSpecs.
        return build(False)(x, x, *weights)


def reference(x, p, num_heads):
    """Pure-JAX f32 reference mirroring the PyTorch forward (eval mode)."""
    B, N, C = x.shape
    d = C // num_heads

    def ln(t, w, b):
        mu = t.mean(-1, keepdims=True)
        var = ((t - mu) ** 2).mean(-1, keepdims=True)
        return (t - mu) * jax.lax.rsqrt(var + EPS) * w + b

    xn = ln(x, p["ln1_w"][0], p["ln1_b"][0])
    qkv = xn @ p["qkv_w"] + p["qkv_b"][0]
    qkv = qkv.reshape(B, N, 3, num_heads, d)
    q = qkv[:, :, 0].transpose(0, 2, 1, 3) * (float(d) ** -0.5)
    k = qkv[:, :, 1].transpose(0, 2, 1, 3)
    v = qkv[:, :, 2].transpose(0, 2, 1, 3)
    s = jnp.einsum("bhnd,bhmd->bhnm", q, k)
    a = jax.nn.softmax(s, axis=-1)
    o = jnp.einsum("bhnm,bhmd->bhnd", a, v).transpose(0, 2, 1, 3).reshape(B, N, C)
    x1 = x + (o @ p["out_w"] + p["out_b"][0])
    yn = ln(x1, p["ln2_w"][0], p["ln2_b"][0])
    h = jnp.maximum(yn @ p["fc1_w"] + p["fc1_b"][0], 0.0)
    return x1 + (h @ p["fc2_w"] + p["fc2_b"][0])


if __name__ == "__main__":
    B, N, C, FFN, HEADS = 2, 8, 32, 64, 8

    key = jax.random.PRNGKey(0)
    ks = jax.random.split(key, 9)

    # Weights stored pre-transposed so the kernel computes x @ W (+ b).
    params = {
        "ln1_w": jnp.ones((1, C), jnp.float32),
        "ln1_b": jnp.zeros((1, C), jnp.float32),
        "qkv_w": 0.1 * jax.random.normal(ks[0], (C, 3 * C), jnp.float32),
        "qkv_b": 0.1 * jax.random.normal(ks[1], (1, 3 * C), jnp.float32),
        "out_w": 0.1 * jax.random.normal(ks[2], (C, C), jnp.float32),
        "out_b": 0.1 * jax.random.normal(ks[3], (1, C), jnp.float32),
        "ln2_w": jnp.ones((1, C), jnp.float32),
        "ln2_b": jnp.zeros((1, C), jnp.float32),
        "fc1_w": 0.1 * jax.random.normal(ks[4], (C, FFN), jnp.float32),
        "fc1_b": 0.1 * jax.random.normal(ks[5], (1, FFN), jnp.float32),
        "fc2_w": 0.1 * jax.random.normal(ks[6], (FFN, C), jnp.float32),
        "fc2_b": 0.1 * jax.random.normal(ks[7], (1, C), jnp.float32),
    }
    x = jax.random.normal(ks[8], (B, N, C), jnp.float32)

    kparams = prepare_params(params, HEADS, matmul_dtype=jnp.bfloat16)
    out = jax.block_until_ready(transformer_encoder(x, kparams, HEADS))
    ref = jax.block_until_ready(reference(x, params, HEADS))

    assert out.shape == (B, N, C)
    # bf16 matmul operands (+ bf16 exp on v6e/v7x) + approx softmax reciprocal -> relaxed tolerance.
    assert jnp.allclose(out, ref, atol=5e-2, rtol=5e-2), "mismatch vs pure-JAX reference"

    print("KERNEL_OK")
</pallas_src>

<mosaic_0001>
module attributes {stable_mosaic.version = 11 : i64} {
  func.func @transformer_encoder_kernel(%arg0: i32, %arg1: i32, %arg2: memref<1x8x32xf32, #tpu.memory_space<vmem>>, %arg3: memref<1x8x32xf32, #tpu.memory_space<vmem>>, %arg4: memref<8x32xf32, #tpu.memory_space<vmem>>, %arg5: memref<32x32xbf16, #tpu.memory_space<vmem>>, %arg6: memref<32x64xbf16, #tpu.memory_space<vmem>>, %arg7: memref<1x64xf32, #tpu.memory_space<vmem>>, %arg8: memref<32x32xbf16, #tpu.memory_space<vmem>>, %arg9: memref<32x64xbf16, #tpu.memory_space<vmem>>, %arg10: memref<1x64xf32, #tpu.memory_space<vmem>>, %arg11: memref<64x32xbf16, #tpu.memory_space<vmem>>, %arg12: memref<1x8x32xf32, #tpu.memory_space<vmem>>, %arg13: memref<8x8x4xbf16, #tpu.memory_space<vmem>>, %arg14: memref<8x8x4xbf16, #tpu.memory_space<vmem>>) attributes {dimension_semantics = [#tpu.dimension_semantics<parallel>, #tpu.dimension_semantics<arbitrary>], iteration_bounds = array<i64: 2, 1>, scalar_prefetch = 0 : i64, scratch_operands = 2 : i64, tpu.core_type = #tpu.core_type<tc>, window_params = [{transform_indices = @transform_0, window_bounds = array<i64: 1, 8, 32>}, {pipeline_mode = #tpu.pipeline_mode<synchronous>, transform_indices = @transform_1, window_bounds = array<i64: 1, 8, 32>}, {pipeline_mode = #tpu.pipeline_mode<synchronous>, transform_indices = @transform_2, window_bounds = array<i64: 8, 32>}, {pipeline_mode = #tpu.pipeline_mode<synchronous>, transform_indices = @transform_3, window_bounds = array<i64: 32, 32>}, {pipeline_mode = #tpu.pipeline_mode<synchronous>, transform_indices = @transform_4, window_bounds = array<i64: 32, 64>}, {pipeline_mode = #tpu.pipeline_mode<synchronous>, transform_indices = @transform_5, window_bounds = array<i64: 1, 64>}, {pipeline_mode = #tpu.pipeline_mode<synchronous>, transform_indices = @transform_6, window_bounds = array<i64: 32, 32>}, {pipeline_mode = #tpu.pipeline_mode<synchronous>, transform_indices = @transform_7, window_bounds = array<i64: 32, 64>}, {pipeline_mode = #tpu.pipeline_mode<synchronous>, transform_indices = @transform_8, window_bounds = array<i64: 1, 64>}, {pipeline_mode = #tpu.pipeline_mode<synchronous>, transform_indices = @transform_9, window_bounds = array<i64: 64, 32>}, {transform_indices = @transform_10, window_bounds = array<i64: 1, 8, 32>}]} {
    %c0 = arith.constant 0 : index
    %c0_0 = arith.constant 0 : index
    %c0_1 = arith.constant 0 : index
    %0 = vector.load %arg2[%c0, %c0_0, %c0_1] : memref<1x8x32xf32, #tpu.memory_space<vmem>>, vector<1x8x32xf32>
    %1 = vector.shape_cast %0 : vector<1x8x32xf32> to vector<8x32xf32>
    %c0_2 = arith.constant 0 : index
    %c0_3 = arith.constant 0 : index
    %2 = vector.load %arg4[%c0_2, %c0_3] : memref<8x32xf32, #tpu.memory_space<vmem>>, vector<8x32xf32>
    %3 = vector.extract_strided_slice %2 {offsets = [0, 0], sizes = [1, 32], strides = [1, 1]} : vector<8x32xf32> to vector<1x32xf32>
    %4 = vector.extract_strided_slice %2 {offsets = [1, 0], sizes = [1, 32], strides = [1, 1]} : vector<8x32xf32> to vector<1x32xf32>
    %5 = vector.extract_strided_slice %2 {offsets = [2, 0], sizes = [1, 32], strides = [1, 1]} : vector<8x32xf32> to vector<1x32xf32>
    %6 = vector.extract_strided_slice %2 {offsets = [3, 0], sizes = [1, 32], strides = [1, 1]} : vector<8x32xf32> to vector<1x32xf32>
    %7 = vector.extract_strided_slice %2 {offsets = [4, 0], sizes = [1, 32], strides = [1, 1]} : vector<8x32xf32> to vector<1x32xf32>
    %8 = vector.extract_strided_slice %2 {offsets = [5, 0], sizes = [1, 32], strides = [1, 1]} : vector<8x32xf32> to vector<1x32xf32>
    %9 = vector.extract_strided_slice %2 {offsets = [6, 0], sizes = [1, 32], strides = [1, 1]} : vector<8x32xf32> to vector<1x32xf32>
    %c0_i32 = arith.constant 0 : i32
    %10 = arith.cmpi eq, %arg1, %c0_i32 : i32
    %11 = arith.extui %10 : i1 to i32
    %c0_i32_4 = arith.constant 0 : i32
    %12 = arith.cmpi ne, %11, %c0_i32_4 : i32
    scf.if %12 {
      %c0_42 = arith.constant 0 : index
      %c0_43 = arith.constant 0 : index
      %c0_44 = arith.constant 0 : index
      %105 = vector.load %arg3[%c0_42, %c0_43, %c0_44] : memref<1x8x32xf32, #tpu.memory_space<vmem>>, vector<1x8x32xf32>
      %106 = vector.shape_cast %105 : vector<1x8x32xf32> to vector<8x32xf32>
      %cst_45 = arith.constant dense<0.000000e+00> : vector<8xf32>
      %107 = vector.multi_reduction <add>, %106, %cst_45 [1] : vector<8x32xf32> to vector<8xf32>
      %108 = vector.shape_cast %107 : vector<8xf32> to vector<8x1xf32>
      %cst_46 = arith.constant 3.200000e+01 : f32
      %109 = vector.broadcast %cst_46 : f32 to vector<8x1xf32>
      %110 = arith.divf %108, %109 : vector<8x1xf32>
      %111 = vector.broadcast %110 : vector<8x1xf32> to vector<8x32xf32>
      %112 = arith.subf %106, %111 : vector<8x32xf32>
      %113 = arith.mulf %112, %112 : vector<8x32xf32>
      %cst_47 = arith.constant dense<0.000000e+00> : vector<8xf32>
      %114 = vector.multi_reduction <add>, %113, %cst_47 [1] : vector<8x32xf32> to vector<8xf32>
      %115 = vector.shape_cast %114 : vector<8xf32> to vector<8x1xf32>
      %cst_48 = arith.constant 3.200000e+01 : f32
      %116 = vector.broadcast %cst_48 : f32 to vector<8x1xf32>
      %117 = arith.divf %115, %116 : vector<8x1xf32>
      %118 = vector.broadcast %110 : vector<8x1xf32> to vector<8x32xf32>
      %119 = arith.subf %106, %118 : vector<8x32xf32>
      %cst_49 = arith.constant 9.99999974E-6 : f32
      %120 = vector.broadcast %cst_49 : f32 to vector<8x1xf32>
      %121 = arith.addf %117, %120 : vector<8x1xf32>
      %122 = math.rsqrt %121 : vector<8x1xf32>
      %123 = vector.broadcast %122 : vector<8x1xf32> to vector<8x32xf32>
      %124 = arith.mulf %119, %123 : vector<8x32xf32>
      %125 = vector.broadcast %3 : vector<1x32xf32> to vector<8x32xf32>
      %126 = arith.mulf %124, %125 : vector<8x32xf32>
      %127 = vector.broadcast %4 : vector<1x32xf32> to vector<8x32xf32>
      %128 = arith.addf %126, %127 : vector<8x32xf32>
      %129 = arith.truncf %128 : vector<8x32xf32> to vector<8x32xbf16>
      %c0_50 = arith.constant 0 : index
      %c0_51 = arith.constant 0 : index
      %130 = vector.load %arg6[%c0_50, %c0_51] : memref<32x64xbf16, #tpu.memory_space<vmem>>, vector<32x64xbf16>
      %cst_52 = arith.constant dense<0.000000e+00> : vector<8x64xf32>
      %131 = tpu.matmul %129, %130, %cst_52 {dimension_numbers = #tpu.dot_dimension_numbers<[1], [0], [0], [1], [0, 0, 1, 1], [], []>} : vector<8x32xbf16>, vector<32x64xbf16>, vector<8x64xf32> -> vector<8x64xf32>
      %c0_53 = arith.constant 0 : index
      %c0_54 = arith.constant 0 : index
      %132 = vector.load %arg7[%c0_53, %c0_54] : memref<1x64xf32, #tpu.memory_space<vmem>>, vector<1x64xf32>
      %133 = vector.broadcast %132 : vector<1x64xf32> to vector<8x64xf32>
      %134 = arith.addf %131, %133 : vector<8x64xf32>
      %135 = vector.extract_strided_slice %134 {offsets = [0, 0], sizes = [8, 32], strides = [1, 1]} : vector<8x64xf32> to vector<8x32xf32>
      %136 = arith.truncf %135 : vector<8x32xf32> to vector<8x32xbf16>
      %137 = vector.extract_strided_slice %134 {offsets = [0, 32], sizes = [8, 32], strides = [1, 1]} : vector<8x64xf32> to vector<8x32xf32>
      %138 = arith.truncf %137 : vector<8x32xf32> to vector<8x32xbf16>
      %139 = vector.shape_cast %136 : vector<8x32xbf16> to vector<8x8x4xbf16>
      %140 = tpu.transpose %139, [1, 0, 2] : vector<8x8x4xbf16> -> vector<8x8x4xbf16>
      %c0_55 = arith.constant 0 : index
      %c0_56 = arith.constant 0 : index
      %c0_57 = arith.constant 0 : index
      %141 = vector.load %arg13[%c0_55, %c0_56, %c0_57] : memref<8x8x4xbf16, #tpu.memory_space<vmem>>, vector<8x8x4xbf16>
      tpu.vector_store %arg13[%c0_55, %c0_56, %c0_57], %140 {strides = array<i32>} : memref<8x8x4xbf16, #tpu.memory_space<vmem>>, vector<8x8x4xbf16>,
      %142 = vector.shape_cast %138 : vector<8x32xbf16> to vector<8x8x4xbf16>
      %143 = tpu.transpose %142, [1, 0, 2] : vector<8x8x4xbf16> -> vector<8x8x4xbf16>
      %c0_58 = arith.constant 0 : index
      %c0_59 = arith.constant 0 : index
      %c0_60 = arith.constant 0 : index
      %144 = vector.load %arg14[%c0_58, %c0_59, %c0_60] : memref<8x8x4xbf16, #tpu.memory_space<vmem>>, vector<8x8x4xbf16>
      tpu.vector_store %arg14[%c0_58, %c0_59, %c0_60], %143 {strides = array<i32>} : memref<8x8x4xbf16, #tpu.memory_space<vmem>>, vector<8x8x4xbf16>,
    } else {
    }
    %c0_5 = arith.constant 0 : index
    %c0_6 = arith.constant 0 : index
    %c0_7 = arith.constant 0 : index
    %13 = vector.load %arg13[%c0_5, %c0_6, %c0_7] : memref<8x8x4xbf16, #tpu.memory_space<vmem>>, vector<8x8x4xbf16>
    %c0_8 = arith.constant 0 : index
    %c0_9 = arith.constant 0 : index
    %c0_10 = arith.constant 0 : index
    %14 = vector.load %arg14[%c0_8, %c0_9, %c0_10] : memref<8x8x4xbf16, #tpu.memory_space<vmem>>, vector<8x8x4xbf16>
    %cst = arith.constant dense<0.000000e+00> : vector<8xf32>
    %15 = vector.multi_reduction <add>, %1, %cst [1] : vector<8x32xf32> to vector<8xf32>
    %16 = vector.shape_cast %15 : vector<8xf32> to vector<8x1xf32>
    %cst_11 = arith.constant 3.200000e+01 : f32
    %17 = vector.broadcast %cst_11 : f32 to vector<8x1xf32>
    %18 = arith.divf %16, %17 : vector<8x1xf32>
    %19 = vector.broadcast %18 : vector<8x1xf32> to vector<8x32xf32>
    %20 = arith.subf %1, %19 : vector<8x32xf32>
    %21 = arith.mulf %20, %20 : vector<8x32xf32>
    %cst_12 = arith.constant dense<0.000000e+00> : vector<8xf32>
    %22 = vector.multi_reduction <add>, %21, %cst_12 [1] : vector<8x32xf32> to vector<8xf32>
    %23 = vector.shape_cast %22 : vector<8xf32> to vector<8x1xf32>
    %cst_13 = arith.constant 3.200000e+01 : f32
    %24 = vector.broadcast %cst_13 : f32 to vector<8x1xf32>
    %25 = arith.divf %23, %24 : vector<8x1xf32>
    %26 = vector.broadcast %18 : vector<8x1xf32> to vector<8x32xf32>
    %27 = arith.subf %1, %26 : vector<8x32xf32>
    %cst_14 = arith.constant 9.99999974E-6 : f32
    %28 = vector.broadcast %cst_14 : f32 to vector<8x1xf32>
    %29 = arith.addf %25, %28 : vector<8x1xf32>
    %30 = math.rsqrt %29 : vector<8x1xf32>
    %31 = vector.broadcast %30 : vector<8x1xf32> to vector<8x32xf32>
    %32 = arith.mulf %27, %31 : vector<8x32xf32>
    %33 = vector.broadcast %3 : vector<1x32xf32> to vector<8x32xf32>
    %34 = arith.mulf %32, %33 : vector<8x32xf32>
    %35 = vector.broadcast %4 : vector<1x32xf32> to vector<8x32xf32>
    %36 = arith.addf %34, %35 : vector<8x32xf32>
    %37 = arith.truncf %36 : vector<8x32xf32> to vector<8x32xbf16>
    %c0_15 = arith.constant 0 : index
    %c0_16 = arith.constant 0 : index
    %38 = vector.load %arg5[%c0_15, %c0_16] : memref<32x32xbf16, #tpu.memory_space<vmem>>, vector<32x32xbf16>
    %cst_17 = arith.constant dense<0.000000e+00> : vector<8x32xf32>
    %39 = tpu.matmul %37, %38, %cst_17 {dimension_numbers = #tpu.dot_dimension_numbers<[1], [0], [0], [1], [0, 0, 1, 1], [], []>} : vector<8x32xbf16>, vector<32x32xbf16>, vector<8x32xf32> -> vector<8x32xf32>
    %40 = vector.broadcast %7 : vector<1x32xf32> to vector<8x32xf32>
    %41 = arith.addf %39, %40 : vector<8x32xf32>
    %42 = vector.shape_cast %41 : vector<8x32xf32> to vector<8x8x4xf32>
    %43 = tpu.transpose %42, [1, 0, 2] : vector<8x8x4xf32> -> vector<8x8x4xf32>
    %44 = arith.truncf %43 : vector<8x8x4xf32> to vector<8x8x4xbf16>
    "tpu.trace_start"() <{level = 10 : i32, message = "hqd,hkd->hqk"}> : () -> ()
    %cst_18 = arith.constant dense<0.000000e+00> : vector<8x8x8xf32>
    %45 = tpu.matmul %44, %13, %cst_18 {dimension_numbers = #tpu.dot_dimension_numbers<[2], [2], [1], [1], [0, 0, 0, 1, 1, 1], [0], [0]>} : vector<8x8x4xbf16>, vector<8x8x4xbf16>, vector<8x8x8xf32> -> vector<8x8x8xf32>
    "tpu.trace_stop"() : () -> ()
    %cst_19 = arith.constant dense<0xFF800000> : vector<8x8xf32>
    %46 = vector.multi_reduction <maximumf>, %45, %cst_19 [2] : vector<8x8x8xf32> to vector<8x8xf32>
    %47 = vector.shape_cast %46 : vector<8x8xf32> to vector<8x8x1xf32>
    %48 = vector.broadcast %47 : vector<8x8x1xf32> to vector<8x8x8xf32>
    %49 = arith.subf %45, %48 : vector<8x8x8xf32>
    %50 = math.exp %49 : vector<8x8x8xf32>
    %cst_20 = arith.constant dense<0.000000e+00> : vector<8x8xf32>
    %51 = vector.multi_reduction <add>, %50, %cst_20 [2] : vector<8x8x8xf32> to vector<8x8xf32>
    %52 = vector.shape_cast %51 : vector<8x8xf32> to vector<8x8x1xf32>
    %53 = arith.truncf %50 : vector<8x8x8xf32> to vector<8x8x8xbf16>
    "tpu.trace_start"() <{level = 10 : i32, message = "hqk,hkd->hqd"}> : () -> ()
    %cst_21 = arith.constant dense<0.000000e+00> : vector<8x8x4xf32>
    %54 = tpu.matmul %53, %14, %cst_21 {dimension_numbers = #tpu.dot_dimension_numbers<[2], [1], [1], [2], [0, 0, 0, 1, 1, 2], [0], [0]>} : vector<8x8x8xbf16>, vector<8x8x4xbf16>, vector<8x8x4xf32> -> vector<8x8x4xf32>
    "tpu.trace_stop"() : () -> ()
    %55 = tpu.reciprocal %52 {approx = true} : vector<8x8x1xf32> -> vector<8x8x1xf32>
    %56 = vector.broadcast %55 : vector<8x8x1xf32> to vector<8x8x4xf32>
    %57 = arith.mulf %54, %56 : vector<8x8x4xf32>
    %58 = tpu.transpose %57, [1, 0, 2] : vector<8x8x4xf32> -> vector<8x8x4xf32>
    %59 = vector.shape_cast %58 : vector<8x8x4xf32> to vector<8x32xf32>
    %60 = arith.truncf %59 : vector<8x32xf32> to vector<8x32xbf16>
    %c0_22 = arith.constant 0 : index
    %c0_23 = arith.constant 0 : index
    %61 = vector.load %arg8[%c0_22, %c0_23] : memref<32x32xbf16, #tpu.memory_space<vmem>>, vector<32x32xbf16>
    %cst_24 = arith.constant dense<0.000000e+00> : vector<8x32xf32>
    %62 = tpu.matmul %60, %61, %cst_24 {dimension_numbers = #tpu.dot_dimension_numbers<[1], [0], [0], [1], [0, 0, 1, 1], [], []>} : vector<8x32xbf16>, vector<32x32xbf16>, vector<8x32xf32> -> vector<8x32xf32>
    %63 = vector.broadcast %8 : vector<1x32xf32> to vector<8x32xf32>
    %64 = arith.addf %62, %63 : vector<8x32xf32>
    %65 = arith.addf %1, %64 : vector<8x32xf32>
    %cst_25 = arith.constant dense<0.000000e+00> : vector<8xf32>
    %66 = vector.multi_reduction <add>, %65, %cst_25 [1] : vector<8x32xf32> to vector<8xf32>
    %67 = vector.shape_cast %66 : vector<8xf32> to vector<8x1xf32>
    %cst_26 = arith.constant 3.200000e+01 : f32
    %68 = vector.broadcast %cst_26 : f32 to vector<8x1xf32>
    %69 = arith.divf %67, %68 : vector<8x1xf32>
    %70 = vector.broadcast %69 : vector<8x1xf32> to vector<8x32xf32>
    %71 = arith.subf %65, %70 : vector<8x32xf32>
    %72 = arith.mulf %71, %71 : vector<8x32xf32>
    %cst_27 = arith.constant dense<0.000000e+00> : vector<8xf32>
    %73 = vector.multi_reduction <add>, %72, %cst_27 [1] : vector<8x32xf32> to vector<8xf32>
    %74 = vector.shape_cast %73 : vector<8xf32> to vector<8x1xf32>
    %cst_28 = arith.constant 3.200000e+01 : f32
    %75 = vector.broadcast %cst_28 : f32 to vector<8x1xf32>
    %76 = arith.divf %74, %75 : vector<8x1xf32>
    %77 = vector.broadcast %69 : vector<8x1xf32> to vector<8x32xf32>
    %78 = arith.subf %65, %77 : vector<8x32xf32>
    %cst_29 = arith.constant 9.99999974E-6 : f32
    %79 = vector.broadcast %cst_29 : f32 to vector<8x1xf32>
    %80 = arith.addf %76, %79 : vector<8x1xf32>
    %81 = math.rsqrt %80 : vector<8x1xf32>
    %82 = vector.broadcast %81 : vector<8x1xf32> to vector<8x32xf32>
    %83 = arith.mulf %78, %82 : vector<8x32xf32>
    %84 = vector.broadcast %5 : vector<1x32xf32> to vector<8x32xf32>
    %85 = arith.mulf %83, %84 : vector<8x32xf32>
    %86 = vector.broadcast %6 : vector<1x32xf32> to vector<8x32xf32>
    %87 = arith.addf %85, %86 : vector<8x32xf32>
    %88 = arith.truncf %87 : vector<8x32xf32> to vector<8x32xbf16>
    %c0_30 = arith.constant 0 : index
    %c0_31 = arith.constant 0 : index
    %89 = vector.load %arg9[%c0_30, %c0_31] : memref<32x64xbf16, #tpu.memory_space<vmem>>, vector<32x64xbf16>
    %cst_32 = arith.constant dense<0.000000e+00> : vector<8x64xf32>
    %90 = tpu.matmul %88, %89, %cst_32 {dimension_numbers = #tpu.dot_dimension_numbers<[1], [0], [0], [1], [0, 0, 1, 1], [], []>} : vector<8x32xbf16>, vector<32x64xbf16>, vector<8x64xf32> -> vector<8x64xf32>
    %c0_33 = arith.constant 0 : index
    %c0_34 = arith.constant 0 : index
    %91 = vector.load %arg10[%c0_33, %c0_34] : memref<1x64xf32, #tpu.memory_space<vmem>>, vector<1x64xf32>
    %92 = vector.broadcast %91 : vector<1x64xf32> to vector<8x64xf32>
    %93 = arith.addf %90, %92 : vector<8x64xf32>
    %cst_35 = arith.constant 0.000000e+00 : f32
    %94 = vector.broadcast %cst_35 : f32 to vector<8x64xf32>
    %95 = arith.maximumf %93, %94 : vector<8x64xf32>
    %96 = arith.truncf %95 : vector<8x64xf32> to vector<8x64xbf16>
    %c0_36 = arith.constant 0 : index
    %c0_37 = arith.constant 0 : index
    %97 = vector.load %arg11[%c0_36, %c0_37] : memref<64x32xbf16, #tpu.memory_space<vmem>>, vector<64x32xbf16>
    %cst_38 = arith.constant dense<0.000000e+00> : vector<8x32xf32>
    %98 = tpu.matmul %96, %97, %cst_38 {dimension_numbers = #tpu.dot_dimension_numbers<[1], [0], [0], [1], [0, 0, 1, 1], [], []>} : vector<8x64xbf16>, vector<64x32xbf16>, vector<8x32xf32> -> vector<8x32xf32>
    %99 = vector.broadcast %9 : vector<1x32xf32> to vector<8x32xf32>
    %100 = arith.addf %98, %99 : vector<8x32xf32>
    %101 = arith.addf %65, %100 : vector<8x32xf32>
    %c0_39 = arith.constant 0 : index
    %c0_40 = arith.constant 0 : index
    %c0_41 = arith.constant 0 : index
    %102 = vector.load %arg12[%c0_39, %c0_40, %c0_41] : memref<1x8x32xf32, #tpu.memory_space<vmem>>, vector<1x8x32xf32>
    %103 = vector.shape_cast %102 : vector<1x8x32xf32> to vector<8x32xf32>
    %104 = vector.shape_cast %101 : vector<8x32xf32> to vector<1x8x32xf32>
    tpu.vector_store %arg12[%c0_39, %c0_40, %c0_41], %104 {strides = array<i32>} : memref<1x8x32xf32, #tpu.memory_space<vmem>>, vector<1x8x32xf32>,
    return
  }
  func.func @transform_0(%arg0: i32, %arg1: i32) -> (i32, i32, i32) {
    %c0_i32 = arith.constant 0 : i32
    %c0_i32_0 = arith.constant 0 : i32
    return %arg0, %arg1, %c0_i32 : i32, i32, i32
  }
  func.func @transform_1(%arg0: i32, %arg1: i32) -> (i32, i32, i32) {
    %c0_i32 = arith.constant 0 : i32
    %c0_i32_0 = arith.constant 0 : i32
    %c0_i32_1 = arith.constant 0 : i32
    return %arg0, %c0_i32, %c0_i32_0 : i32, i32, i32
  }
  func.func @transform_2(%arg0: i32, %arg1: i32) -> (i32, i32) {
    %c0_i32 = arith.constant 0 : i32
    %c0_i32_0 = arith.constant 0 : i32
    %c0_i32_1 = arith.constant 0 : i32
    return %c0_i32, %c0_i32_0 : i32, i32
  }
  func.func @transform_3(%arg0: i32, %arg1: i32) -> (i32, i32) {
    %c0_i32 = arith.constant 0 : i32
    %c0_i32_0 = arith.constant 0 : i32
    %c0_i32_1 = arith.constant 0 : i32
    return %c0_i32, %c0_i32_0 : i32, i32
  }
  func.func @transform_4(%arg0: i32, %arg1: i32) -> (i32, i32) {
    %c0_i32 = arith.constant 0 : i32
    %c0_i32_0 = arith.constant 0 : i32
    %c0_i32_1 = arith.constant 0 : i32
    return %c0_i32, %c0_i32_0 : i32, i32
  }
  func.func @transform_5(%arg0: i32, %arg1: i32) -> (i32, i32) {
    %c0_i32 = arith.constant 0 : i32
    %c0_i32_0 = arith.constant 0 : i32
    %c0_i32_1 = arith.constant 0 : i32
    return %c0_i32, %c0_i32_0 : i32, i32
  }
  func.func @transform_6(%arg0: i32, %arg1: i32) -> (i32, i32) {
    %c0_i32 = arith.constant 0 : i32
    %c0_i32_0 = arith.constant 0 : i32
    %c0_i32_1 = arith.constant 0 : i32
    return %c0_i32, %c0_i32_0 : i32, i32
  }
  func.func @transform_7(%arg0: i32, %arg1: i32) -> (i32, i32) {
    %c0_i32 = arith.constant 0 : i32
    %c0_i32_0 = arith.constant 0 : i32
    %c0_i32_1 = arith.constant 0 : i32
    return %c0_i32, %c0_i32_0 : i32, i32
  }
  func.func @transform_8(%arg0: i32, %arg1: i32) -> (i32, i32) {
    %c0_i32 = arith.constant 0 : i32
    %c0_i32_0 = arith.constant 0 : i32
    %c0_i32_1 = arith.constant 0 : i32
    return %c0_i32, %c0_i32_0 : i32, i32
  }
  func.func @transform_9(%arg0: i32, %arg1: i32) -> (i32, i32) {
    %c0_i32 = arith.constant 0 : i32
    %c0_i32_0 = arith.constant 0 : i32
    %c0_i32_1 = arith.constant 0 : i32
    return %c0_i32, %c0_i32_0 : i32, i32
  }
  func.func @transform_10(%arg0: i32, %arg1: i32) -> (i32, i32, i32) {
    %c0_i32 = arith.constant 0 : i32
    %c0_i32_0 = arith.constant 0 : i32
    return %arg0, %arg1, %c0_i32 : i32, i32, i32
  }
}

module attributes {stable_mosaic.version = 11 : i64} {
  func.func @transformer_encoder_kernel(%arg0: i32, %arg1: i32, %arg2: memref<1x8x32xf32, #tpu.memory_space<vmem>>, %arg3: memref<1x8x32xf32, #tpu.memory_space<vmem>>, %arg4: memref<8x32xf32, #tpu.memory_space<vmem>>, %arg5: memref<32x32xbf16, #tpu.memory_space<vmem>>, %arg6: memref<32x64xbf16, #tpu.memory_space<vmem>>, %arg7: memref<1x64xf32, #tpu.memory_space<vmem>>, %arg8: memref<32x32xbf16, #tpu.memory_space<vmem>>, %arg9: memref<32x64xbf16, #tpu.memory_space<vmem>>, %arg10: memref<1x64xf32, #tpu.memory_space<vmem>>, %arg11: memref<64x32xbf16, #tpu.memory_space<vmem>>, %arg12: memref<1x8x32xf32, #tpu.memory_space<vmem>>, %arg13: memref<8x8x4xbf16, #tpu.memory_space<vmem>>, %arg14: memref<8x8x4xbf16, #tpu.memory_space<vmem>>) attributes {dimension_semantics = [#tpu.dimension_semantics<parallel>, #tpu.dimension_semantics<arbitrary>], iteration_bounds = array<i64: 2, 1>, scalar_prefetch = 0 : i64, scratch_operands = 2 : i64, tpu.core_type = #tpu.core_type<tc>, window_params = [{transform_indices = @transform_0, window_bounds = array<i64: 1, 8, 32>}, {transform_indices = @transform_1, window_bounds = array<i64: 1, 8, 32>}, {pipeline_mode = #tpu.pipeline_mode<synchronous>, transform_indices = @transform_2, window_bounds = array<i64: 8, 32>}, {pipeline_mode = #tpu.pipeline_mode<synchronous>, transform_indices = @transform_3, window_bounds = array<i64: 32, 32>}, {pipeline_mode = #tpu.pipeline_mode<synchronous>, transform_indices = @transform_4, window_bounds = array<i64: 32, 64>}, {pipeline_mode = #tpu.pipeline_mode<synchronous>, transform_indices = @transform_5, window_bounds = array<i64: 1, 64>}, {pipeline_mode = #tpu.pipeline_mode<synchronous>, transform_indices = @transform_6, window_bounds = array<i64: 32, 32>}, {pipeline_mode = #tpu.pipeline_mode<synchronous>, transform_indices = @transform_7, window_bounds = array<i64: 32, 64>}, {pipeline_mode = #tpu.pipeline_mode<synchronous>, transform_indices = @transform_8, window_bounds = array<i64: 1, 64>}, {pipeline_mode = #tpu.pipeline_mode<synchronous>, transform_indices = @transform_9, window_bounds = array<i64: 64, 32>}, {transform_indices = @transform_10, window_bounds = array<i64: 1, 8, 32>}]} {
    %c0 = arith.constant 0 : index
    %c0_0 = arith.constant 0 : index
    %c0_1 = arith.constant 0 : index
    %0 = vector.load %arg2[%c0, %c0_0, %c0_1] : memref<1x8x32xf32, #tpu.memory_space<vmem>>, vector<1x8x32xf32>
    %1 = vector.shape_cast %0 : vector<1x8x32xf32> to vector<8x32xf32>
    %c0_2 = arith.constant 0 : index
    %c0_3 = arith.constant 0 : index
    %2 = vector.load %arg4[%c0_2, %c0_3] : memref<8x32xf32, #tpu.memory_space<vmem>>, vector<8x32xf32>
    %3 = vector.extract_strided_slice %2 {offsets = [0, 0], sizes = [1, 32], strides = [1, 1]} : vector<8x32xf32> to vector<1x32xf32>
    %4 = vector.extract_strided_slice %2 {offsets = [1, 0], sizes = [1, 32], strides = [1, 1]} : vector<8x32xf32> to vector<1x32xf32>
    %5 = vector.extract_strided_slice %2 {offsets = [2, 0], sizes = [1, 32], strides = [1, 1]} : vector<8x32xf32> to vector<1x32xf32>
    %6 = vector.extract_strided_slice %2 {offsets = [3, 0], sizes = [1, 32], strides = [1, 1]} : vector<8x32xf32> to vector<1x32xf32>
    %7 = vector.extract_strided_slice %2 {offsets = [4, 0], sizes = [1, 32], strides = [1, 1]} : vector<8x32xf32> to vector<1x32xf32>
    %8 = vector.extract_strided_slice %2 {offsets = [5, 0], sizes = [1, 32], strides = [1, 1]} : vector<8x32xf32> to vector<1x32xf32>
    %9 = vector.extract_strided_slice %2 {offsets = [6, 0], sizes = [1, 32], strides = [1, 1]} : vector<8x32xf32> to vector<1x32xf32>
    %c0_i32 = arith.constant 0 : i32
    %10 = arith.cmpi eq, %arg1, %c0_i32 : i32
    %11 = arith.extui %10 : i1 to i32
    %c0_i32_4 = arith.constant 0 : i32
    %12 = arith.cmpi ne, %11, %c0_i32_4 : i32
    scf.if %12 {
      %c0_42 = arith.constant 0 : index
      %c0_43 = arith.constant 0 : index
      %c0_44 = arith.constant 0 : index
      %105 = vector.load %arg3[%c0_42, %c0_43, %c0_44] : memref<1x8x32xf32, #tpu.memory_space<vmem>>, vector<1x8x32xf32>
      %106 = vector.shape_cast %105 : vector<1x8x32xf32> to vector<8x32xf32>
      %cst_45 = arith.constant dense<0.000000e+00> : vector<8xf32>
      %107 = vector.multi_reduction <add>, %106, %cst_45 [1] : vector<8x32xf32> to vector<8xf32>
      %108 = vector.shape_cast %107 : vector<8xf32> to vector<8x1xf32>
      %cst_46 = arith.constant 3.200000e+01 : f32
      %109 = vector.broadcast %cst_46 : f32 to vector<8x1xf32>
      %110 = arith.divf %108, %109 : vector<8x1xf32>
      %111 = vector.broadcast %110 : vector<8x1xf32> to vector<8x32xf32>
      %112 = arith.subf %106, %111 : vector<8x32xf32>
      %113 = arith.mulf %112, %112 : vector<8x32xf32>
      %cst_47 = arith.constant dense<0.000000e+00> : vector<8xf32>
      %114 = vector.multi_reduction <add>, %113, %cst_47 [1] : vector<8x32xf32> to vector<8xf32>
      %115 = vector.shape_cast %114 : vector<8xf32> to vector<8x1xf32>
      %cst_48 = arith.constant 3.200000e+01 : f32
      %116 = vector.broadcast %cst_48 : f32 to vector<8x1xf32>
      %117 = arith.divf %115, %116 : vector<8x1xf32>
      %118 = vector.broadcast %110 : vector<8x1xf32> to vector<8x32xf32>
      %119 = arith.subf %106, %118 : vector<8x32xf32>
      %cst_49 = arith.constant 9.99999974E-6 : f32
      %120 = vector.broadcast %cst_49 : f32 to vector<8x1xf32>
      %121 = arith.addf %117, %120 : vector<8x1xf32>
      %122 = math.rsqrt %121 : vector<8x1xf32>
      %123 = vector.broadcast %122 : vector<8x1xf32> to vector<8x32xf32>
      %124 = arith.mulf %119, %123 : vector<8x32xf32>
      %125 = vector.broadcast %3 : vector<1x32xf32> to vector<8x32xf32>
      %126 = arith.mulf %124, %125 : vector<8x32xf32>
      %127 = vector.broadcast %4 : vector<1x32xf32> to vector<8x32xf32>
      %128 = arith.addf %126, %127 : vector<8x32xf32>
      %129 = arith.truncf %128 : vector<8x32xf32> to vector<8x32xbf16>
      %c0_50 = arith.constant 0 : index
      %c0_51 = arith.constant 0 : index
      %130 = vector.load %arg6[%c0_50, %c0_51] : memref<32x64xbf16, #tpu.memory_space<vmem>>, vector<32x64xbf16>
      %cst_52 = arith.constant dense<0.000000e+00> : vector<8x64xf32>
      %131 = tpu.matmul %129, %130, %cst_52 {dimension_numbers = #tpu.dot_dimension_numbers<[1], [0], [0], [1], [0, 0, 1, 1], [], []>} : vector<8x32xbf16>, vector<32x64xbf16>, vector<8x64xf32> -> vector<8x64xf32>
      %c0_53 = arith.constant 0 : index
      %c0_54 = arith.constant 0 : index
      %132 = vector.load %arg7[%c0_53, %c0_54] : memref<1x64xf32, #tpu.memory_space<vmem>>, vector<1x64xf32>
      %133 = vector.broadcast %132 : vector<1x64xf32> to vector<8x64xf32>
      %134 = arith.addf %131, %133 : vector<8x64xf32>
      %135 = vector.extract_strided_slice %134 {offsets = [0, 0], sizes = [8, 32], strides = [1, 1]} : vector<8x64xf32> to vector<8x32xf32>
      %136 = arith.truncf %135 : vector<8x32xf32> to vector<8x32xbf16>
      %137 = vector.extract_strided_slice %134 {offsets = [0, 32], sizes = [8, 32], strides = [1, 1]} : vector<8x64xf32> to vector<8x32xf32>
      %138 = arith.truncf %137 : vector<8x32xf32> to vector<8x32xbf16>
      %139 = vector.shape_cast %136 : vector<8x32xbf16> to vector<8x8x4xbf16>
      %140 = tpu.transpose %139, [1, 0, 2] : vector<8x8x4xbf16> -> vector<8x8x4xbf16>
      %c0_55 = arith.constant 0 : index
      %c0_56 = arith.constant 0 : index
      %c0_57 = arith.constant 0 : index
      %141 = vector.load %arg13[%c0_55, %c0_56, %c0_57] : memref<8x8x4xbf16, #tpu.memory_space<vmem>>, vector<8x8x4xbf16>
      tpu.vector_store %arg13[%c0_55, %c0_56, %c0_57], %140 {strides = array<i32>} : memref<8x8x4xbf16, #tpu.memory_space<vmem>>, vector<8x8x4xbf16>,
      %142 = vector.shape_cast %138 : vector<8x32xbf16> to vector<8x8x4xbf16>
      %143 = tpu.transpose %142, [1, 0, 2] : vector<8x8x4xbf16> -> vector<8x8x4xbf16>
      %c0_58 = arith.constant 0 : index
      %c0_59 = arith.constant 0 : index
      %c0_60 = arith.constant 0 : index
      %144 = vector.load %arg14[%c0_58, %c0_59, %c0_60] : memref<8x8x4xbf16, #tpu.memory_space<vmem>>, vector<8x8x4xbf16>
      tpu.vector_store %arg14[%c0_58, %c0_59, %c0_60], %143 {strides = array<i32>} : memref<8x8x4xbf16, #tpu.memory_space<vmem>>, vector<8x8x4xbf16>,
    } else {
    }
    %c0_5 = arith.constant 0 : index
    %c0_6 = arith.constant 0 : index
    %c0_7 = arith.constant 0 : index
    %13 = vector.load %arg13[%c0_5, %c0_6, %c0_7] : memref<8x8x4xbf16, #tpu.memory_space<vmem>>, vector<8x8x4xbf16>
    %c0_8 = arith.constant 0 : index
    %c0_9 = arith.constant 0 : index
    %c0_10 = arith.constant 0 : index
    %14 = vector.load %arg14[%c0_8, %c0_9, %c0_10] : memref<8x8x4xbf16, #tpu.memory_space<vmem>>, vector<8x8x4xbf16>
    %cst = arith.constant dense<0.000000e+00> : vector<8xf32>
    %15 = vector.multi_reduction <add>, %1, %cst [1] : vector<8x32xf32> to vector<8xf32>
    %16 = vector.shape_cast %15 : vector<8xf32> to vector<8x1xf32>
    %cst_11 = arith.constant 3.200000e+01 : f32
    %17 = vector.broadcast %cst_11 : f32 to vector<8x1xf32>
    %18 = arith.divf %16, %17 : vector<8x1xf32>
    %19 = vector.broadcast %18 : vector<8x1xf32> to vector<8x32xf32>
    %20 = arith.subf %1, %19 : vector<8x32xf32>
    %21 = arith.mulf %20, %20 : vector<8x32xf32>
    %cst_12 = arith.constant dense<0.000000e+00> : vector<8xf32>
    %22 = vector.multi_reduction <add>, %21, %cst_12 [1] : vector<8x32xf32> to vector<8xf32>
    %23 = vector.shape_cast %22 : vector<8xf32> to vector<8x1xf32>
    %cst_13 = arith.constant 3.200000e+01 : f32
    %24 = vector.broadcast %cst_13 : f32 to vector<8x1xf32>
    %25 = arith.divf %23, %24 : vector<8x1xf32>
    %26 = vector.broadcast %18 : vector<8x1xf32> to vector<8x32xf32>
    %27 = arith.subf %1, %26 : vector<8x32xf32>
    %cst_14 = arith.constant 9.99999974E-6 : f32
    %28 = vector.broadcast %cst_14 : f32 to vector<8x1xf32>
    %29 = arith.addf %25, %28 : vector<8x1xf32>
    %30 = math.rsqrt %29 : vector<8x1xf32>
    %31 = vector.broadcast %30 : vector<8x1xf32> to vector<8x32xf32>
    %32 = arith.mulf %27, %31 : vector<8x32xf32>
    %33 = vector.broadcast %3 : vector<1x32xf32> to vector<8x32xf32>
    %34 = arith.mulf %32, %33 : vector<8x32xf32>
    %35 = vector.broadcast %4 : vector<1x32xf32> to vector<8x32xf32>
    %36 = arith.addf %34, %35 : vector<8x32xf32>
    %37 = arith.truncf %36 : vector<8x32xf32> to vector<8x32xbf16>
    %c0_15 = arith.constant 0 : index
    %c0_16 = arith.constant 0 : index
    %38 = vector.load %arg5[%c0_15, %c0_16] : memref<32x32xbf16, #tpu.memory_space<vmem>>, vector<32x32xbf16>
    %cst_17 = arith.constant dense<0.000000e+00> : vector<8x32xf32>
    %39 = tpu.matmul %37, %38, %cst_17 {dimension_numbers = #tpu.dot_dimension_numbers<[1], [0], [0], [1], [0, 0, 1, 1], [], []>} : vector<8x32xbf16>, vector<32x32xbf16>, vector<8x32xf32> -> vector<8x32xf32>
    %40 = vector.broadcast %7 : vector<1x32xf32> to vector<8x32xf32>
    %41 = arith.addf %39, %40 : vector<8x32xf32>
    %42 = vector.shape_cast %41 : vector<8x32xf32> to vector<8x8x4xf32>
    %43 = tpu.transpose %42, [1, 0, 2] : vector<8x8x4xf32> -> vector<8x8x4xf32>
    %44 = arith.truncf %43 : vector<8x8x4xf32> to vector<8x8x4xbf16>
    "tpu.trace_start"() <{level = 10 : i32, message = "hqd,hkd->hqk"}> : () -> ()
    %cst_18 = arith.constant dense<0.000000e+00> : vector<8x8x8xf32>
    %45 = tpu.matmul %44, %13, %cst_18 {dimension_numbers = #tpu.dot_dimension_numbers<[2], [2], [1], [1], [0, 0, 0, 1, 1, 1], [0], [0]>} : vector<8x8x4xbf16>, vector<8x8x4xbf16>, vector<8x8x8xf32> -> vector<8x8x8xf32>
    "tpu.trace_stop"() : () -> ()
    %cst_19 = arith.constant dense<0xFF800000> : vector<8x8xf32>
    %46 = vector.multi_reduction <maximumf>, %45, %cst_19 [2] : vector<8x8x8xf32> to vector<8x8xf32>
    %47 = vector.shape_cast %46 : vector<8x8xf32> to vector<8x8x1xf32>
    %48 = vector.broadcast %47 : vector<8x8x1xf32> to vector<8x8x8xf32>
    %49 = arith.subf %45, %48 : vector<8x8x8xf32>
    %50 = math.exp %49 : vector<8x8x8xf32>
    %cst_20 = arith.constant dense<0.000000e+00> : vector<8x8xf32>
    %51 = vector.multi_reduction <add>, %50, %cst_20 [2] : vector<8x8x8xf32> to vector<8x8xf32>
    %52 = vector.shape_cast %51 : vector<8x8xf32> to vector<8x8x1xf32>
    %53 = arith.truncf %50 : vector<8x8x8xf32> to vector<8x8x8xbf16>
    "tpu.trace_start"() <{level = 10 : i32, message = "hqk,hkd->hqd"}> : () -> ()
    %cst_21 = arith.constant dense<0.000000e+00> : vector<8x8x4xf32>
    %54 = tpu.matmul %53, %14, %cst_21 {dimension_numbers = #tpu.dot_dimension_numbers<[2], [1], [1], [2], [0, 0, 0, 1, 1, 2], [0], [0]>} : vector<8x8x8xbf16>, vector<8x8x4xbf16>, vector<8x8x4xf32> -> vector<8x8x4xf32>
    "tpu.trace_stop"() : () -> ()
    %55 = tpu.reciprocal %52 {approx = true} : vector<8x8x1xf32> -> vector<8x8x1xf32>
    %56 = vector.broadcast %55 : vector<8x8x1xf32> to vector<8x8x4xf32>
    %57 = arith.mulf %54, %56 : vector<8x8x4xf32>
    %58 = tpu.transpose %57, [1, 0, 2] : vector<8x8x4xf32> -> vector<8x8x4xf32>
    %59 = vector.shape_cast %58 : vector<8x8x4xf32> to vector<8x32xf32>
    %60 = arith.truncf %59 : vector<8x32xf32> to vector<8x32xbf16>
    %c0_22 = arith.constant 0 : index
    %c0_23 = arith.constant 0 : index
    %61 = vector.load %arg8[%c0_22, %c0_23] : memref<32x32xbf16, #tpu.memory_space<vmem>>, vector<32x32xbf16>
    %cst_24 = arith.constant dense<0.000000e+00> : vector<8x32xf32>
    %62 = tpu.matmul %60, %61, %cst_24 {dimension_numbers = #tpu.dot_dimension_numbers<[1], [0], [0], [1], [0, 0, 1, 1], [], []>} : vector<8x32xbf16>, vector<32x32xbf16>, vector<8x32xf32> -> vector<8x32xf32>
    %63 = vector.broadcast %8 : vector<1x32xf32> to vector<8x32xf32>
    %64 = arith.addf %62, %63 : vector<8x32xf32>
    %65 = arith.addf %1, %64 : vector<8x32xf32>
    %cst_25 = arith.constant dense<0.000000e+00> : vector<8xf32>
    %66 = vector.multi_reduction <add>, %65, %cst_25 [1] : vector<8x32xf32> to vector<8xf32>
    %67 = vector.shape_cast %66 : vector<8xf32> to vector<8x1xf32>
    %cst_26 = arith.constant 3.200000e+01 : f32
    %68 = vector.broadcast %cst_26 : f32 to vector<8x1xf32>
    %69 = arith.divf %67, %68 : vector<8x1xf32>
    %70 = vector.broadcast %69 : vector<8x1xf32> to vector<8x32xf32>
    %71 = arith.subf %65, %70 : vector<8x32xf32>
    %72 = arith.mulf %71, %71 : vector<8x32xf32>
    %cst_27 = arith.constant dense<0.000000e+00> : vector<8xf32>
    %73 = vector.multi_reduction <add>, %72, %cst_27 [1] : vector<8x32xf32> to vector<8xf32>
    %74 = vector.shape_cast %73 : vector<8xf32> to vector<8x1xf32>
    %cst_28 = arith.constant 3.200000e+01 : f32
    %75 = vector.broadcast %cst_28 : f32 to vector<8x1xf32>
    %76 = arith.divf %74, %75 : vector<8x1xf32>
    %77 = vector.broadcast %69 : vector<8x1xf32> to vector<8x32xf32>
    %78 = arith.subf %65, %77 : vector<8x32xf32>
    %cst_29 = arith.constant 9.99999974E-6 : f32
    %79 = vector.broadcast %cst_29 : f32 to vector<8x1xf32>
    %80 = arith.addf %76, %79 : vector<8x1xf32>
    %81 = math.rsqrt %80 : vector<8x1xf32>
    %82 = vector.broadcast %81 : vector<8x1xf32> to vector<8x32xf32>
    %83 = arith.mulf %78, %82 : vector<8x32xf32>
    %84 = vector.broadcast %5 : vector<1x32xf32> to vector<8x32xf32>
    %85 = arith.mulf %83, %84 : vector<8x32xf32>
    %86 = vector.broadcast %6 : vector<1x32xf32> to vector<8x32xf32>
    %87 = arith.addf %85, %86 : vector<8x32xf32>
    %88 = arith.truncf %87 : vector<8x32xf32> to vector<8x32xbf16>
    %c0_30 = arith.constant 0 : index
    %c0_31 = arith.constant 0 : index
    %89 = vector.load %arg9[%c0_30, %c0_31] : memref<32x64xbf16, #tpu.memory_space<vmem>>, vector<32x64xbf16>
    %cst_32 = arith.constant dense<0.000000e+00> : vector<8x64xf32>
    %90 = tpu.matmul %88, %89, %cst_32 {dimension_numbers = #tpu.dot_dimension_numbers<[1], [0], [0], [1], [0, 0, 1, 1], [], []>} : vector<8x32xbf16>, vector<32x64xbf16>, vector<8x64xf32> -> vector<8x64xf32>
    %c0_33 = arith.constant 0 : index
    %c0_34 = arith.constant 0 : index
    %91 = vector.load %arg10[%c0_33, %c0_34] : memref<1x64xf32, #tpu.memory_space<vmem>>, vector<1x64xf32>
    %92 = vector.broadcast %91 : vector<1x64xf32> to vector<8x64xf32>
    %93 = arith.addf %90, %92 : vector<8x64xf32>
    %cst_35 = arith.constant 0.000000e+00 : f32
    %94 = vector.broadcast %cst_35 : f32 to vector<8x64xf32>
    %95 = arith.maximumf %93, %94 : vector<8x64xf32>
    %96 = arith.truncf %95 : vector<8x64xf32> to vector<8x64xbf16>
    %c0_36 = arith.constant 0 : index
    %c0_37 = arith.constant 0 : index
    %97 = vector.load %arg11[%c0_36, %c0_37] : memref<64x32xbf16, #tpu.memory_space<vmem>>, vector<64x32xbf16>
    %cst_38 = arith.constant dense<0.000000e+00> : vector<8x32xf32>
    %98 = tpu.matmul %96, %97, %cst_38 {dimension_numbers = #tpu.dot_dimension_numbers<[1], [0], [0], [1], [0, 0, 1, 1], [], []>} : vector<8x64xbf16>, vector<64x32xbf16>, vector<8x32xf32> -> vector<8x32xf32>
    %99 = vector.broadcast %9 : vector<1x32xf32> to vector<8x32xf32>
    %100 = arith.addf %98, %99 : vector<8x32xf32>
    %101 = arith.addf %65, %100 : vector<8x32xf32>
    %c0_39 = arith.constant 0 : index
    %c0_40 = arith.constant 0 : index
    %c0_41 = arith.constant 0 : index
    %102 = vector.load %arg12[%c0_39, %c0_40, %c0_41] : memref<1x8x32xf32, #tpu.memory_space<vmem>>, vector<1x8x32xf32>
    %103 = vector.shape_cast %102 : vector<1x8x32xf32> to vector<8x32xf32>
    %104 = vector.shape_cast %101 : vector<8x32xf32> to vector<1x8x32xf32>
    tpu.vector_store %arg12[%c0_39, %c0_40, %c0_41], %104 {strides = array<i32>} : memref<1x8x32xf32, #tpu.memory_space<vmem>>, vector<1x8x32xf32>,
    return
  }
  func.func @transform_0(%arg0: i32, %arg1: i32) -> (i32, i32, i32) {
    %c0_i32 = arith.constant 0 : i32
    %c0_i32_0 = arith.constant 0 : i32
    return %arg0, %arg1, %c0_i32 : i32, i32, i32
  }
  func.func @transform_1(%arg0: i32, %arg1: i32) -> (i32, i32, i32) {
    %c0_i32 = arith.constant 0 : i32
    %c0_i32_0 = arith.constant 0 : i32
    %c0_i32_1 = arith.constant 0 : i32
    return %arg0, %c0_i32, %c0_i32_0 : i32, i32, i32
  }
  func.func @transform_2(%arg0: i32, %arg1: i32) -> (i32, i32) {
    %c0_i32 = arith.constant 0 : i32
    %c0_i32_0 = arith.constant 0 : i32
    %c0_i32_1 = arith.constant 0 : i32
    return %c0_i32, %c0_i32_0 : i32, i32
  }
  func.func @transform_3(%arg0: i32, %arg1: i32) -> (i32, i32) {
    %c0_i32 = arith.constant 0 : i32
    %c0_i32_0 = arith.constant 0 : i32
    %c0_i32_1 = arith.constant 0 : i32
    return %c0_i32, %c0_i32_0 : i32, i32
  }
  func.func @transform_4(%arg0: i32, %arg1: i32) -> (i32, i32) {
    %c0_i32 = arith.constant 0 : i32
    %c0_i32_0 = arith.constant 0 : i32
    %c0_i32_1 = arith.constant 0 : i32
    return %c0_i32, %c0_i32_0 : i32, i32
  }
  func.func @transform_5(%arg0: i32, %arg1: i32) -> (i32, i32) {
    %c0_i32 = arith.constant 0 : i32
    %c0_i32_0 = arith.constant 0 : i32
    %c0_i32_1 = arith.constant 0 : i32
    return %c0_i32, %c0_i32_0 : i32, i32
  }
  func.func @transform_6(%arg0: i32, %arg1: i32) -> (i32, i32) {
    %c0_i32 = arith.constant 0 : i32
    %c0_i32_0 = arith.constant 0 : i32
    %c0_i32_1 = arith.constant 0 : i32
    return %c0_i32, %c0_i32_0 : i32, i32
  }
  func.func @transform_7(%arg0: i32, %arg1: i32) -> (i32, i32) {
    %c0_i32 = arith.constant 0 : i32
    %c0_i32_0 = arith.constant 0 : i32
    %c0_i32_1 = arith.constant 0 : i32
    return %c0_i32, %c0_i32_0 : i32, i32
  }
  func.func @transform_8(%arg0: i32, %arg1: i32) -> (i32, i32) {
    %c0_i32 = arith.constant 0 : i32
    %c0_i32_0 = arith.constant 0 : i32
    %c0_i32_1 = arith.constant 0 : i32
    return %c0_i32, %c0_i32_0 : i32, i32
  }
  func.func @transform_9(%arg0: i32, %arg1: i32) -> (i32, i32) {
    %c0_i32 = arith.constant 0 : i32
    %c0_i32_0 = arith.constant 0 : i32
    %c0_i32_1 = arith.constant 0 : i32
    return %c0_i32, %c0_i32_0 : i32, i32
  }
  func.func @transform_10(%arg0: i32, %arg1: i32) -> (i32, i32, i32) {
    %c0_i32 = arith.constant 0 : i32
    %c0_i32_0 = arith.constant 0 : i32
    return %arg0, %arg1, %c0_i32 : i32, i32, i32
  }
}

</mosaic_0001>

<llo_original>
// kernel: tpu_custom_call.1
$region0: #{tpu_custom_call.1}
  #allocation0 [shape = 'u32[]', space=smem, size = 0x4, offset = 0x4, fixed_abs, tag = 'smem constant byte address 0x4 - core index']
  #allocation1 [shape = 'u32[144,128]{1,0:T(1,128)}', space=vmem, size = 0x12000, scoped, tag = 'internal scratch']
  #allocation2 [shape = 'bf16[8,8,4]{2,1,0:T(8,128)(2,1)}', space=vmem, size = 0x4000, scoped, tag = 'scratch operand']
  #allocation3 [shape = 'bf16[8,8,4]{2,1,0:T(8,128)(2,1)}', space=vmem, size = 0x4000, scoped, tag = 'scratch operand']
  %s0 = inlined_call_operand.vmem [shape: f32[2,8,32], index: 0, kind: input, shape index: {}]
  %s1 = inlined_call_operand.vmem [shape: f32[2,8,32], index: 1, kind: input, shape index: {}]
  %s2 = inlined_call_operand.hbm [shape: f32[8,32], index: 2, kind: input, shape index: {}]
  %s3 = inlined_call_operand.vmem [shape: bf16[32,32], index: 3, kind: input, shape index: {}]
  %s4 = inlined_call_operand.hbm [shape: bf16[32,64], index: 4, kind: input, shape index: {}]
  %s5 = inlined_call_operand.vmem [shape: f32[1,64], index: 5, kind: input, shape index: {}]
  %s6 = inlined_call_operand.hbm [shape: bf16[32,32], index: 6, kind: input, shape index: {}]
  %s7 = inlined_call_operand.hbm [shape: bf16[32,64], index: 7, kind: input, shape index: {}]
  %s8 = inlined_call_operand.vmem [shape: f32[1,64], index: 8, kind: input, shape index: {}]
  %s9 = inlined_call_operand.vmem [shape: bf16[64,32], index: 9, kind: input, shape index: {}]
  %s10 = inlined_call_operand.hbm [shape: f32[2,8,32], index: 10, kind: output, shape index: {}]
  %s11 = sld [smem:[#allocation0]]
  $region93: #{tpu_custom_call.1} parent=0
    _
  %s13 = ssub.s32 1, %s11
  %s14 = scalar_select 0, %s13, %s11
  $region1: #{tpu_custom_call.1} parent=0
    #allocation4 [shape = 'u8[4096]{0}', space=vmem, size = 0x1000, scoped, tag = 'input window, operand 2, single buffered']
    #allocation5 [shape = 's32[2]{0}', space=sflag, size = 0x8, scoped, tag = 'scoped memory for tpu_custom_call.1']
    #allocation6 [shape = 's32[2]{0}', space=sflag, size = 0x8, scoped, tag = 'scoped memory for tpu_custom_call.1']
    #allocation7 [shape = 'u8[8192]{0}', space=vmem, size = 0x2000, scoped, tag = 'input window, operand 4, single buffered']
    #allocation8 [shape = 's32[1]{0}', space=sflag, size = 0x4, scoped, tag = 'scoped memory for tpu_custom_call.1']
    #allocation9 [shape = 'u8[8192]{0}', space=vmem, size = 0x2000, scoped, tag = 'input window, operand 6, single buffered']
    #allocation10 [shape = 'u8[8192]{0}', space=vmem, size = 0x2000, scoped, tag = 'input window, operand 7, single buffered']
    #allocation11 [shape = 's32[1]{0}', space=sflag, size = 0x4, scoped, tag = 'scoped memory for tpu_custom_call.1']
    #allocation12 [shape = 'u8[8192]{0}', space=vmem, size = 0x2000, scoped, tag = 'output window, operand 0']
    %15 = vsyncpa [#allocation5], 0
    %16 = vsyncpa [#allocation8], 0
    %17 = vsyncpa [#allocation11], 0
    %18 = vsyncpa [#allocation6], 0
    %s19 = scalar_lea.sflag [#allocation6], 1
    %20 = vsyncpa %s19, 0
    loop: start=0, step=1, limit=4
    $region2: #{tpu_custom_call.1} parent=1 // loop_pre_header
      _
    $region3: #{tpu_custom_call.1} parent=1 // loop_header
      %s22 = sphi 0, %s26
      %p23 = scmp.ge.s32.totalorder %s22, 4
      %s29 = sphi 0, %s41
      %s30 = sphi 0, %s37
      %s31 = sphi 0, %s29
      %s32 = sphi 0, %s30
      %s33 = sphi 0, %s31
      %s34 = sphi 0, %s32
      %s46 = sphi 0, %s48
      %s49 = sphi 0, %s46
      %s50 = sphi 0, %s49
      %s66 = sphi 0, %s50
      %s72 = sphi 0, %s74
      %s75 = sphi 0, %s72
      %s76 = sphi 0, %s75
      %s92 = sphi 0, %s76
      %s96 = sphi 0, %s96
      %s98 = sphi 0, %s96
      %s99 = sphi 0, %s98
      %s113 = sphi 0, %s99
      %s117 = sphi 0, %s117
      %s119 = sphi 0, %s117
      %s120 = sphi 0, %s119
      %s134 = sphi 0, %s120
      %s138 = sphi 0, %s138
      %s140 = sphi 0, %s138
      %s141 = sphi 0, %s140
      %s155 = sphi 0, %s141
      %s159 = sphi 0, %s159
      %s161 = sphi 0, %s159
      %s162 = sphi 0, %s161
      %s176 = sphi 0, %s162
      %s180 = sphi 0, %s180
      %s182 = sphi 0, %s180
      %s183 = sphi 0, %s182
      %s197 = sphi 0, %s183
      %s201 = sphi 0, %s201
      %s203 = sphi 0, %s201
      %s204 = sphi 0, %s203
      %s218 = sphi 0, %s204
      %s222 = sphi 0, %s222
      %s224 = sphi 0, %s222
      %s225 = sphi 0, %s224
      %s239 = sphi 0, %s225
      %s243 = sphi 0, %s243
      %s245 = sphi 0, %s243
      %s246 = sphi 0, %s245
      %s260 = sphi 0, %s246
      %s268 = sphi 0, %s270
      %s271 = sphi 0, %s268
      %s272 = sphi 0, %s271
      %s288 = sphi 0, %s272
    $region4: #{tpu_custom_call.1} parent=1 // loop_header_branch
      %25 = sbr.rel (%p23) target = $region8
    $region5: #{tpu_custom_call.1} parent=1 // loop_body
      %s27 = ssub.s32 %s22, 1
      %s28 = ssub.s32 %s22, 2
      %s35 = sadd.s32 1, %s30
      %p36 = scmp.ge.s32.totalorder %s35, 1
      %s37 = scalar_select %p36, 0, %s35
      %s38 = sadd.s32 1, %s29
      %s39 = scalar_select %p36, %s38, %s29
      %p40 = scmp.ge.s32.totalorder %s39, 2
      %s41 = scalar_select %p40, 0, %s39
      %s42 = ssub.s32 %s29, %s41
      %s43 = ssub.s32 %s30, %s37
      %s44 = sor.u32 %s42, %s43
      %p45 = scmp.eq.s32.totalorder %s44, 0
      %s47 = sadd.s32 %s46, 1
      %s48 = scalar_select %p45, %s46, %s47
      %p51 = pneg %p45
      %p52 = scmp.eq.s32.totalorder %s22, 1
      %p53 = por %p51, %p52
      %p54 = scmp.ne.s32.totalorder %s46, %s49
      %p55 = scmp.eq.s32.totalorder %s22, 0
      %p56 = por %p54, %p55
      %p57 = scmp.ne.s32.totalorder %s46, %s49
      %p58 = scmp.eq.s32.totalorder %s27, 1
      %p59 = por %p57, %p58
      %p60 = scmp.ne.s32.totalorder %s49, %s50
      %p61 = scmp.eq.s32.totalorder %s27, 0
      %p62 = por %p60, %p61
      %p63 = scmp.ne.s32.totalorder %s49, %s50
      %p64 = scmp.eq.s32.totalorder %s28, 1
      %p65 = por %p63, %p64
      %p67 = scmp.ne.s32.totalorder %s50, %s66
      %p68 = scmp.eq.s32.totalorder %s28, 0
      %p69 = por %p67, %p68
      %s70 = ssub.s32 %s29, %s41
      %p71 = scmp.eq.s32.totalorder %s70, 0
      %s73 = sadd.s32 %s72, 1
      %s74 = scalar_select %p71, %s72, %s73
      %p77 = pneg %p71
      %p78 = scmp.eq.s32.totalorder %s22, 1
      %p79 = por %p77, %p78
      %p80 = scmp.ne.s32.totalorder %s72, %s75
      %p81 = scmp.eq.s32.totalorder %s22, 0
      %p82 = por %p80, %p81
      %p83 = scmp.ne.s32.totalorder %s72, %s75
      %p84 = scmp.eq.s32.totalorder %s27, 1
      %p85 = por %p83, %p84
      %p86 = scmp.ne.s32.totalorder %s75, %s76
      %p87 = scmp.eq.s32.totalorder %s27, 0
      %p88 = por %p86, %p87
      %p89 = scmp.ne.s32.totalorder %s75, %s76
      %p90 = scmp.eq.s32.totalorder %s28, 1
      %p91 = por %p89, %p90
      %p93 = scmp.ne.s32.totalorder %s76, %s92
      %p94 = scmp.eq.s32.totalorder %s28, 0
      %p95 = por %p93, %p94
      %s97 = sadd.s32 %s96, 1
      %p100 = scmp.eq.s32.totalorder %s22, 1
      %p101 = scmp.ne.s32.totalorder %s96, %s98
      %p102 = scmp.eq.s32.totalorder %s22, 0
      %p103 = por %p101, %p102
      %p104 = scmp.ne.s32.totalorder %s96, %s98
      %p105 = scmp.eq.s32.totalorder %s27, 1
      %p106 = por %p104, %p105
      %p107 = scmp.ne.s32.totalorder %s98, %s99
      %p108 = scmp.eq.s32.totalorder %s27, 0
      %p109 = por %p107, %p108
      %p110 = scmp.ne.s32.totalorder %s98, %s99
      %p111 = scmp.eq.s32.totalorder %s28, 1
      %p112 = por %p110, %p111
      %p114 = scmp.ne.s32.totalorder %s99, %s113
      %p115 = scmp.eq.s32.totalorder %s28, 0
      %p116 = por %p114, %p115
      %s118 = sadd.s32 %s117, 1
      %p121 = scmp.eq.s32.totalorder %s22, 1
      %p122 = scmp.ne.s32.totalorder %s117, %s119
      %p123 = scmp.eq.s32.totalorder %s22, 0
      %p124 = por %p122, %p123
      %p125 = scmp.ne.s32.totalorder %s117, %s119
      %p126 = scmp.eq.s32.totalorder %s27, 1
      %p127 = por %p125, %p126
      %p128 = scmp.ne.s32.totalorder %s119, %s120
      %p129 = scmp.eq.s32.totalorder %s27, 0
      %p130 = por %p128, %p129
      %p131 = scmp.ne.s32.totalorder %s119, %s120
      %p132 = scmp.eq.s32.totalorder %s28, 1
      %p133 = por %p131, %p132
      %p135 = scmp.ne.s32.totalorder %s120, %s134
      %p136 = scmp.eq.s32.totalorder %s28, 0
      %p137 = por %p135, %p136
      %s139 = sadd.s32 %s138, 1
      %p142 = scmp.eq.s32.totalorder %s22, 1
      %p143 = scmp.ne.s32.totalorder %s138, %s140
      %p144 = scmp.eq.s32.totalorder %s22, 0
      %p145 = por %p143, %p144
      %p146 = scmp.ne.s32.totalorder %s138, %s140
      %p147 = scmp.eq.s32.totalorder %s27, 1
      %p148 = por %p146, %p147
      %p149 = scmp.ne.s32.totalorder %s140, %s141
      %p150 = scmp.eq.s32.totalorder %s27, 0
      %p151 = por %p149, %p150
      %p152 = scmp.ne.s32.totalorder %s140, %s141
      %p153 = scmp.eq.s32.totalorder %s28, 1
      %p154 = por %p152, %p153
      %p156 = scmp.ne.s32.totalorder %s141, %s155
      %p157 = scmp.eq.s32.totalorder %s28, 0
      %p158 = por %p156, %p157
      %s160 = sadd.s32 %s159, 1
      %p163 = scmp.eq.s32.totalorder %s22, 1
      %p164 = scmp.ne.s32.totalorder %s159, %s161
      %p165 = scmp.eq.s32.totalorder %s22, 0
      %p166 = por %p164, %p165
      %p167 = scmp.ne.s32.totalorder %s159, %s161
      %p168 = scmp.eq.s32.totalorder %s27, 1
      %p169 = por %p167, %p168
      %p170 = scmp.ne.s32.totalorder %s161, %s162
      %p171 = scmp.eq.s32.totalorder %s27, 0
      %p172 = por %p170, %p171
      %p173 = scmp.ne.s32.totalorder %s161, %s162
      %p174 = scmp.eq.s32.totalorder %s28, 1
      %p175 = por %p173, %p174
      %p177 = scmp.ne.s32.totalorder %s162, %s176
      %p178 = scmp.eq.s32.totalorder %s28, 0
      %p179 = por %p177, %p178
      %s181 = sadd.s32 %s180, 1
      %p184 = scmp.eq.s32.totalorder %s22, 1
      %p185 = scmp.ne.s32.totalorder %s180, %s182
      %p186 = scmp.eq.s32.totalorder %s22, 0
      %p187 = por %p185, %p186
      %p188 = scmp.ne.s32.totalorder %s180, %s182
      %p189 = scmp.eq.s32.totalorder %s27, 1
      %p190 = por %p188, %p189
      %p191 = scmp.ne.s32.totalorder %s182, %s183
      %p192 = scmp.eq.s32.totalorder %s27, 0
      %p193 = por %p191, %p192
      %p194 = scmp.ne.s32.totalorder %s182, %s183
      %p195 = scmp.eq.s32.totalorder %s28, 1
      %p196 = por %p194, %p195
      %p198 = scmp.ne.s32.totalorder %s183, %s197
      %p199 = scmp.eq.s32.totalorder %s28, 0
      %p200 = por %p198, %p199
      %s202 = sadd.s32 %s201, 1
      %p205 = scmp.eq.s32.totalorder %s22, 1
      %p206 = scmp.ne.s32.totalorder %s201, %s203
      %p207 = scmp.eq.s32.totalorder %s22, 0
      %p208 = por %p206, %p207
      %p209 = scmp.ne.s32.totalorder %s201, %s203
      %p210 = scmp.eq.s32.totalorder %s27, 1
      %p211 = por %p209, %p210
      %p212 = scmp.ne.s32.totalorder %s203, %s204
      %p213 = scmp.eq.s32.totalorder %s27, 0
      %p214 = por %p212, %p213
      %p215 = scmp.ne.s32.totalorder %s203, %s204
      %p216 = scmp.eq.s32.totalorder %s28, 1
      %p217 = por %p215, %p216
      %p219 = scmp.ne.s32.totalorder %s204, %s218
      %p220 = scmp.eq.s32.totalorder %s28, 0
      %p221 = por %p219, %p220
      %s223 = sadd.s32 %s222, 1
      %p226 = scmp.eq.s32.totalorder %s22, 1
      %p227 = scmp.ne.s32.totalorder %s222, %s224
      %p228 = scmp.eq.s32.totalorder %s22, 0
      %p229 = por %p227, %p228
      %p230 = scmp.ne.s32.totalorder %s222, %s224
      %p231 = scmp.eq.s32.totalorder %s27, 1
      %p232 = por %p230, %p231
      %p233 = scmp.ne.s32.totalorder %s224, %s225
      %p234 = scmp.eq.s32.totalorder %s27, 0
      %p235 = por %p233, %p234
      %p236 = scmp.ne.s32.totalorder %s224, %s225
      %p237 = scmp.eq.s32.totalorder %s28, 1
      %p238 = por %p236, %p237
      %p240 = scmp.ne.s32.totalorder %s225, %s239
      %p241 = scmp.eq.s32.totalorder %s28, 0
      %p242 = por %p240, %p241
      %s244 = sadd.s32 %s243, 1
      %p247 = scmp.eq.s32.totalorder %s22, 1
      %p248 = scmp.ne.s32.totalorder %s243, %s245
      %p249 = scmp.eq.s32.totalorder %s22, 0
      %p250 = por %p248, %p249
      %p251 = scmp.ne.s32.totalorder %s243, %s245
      %p252 = scmp.eq.s32.totalorder %s27, 1
      %p253 = por %p251, %p252
      %p254 = scmp.ne.s32.totalorder %s245, %s246
      %p255 = scmp.eq.s32.totalorder %s27, 0
      %p256 = por %p254, %p255
      %p257 = scmp.ne.s32.totalorder %s245, %s246
      %p258 = scmp.eq.s32.totalorder %s28, 1
      %p259 = por %p257, %p258
      %p261 = scmp.ne.s32.totalorder %s246, %s260
      %p262 = scmp.eq.s32.totalorder %s28, 0
      %p263 = por %p261, %p262
      %s264 = ssub.s32 %s29, %s41
      %s265 = ssub.s32 %s30, %s37
      %s266 = sor.u32 %s264, %s265
      %p267 = scmp.eq.s32.totalorder %s266, 0
      %s269 = sadd.s32 %s268, 1
      %s270 = scalar_select %p267, %s268, %s269
      %p273 = pneg %p267
      %p274 = scmp.eq.s32.totalorder %s22, 1
      %p275 = por %p273, %p274
      %p276 = scmp.ne.s32.totalorder %s268, %s271
      %p277 = scmp.eq.s32.totalorder %s22, 0
      %p278 = por %p276, %p277
      %p279 = scmp.ne.s32.totalorder %s268, %s271
      %p280 = scmp.eq.s32.totalorder %s27, 1
      %p281 = por %p279, %p280
      %p282 = scmp.ne.s32.totalorder %s271, %s272
      %p283 = scmp.eq.s32.totalorder %s27, 0
      %p284 = por %p282, %p283
      %p285 = scmp.ne.s32.totalorder %s271, %s272
      %p286 = scmp.eq.s32.totalorder %s28, 1
      %p287 = por %p285, %p286
      %p289 = scmp.ne.s32.totalorder %s272, %s288
      %p290 = scmp.eq.s32.totalorder %s28, 0
      %p291 = por %p289, %p290
      %p292 = scmp.le.s32.totalorder 1, %s22
      %p293 = scmp.lt.s32.totalorder %s22, 3
      %p294 = pnand %p292, %p293
      %p295 = pneg %p294
      // Predicated region
      $region9: #{tpu_custom_call.1} parent=5 // pred_check
        _
      $region10: #{tpu_custom_call.1} parent=5 // pred_check_branch
        %297 = sbr.rel (%p294) target = $region12
      $region11: #{tpu_custom_call.1} parent=5 // pred_region
        %s298 = ssub.s32 %s22, 1
        // Predicated region
        $region13: #{tpu_custom_call.1} parent=11 // pred_check
          %p299 = pneg %p88
        $region14: #{tpu_custom_call.1} parent=11 // pred_check_branch
          %301 = sbr.rel (%p299) target = $region16
        $region15: #{tpu_custom_call.1} parent=11 // pred_region
          %p302 = scmp.lt.s32.totalorder %s31, 1
          %s303 = scalar_select %p302, %s31, 1
          %s304 = smul.addr %s303, 8
          %s305 = scalar_lea.vmem %s1, %s304
        $region16: #{tpu_custom_call.1} parent=11 // pred_fallthru
          _
        // Predicated region
        $region17: #{tpu_custom_call.1} parent=11 // pred_check
          %p306 = pneg %p109
        $region18: #{tpu_custom_call.1} parent=11 // pred_check_branch
          %308 = sbr.rel (%p306) target = $region20
        $region19: #{tpu_custom_call.1} parent=11 // pred_region
          %s310 = ssub.s32 128, 128
          %311 = vsyncadd [#allocation5], %s310
          %s313 = sshll.u32 [#allocation4], 4
          %s314 = int_to_ptr.vmem [resolvable:$true] %s313
          %316 = dma.hbm_to_vmem [thread:$0]  %s2, 128, %s314, [#allocation5]
        $region20: #{tpu_custom_call.1} parent=11 // pred_fallthru
          _
        // Predicated region
        $region21: #{tpu_custom_call.1} parent=11 // pred_check
          %p317 = pneg %p130
        $region22: #{tpu_custom_call.1} parent=11 // pred_check_branch
          %319 = sbr.rel (%p317) target = $region24
        $region23: #{tpu_custom_call.1} parent=11 // pred_region
          _
        $region24: #{tpu_custom_call.1} parent=11 // pred_fallthru
          _
        // Predicated region
        $region25: #{tpu_custom_call.1} parent=11 // pred_check
          %p320 = pneg %p151
        $region26: #{tpu_custom_call.1} parent=11 // pred_check_branch
          %322 = sbr.rel (%p320) target = $region28
        $region27: #{tpu_custom_call.1} parent=11 // pred_region
          %s324 = ssub.s32 256, 256
          %325 = vsyncadd [#allocation8], %s324
          %s326 = sshll.u32 [#allocation7], 4
          %s327 = int_to_ptr.vmem [resolvable:$true] %s326
          %332 = dma.hbm_to_vmem [thread:$0]  %s4, 256, %s327, [#allocation8], 64, 64, 4
        $region28: #{tpu_custom_call.1} parent=11 // pred_fallthru
          _
        // Predicated region
        $region29: #{tpu_custom_call.1} parent=11 // pred_check
          %p333 = pneg %p172
        $region30: #{tpu_custom_call.1} parent=11 // pred_check_branch
          %335 = sbr.rel (%p333) target = $region32
        $region31: #{tpu_custom_call.1} parent=11 // pred_region
          _
        $region32: #{tpu_custom_call.1} parent=11 // pred_fallthru
          _
        // Predicated region
        $region33: #{tpu_custom_call.1} parent=11 // pred_check
          %p336 = pneg %p193
        $region34: #{tpu_custom_call.1} parent=11 // pred_check_branch
          %338 = sbr.rel (%p336) target = $region36
        $region35: #{tpu_custom_call.1} parent=11 // pred_region
          %s340 = ssub.s32 256, 256
          %341 = vsyncadd [#allocation8], %s340
          %s342 = sshll.u32 [#allocation9], 4
          %s343 = int_to_ptr.vmem [resolvable:$true] %s342
          %348 = dma.hbm_to_vmem [thread:$0]  %s6, 256, %s343, [#allocation8], 64, 64, 4
        $region36: #{tpu_custom_call.1} parent=11 // pred_fallthru
          _
        // Predicated region
        $region37: #{tpu_custom_call.1} parent=11 // pred_check
          %p349 = pneg %p214
        $region38: #{tpu_custom_call.1} parent=11 // pred_check_branch
          %351 = sbr.rel (%p349) target = $region40
        $region39: #{tpu_custom_call.1} parent=11 // pred_region
          %s353 = ssub.s32 256, 256
          %354 = vsyncadd [#allocation11], %s353
          %s355 = sshll.u32 [#allocation10], 4
          %s356 = int_to_ptr.vmem [resolvable:$true] %s355
          %361 = dma.hbm_to_vmem [thread:$0]  %s7, 256, %s356, [#allocation11], 64, 64, 4
        $region40: #{tpu_custom_call.1} parent=11 // pred_fallthru
          _
        // Predicated region
        $region41: #{tpu_custom_call.1} parent=11 // pred_check
          %p362 = pneg %p235
        $region42: #{tpu_custom_call.1} parent=11 // pred_check_branch
          %364 = sbr.rel (%p362) target = $region44
        $region43: #{tpu_custom_call.1} parent=11 // pred_region
          _
        $region44: #{tpu_custom_call.1} parent=11 // pred_fallthru
          _
        // Predicated region
        $region45: #{tpu_custom_call.1} parent=11 // pred_check
          %p365 = pneg %p256
        $region46: #{tpu_custom_call.1} parent=11 // pred_check_branch
          %367 = sbr.rel (%p365) target = $region48
        $region47: #{tpu_custom_call.1} parent=11 // pred_region
          _
        $region48: #{tpu_custom_call.1} parent=11 // pred_fallthru
          _
      $region12: #{tpu_custom_call.1} parent=5 // pred_fallthru
        _
      %p368 = scmp.lt.s32.totalorder %s22, 2
      // Predicated region
      $region49: #{tpu_custom_call.1} parent=5 // pred_check
        %p369 = pneg %p368
      $region50: #{tpu_custom_call.1} parent=5 // pred_check_branch
        %371 = sbr.rel (%p369) target = $region52
      $region51: #{tpu_custom_call.1} parent=5 // pred_region
        // Predicated region
        $region53: #{tpu_custom_call.1} parent=51 // pred_check
          %p372 = pneg %p56
        $region54: #{tpu_custom_call.1} parent=51 // pred_check_branch
          %374 = sbr.rel (%p372) target = $region56
        $region55: #{tpu_custom_call.1} parent=51 // pred_region
          %p375 = scmp.lt.s32.totalorder %s29, 1
          %s376 = scalar_select %p375, %s29, 1
          %p377 = scmp.lt.s32.totalorder %s30, 0
          %s378 = scalar_select %p377, %s30, 0
          %s379 = sadd.s32 %s378, %s376
          %s380 = smul.addr %s379, 8
          %s381 = scalar_lea.vmem %s0, %s380
        $region56: #{tpu_custom_call.1} parent=51 // pred_fallthru
          _
      $region52: #{tpu_custom_call.1} parent=5 // pred_fallthru
        _
      %p382 = scmp.le.s32.totalorder 1, %s22
      %p383 = scmp.lt.s32.totalorder %s22, 3
      %p384 = pnand %p382, %p383
      %p385 = pneg %p384
      // Predicated region
      $region57: #{tpu_custom_call.1} parent=5 // pred_check
        _
      $region58: #{tpu_custom_call.1} parent=5 // pred_check_branch
        %387 = sbr.rel (%p384) target = $region60
      $region59: #{tpu_custom_call.1} parent=5 // pred_region
        %s388 = ssub.s32 %s22, 1
        // Predicated region
        $region61: #{tpu_custom_call.1} parent=59 // pred_check
          %p389 = pneg %p109
        $region62: #{tpu_custom_call.1} parent=59 // pred_check_branch
          %391 = sbr.rel (%p389) target = $region64
        $region63: #{tpu_custom_call.1} parent=59 // pred_region
          %392 = dma.done [#allocation5], 128
        $region64: #{tpu_custom_call.1} parent=59 // pred_fallthru
          _
        // Predicated region
        $region65: #{tpu_custom_call.1} parent=59 // pred_check
          %p393 = pneg %p151
        $region66: #{tpu_custom_call.1} parent=59 // pred_check_branch
          %395 = sbr.rel (%p393) target = $region68
        $region67: #{tpu_custom_call.1} parent=59 // pred_region
          %396 = dma.done [#allocation8], 256
        $region68: #{tpu_custom_call.1} parent=59 // pred_fallthru
          _
        // Predicated region
        $region69: #{tpu_custom_call.1} parent=59 // pred_check
          %p397 = pneg %p193
        $region70: #{tpu_custom_call.1} parent=59 // pred_check_branch
          %399 = sbr.rel (%p397) target = $region72
        $region71: #{tpu_custom_call.1} parent=59 // pred_region
          %400 = dma.done [#allocation8], 256
        $region72: #{tpu_custom_call.1} parent=59 // pred_fallthru
          _
        // Predicated region
        $region73: #{tpu_custom_call.1} parent=59 // pred_check
          %p401 = pneg %p214
        $region74: #{tpu_custom_call.1} parent=59 // pred_check_branch
          %403 = sbr.rel (%p401) target = $region76
        $region75: #{tpu_custom_call.1} parent=59 // pred_region
          %404 = dma.done [#allocation11], 256
        $region76: #{tpu_custom_call.1} parent=59 // pred_fallthru
          _
        %p405 = scmp.lt.s32.totalorder %s31, 1
        %s406 = scalar_select %p405, %s31, 1
        %p407 = scmp.lt.s32.totalorder %s32, 0
        %s408 = scalar_select %p407, %s32, 0
        %s409 = sadd.s32 %s408, %s406
        %s410 = smul.addr %s409, 8
        %s411 = scalar_lea.vmem %s0, %s410
        %p412 = pneg %p62
        %p413 = pneg %p59
        %p414 = scmp.lt.s32.totalorder %s31, 1
        %s415 = scalar_select %p414, %s31, 1
        %s416 = smul.addr %s415, 8
        %s417 = scalar_lea.vmem %s1, %s416
        %p418 = pneg %p88
        %p419 = pneg %p85
        %p420 = pneg %p109
        %p421 = pneg %p106
        %p422 = pneg %p130
        %p423 = pneg %p127
        %p424 = pneg %p151
        %p425 = pneg %p148
        %p426 = pneg %p172
        %p427 = pneg %p169
        %p428 = pneg %p193
        %p429 = pneg %p190
        %p430 = pneg %p214
        %p431 = pneg %p211
        %p432 = pneg %p235
        %p433 = pneg %p232
        %p434 = pneg %p256
        %p435 = pneg %p253
        %p436 = pneg %p284
        %p437 = pneg %p281
        %s438 = sand.u32 %s271, 1
        %s439 = scalar_lea.sflag [#allocation6], %s438
        %s440 = sand.u32 %s271, 1
        %s441 = smul.addr %s440, 8
        %s442 = scalar_lea.vmem [#allocation12], %s441
        %p443 = scmp.lt.s32.totalorder %s31, 1
        %s444 = scalar_select %p443, %s31, 1
        %p445 = scmp.lt.s32.totalorder %s32, 0
        %s446 = scalar_select %p445, %s32, 0
        %s447 = sadd.s32 %s446, %s444
        %s448 = smul.addr %s447, 8
        %s449 = scalar_lea.vmem %s0, %s448
        %p450 = scmp.lt.s32.totalorder %s31, 1
        %s451 = scalar_select %p450, %s31, 1
        %s452 = smul.addr %s451, 8
        %s453 = scalar_lea.vmem %s1, %s452
        %v455 = vld [vmem:[%s449] sm:$0xff]
        %v456 = vld [vmem:[#allocation4] sm:$0xff]
        %p457 = scmp.eq.s32.totalorder %s32, 0
        // Predicated region
        $region77: #{tpu_custom_call.1} parent=59 // pred_check
          %p458 = pneg %p457
        $region78: #{tpu_custom_call.1} parent=59 // pred_check_branch
          %460 = sbr.rel (%p458) target = $region80
        $region79: #{tpu_custom_call.1} parent=59 // pred_region
          %v461 = vld [vmem:[%s453] sm:$0xff]
          %vm462 = vcmask 261120
          %v463 = vsel %vm462, %v461, 0.0
          %464 = vadd.xlane.f32.xlu0 %v463
          %v465 = vpop.xlane.xlu0 %464
          %v466 = vrcp.pop 32.0
          %v467 = vmul.f32 %v465, %v466
          %v468 = vsub.f32 %v461, %v467
          %v469 = vmul.f32 %v468, %v468
          %v470 = vsel %vm462, %v469, 0.0
          %471 = vadd.xlane.f32.xlu0 %v470
          %v472 = vpop.xlane.xlu0 %471
          %v473 = vmul.f32 %v472, %v466
          %v474 = vadd.f32 %v473, 1e-05
          %v475 = vrsqrt.pop %v474
          %v476 = vmul.f32 %v468, %v475
          %v477 = vlaneseq
          %v478 = vshrl.u32 %v477, 7
          %v479 = vsub.s32 0, %v478
          %v480 = vrot.slane %v456, %v479
          %v481 = vmul.f32 %v476, %v480
          %v482 = vlaneseq
          %v483 = vshrl.u32 %v482, 7
          %v484 = vsub.s32 1, %v483
          %v485 = vrot.slane %v456, %v484
          %v486 = vadd.f32 %v481, %v485
          %v487 = vpack.c.bf16 %v486, %v486
          %v488 = vld [vmem:[#allocation7] sm:$0xf]
          %v489 = vld [vmem:[#allocation7 + $0x4] sm:$0xf]
          %v490 = vld [vmem:[#allocation7 + $0x8] sm:$0xf]
          %v491 = vld [vmem:[#allocation7 + $0xc] sm:$0xf]
          %v492 = vld [vmem:[%s5] sm:$0x1]
          %v494 = vlaneseq
          %v495 = vshrl.u32 %v494, 7
          %v496 = vsub.s32 0, %v495
          %v497 = vrot.slane %v492, %v496
          %v503 = vunpack.c.l.b16 %v488
          %v504 = vunpack.c.l.b16 %v489
          %v505 = vunpack.c.l.b16 %v490
          %v506 = vunpack.c.l.b16 %v491
          %v507 = vpack.c.b16 %v504, %v503
          %v508 = vpack.c.b16 %v506, %v505
          %v512 = vsel %vm462, %v487, 0
          %514 = vmatprep.subr.bf16.mxu0 0
          %515 = vmatpush1.bf16.msra.mxu0 %v507
          %516 = vmatprep.subr.bf16.mxu0 0
          %517 = vmatpush1.bf16.msra.mxu0 %v508
          %518 = vmatprep.subr.bf16.mxu0 0
          %519 = vmatpush1.bf16.msra.mxu0 0
          %520 = vmatprep.subr.bf16.mxu0 0
          %521 = vmatpush1.bf16.msra.mxu0 0
          %522 = vmatprep.subr.bf16.mxu0 0
          %523 = vmatpush1.bf16.msra.mxu0 0
          %524 = vmatprep.subr.bf16.mxu0 0
          %525 = vmatpush1.bf16.msra.mxu0 0
          %526 = vmatprep.subr.bf16.mxu0 0
          %527 = vmatpush1.bf16.msra.mxu0 0
          %528 = vmatprep.subr.bf16.mxu0 0
          %529 = vmatpush1.bf16.msra.mxu0 0
          %530 = vmatprep.subr.bf16.mxu0 0
          %531 = vmatpush1.bf16.msra.mxu0 0
          %532 = vmatprep.subr.bf16.mxu0 0
          %533 = vmatpush1.bf16.msra.mxu0 0
          %534 = vmatprep.subr.bf16.mxu0 0
          %535 = vmatpush1.bf16.msra.mxu0 0
          %536 = vmatprep.subr.bf16.mxu0 0
          %537 = vmatpush1.bf16.msra.mxu0 0
          %538 = vmatprep.subr.bf16.mxu0 0
          %539 = vmatpush1.bf16.msra.mxu0 0
          %540 = vmatprep.subr.bf16.mxu0 0
          %541 = vmatpush1.bf16.msra.mxu0 0
          %542 = vmatprep.subr.bf16.mxu0 0
          %543 = vmatpush1.bf16.msra.mxu0 0
          %544 = vmatprep.subr.bf16.mxu0 0
          %545 = vmatpush1.bf16.msra.mxu0 0
          %546 = vmatprep.mubr.bf16.mxu0 0
          %547 = vmatmul.mubr.bf16.gmra.mrb[0].mxu0 %v512
          %v548 = vpop.f32.mrb[0].mxu0
          %v549 = vadd.f32 %v497, %v548
          %v550 = vpop.f32.mrb[0].mxu0
          %v551 = vpop.f32.mrb[0].mxu0
          %v552 = vpop.f32.mrb[0].mxu0
          %553 = vdwg.mxu0
          %v554 = vpack.c.bf16 %v549, %v549
          %556 = vrot.lane.b32.xlu0 %v554, 124
          %v557 = vpop.permute.xlu0 %556
          %559 = vrot.lane.b32.xlu0 %v554, 120
          %v560 = vpop.permute.xlu0 %559
          %562 = vrot.lane.b32.xlu0 %v554, 116
          %v563 = vpop.permute.xlu0 %562
          %565 = vrot.lane.b32.xlu0 %v554, 112
          %v566 = vpop.permute.xlu0 %565
          %568 = vrot.lane.b32.xlu0 %v554, 108
          %v569 = vpop.permute.xlu0 %568
          %571 = vrot.lane.b32.xlu0 %v554, 104
          %v572 = vpop.permute.xlu0 %571
          %574 = vrot.lane.b32.xlu0 %v554, 100
          %v575 = vpop.permute.xlu0 %574
          %v577 = vcombine.low %v554, %v566
          %v579 = vunpack.c.l.s4 1983009808
          %v580 = vunpack.c.0.s8 %v579
          %v581 = vlaneseq
          %v582 = vshrl.u32 %v581, 7
          %v583 = vsub.s32 %v580, %v582
          %v584 = vrot.slane %v577, %v583
          %v585 = vcombine.low %v560, %v572
          %v587 = vunpack.c.l.s4 1983009808
          %v588 = vunpack.c.0.s8 %v587
          %v589 = vlaneseq
          %v590 = vshrl.u32 %v589, 7
          %v591 = vsub.s32 %v588, %v590
          %v592 = vrot.slane %v585, %v591
          %v593 = vcombine.low %v584, %v592
          %v594 = vcombine.high %v584, %v592
          %v596 = vunpack.c.l.s4 1934713408
          %v597 = vunpack.c.0.s8 %v596
          %v598 = vlaneseq
          %v599 = vshrl.u32 %v598, 7
          %v600 = vsub.s32 %v597, %v599
          %v601 = vrot.slane %v593, %v600
          %v603 = vunpack.c.l.s4 1934713408
          %v604 = vunpack.c.0.s8 %v603
          %v605 = vlaneseq
          %v606 = vshrl.u32 %v605, 7
          %v607 = vsub.s32 %v604, %v606
          %v608 = vrot.slane %v594, %v607
          %v609 = vcombine.high %v601, 0
          %v610 = vcombine.high %v608, 0
          %v611 = vcombine.low %v557, %v569
          %v613 = vunpack.c.l.s4 1983009808
          %v614 = vunpack.c.0.s8 %v613
          %v615 = vlaneseq
          %v616 = vshrl.u32 %v615, 7
          %v617 = vsub.s32 %v614, %v616
          %v618 = vrot.slane %v611, %v617
          %v619 = vcombine.low %v563, %v575
          %v621 = vunpack.c.l.s4 1983009808
          %v622 = vunpack.c.0.s8 %v621
          %v623 = vlaneseq
          %v624 = vshrl.u32 %v623, 7
          %v625 = vsub.s32 %v622, %v624
          %v626 = vrot.slane %v619, %v625
          %v627 = vcombine.low %v618, %v626
          %v628 = vcombine.high %v618, %v626
          %v630 = vunpack.c.l.s4 1934713408
          %v631 = vunpack.c.0.s8 %v630
          %v632 = vlaneseq
          %v633 = vshrl.u32 %v632, 7
          %v634 = vsub.s32 %v631, %v633
          %v635 = vrot.slane %v627, %v634
          %v637 = vunpack.c.l.s4 1934713408
          %v638 = vunpack.c.0.s8 %v637
          %v639 = vlaneseq
          %v640 = vshrl.u32 %v639, 7
          %v641 = vsub.s32 %v638, %v640
          %v642 = vrot.slane %v628, %v641
          %v643 = vcombine.high %v635, 0
          %v644 = vcombine.high %v642, 0
          %v647 = vpack.i.b16 %v635, %v601
          %v649 = vshrl.u32 %v601, 16
          %v650 = vshrl.u32 %v635, 16
          %v651 = vpack.i.b16 %v650, %v649
          %v655 = vpack.i.b16 %v643, %v609
          %v657 = vshrl.u32 %v609, 16
          %v658 = vshrl.u32 %v643, 16
          %v659 = vpack.i.b16 %v658, %v657
          %v663 = vpack.i.b16 %v642, %v608
          %v665 = vshrl.u32 %v608, 16
          %v666 = vshrl.u32 %v642, 16
          %v667 = vpack.i.b16 %v666, %v665
          %v671 = vpack.i.b16 %v644, %v610
          %v673 = vshrl.u32 %v610, 16
          %v674 = vshrl.u32 %v644, 16
          %v675 = vpack.i.b16 %v674, %v673
          %v677 = vcombine.low %v647, %v663
          %v679 = vunpack.c.l.s4 1983009808
          %v680 = vunpack.c.0.s8 %v679
          %v681 = vlaneseq
          %v682 = vshrl.u32 %v681, 7
          %v683 = vsub.s32 %v680, %v682
          %v684 = vrot.slane %v677, %v683
          %v685 = vcombine.low %v655, %v671
          %v687 = vunpack.c.l.s4 1983009808
          %v688 = vunpack.c.0.s8 %v687
          %v689 = vlaneseq
          %v690 = vshrl.u32 %v689, 7
          %v691 = vsub.s32 %v688, %v690
          %v692 = vrot.slane %v685, %v691
          %v693 = vcombine.low %v684, %v692
          %v694 = vcombine.high %v684, %v692
          %v696 = vunpack.c.l.s4 1934713408
          %v697 = vunpack.c.0.s8 %v696
          %v698 = vlaneseq
          %v699 = vshrl.u32 %v698, 7
          %v700 = vsub.s32 %v697, %v699
          %v701 = vrot.slane %v693, %v700
          %v703 = vunpack.c.l.s4 1934713408
          %v704 = vunpack.c.0.s8 %v703
          %v705 = vlaneseq
          %v706 = vshrl.u32 %v705, 7
          %v707 = vsub.s32 %v704, %v706
          %v708 = vrot.slane %v694, %v707
          %v709 = vcombine.high %v701, 0
          %v710 = vcombine.high %v708, 0
          %v711 = vcombine.low %v651, %v667
          %v713 = vunpack.c.l.s4 1983009808
          %v714 = vunpack.c.0.s8 %v713
          %v715 = vlaneseq
          %v716 = vshrl.u32 %v715, 7
          %v717 = vsub.s32 %v714, %v716
          %v718 = vrot.slane %v711, %v717
          %v719 = vcombine.low %v659, %v675
          %v721 = vunpack.c.l.s4 1983009808
          %v722 = vunpack.c.0.s8 %v721
          %v723 = vlaneseq
          %v724 = vshrl.u32 %v723, 7
          %v725 = vsub.s32 %v722, %v724
          %v726 = vrot.slane %v719, %v725
          %v727 = vcombine.low %v718, %v726
          %v728 = vcombine.high %v718, %v726
          %v730 = vunpack.c.l.s4 1934713408
          %v731 = vunpack.c.0.s8 %v730
          %v732 = vlaneseq
          %v733 = vshrl.u32 %v732, 7
          %v734 = vsub.s32 %v731, %v733
          %v735 = vrot.slane %v727, %v734
          %v737 = vunpack.c.l.s4 1934713408
          %v738 = vunpack.c.0.s8 %v737
          %v739 = vlaneseq
          %v740 = vshrl.u32 %v739, 7
          %v741 = vsub.s32 %v738, %v740
          %v742 = vrot.slane %v728, %v741
          %v743 = vcombine.high %v735, 0
          %v744 = vcombine.high %v742, 0
          %v747 = vpack.i.b16 %v735, %v701
          %v749 = vshrl.u32 %v701, 16
          %v750 = vshrl.u32 %v735, 16
          %v751 = vpack.i.b16 %v750, %v749
          %v755 = vpack.i.b16 %v743, %v709
          %v757 = vshrl.u32 %v709, 16
          %v758 = vshrl.u32 %v743, 16
          %v759 = vpack.i.b16 %v758, %v757
          %v763 = vpack.i.b16 %v742, %v708
          %v765 = vshrl.u32 %v708, 16
          %v766 = vshrl.u32 %v742, 16
          %v767 = vpack.i.b16 %v766, %v765
          %v771 = vpack.i.b16 %v744, %v710
          %v773 = vshrl.u32 %v710, 16
          %v774 = vshrl.u32 %v744, 16
          %v775 = vpack.i.b16 %v774, %v773
          %vm777 = vcmask 27648
          %778 = vst.msk [vmem:[#allocation2] sm:$0xf] %vm777, %v747
          %779 = vst.msk [vmem:[#allocation2 + $0x4] sm:$0xf] %vm777, %v751
          %780 = vst.msk [vmem:[#allocation2 + $0x8] sm:$0xf] %vm777, %v755
          %781 = vst.msk [vmem:[#allocation2 + $0xc] sm:$0xf] %vm777, %v759
          %782 = vst.msk [vmem:[#allocation2 + $0x10] sm:$0xf] %vm777, %v763
          %783 = vst.msk [vmem:[#allocation2 + $0x14] sm:$0xf] %vm777, %v767
          %784 = vst.msk [vmem:[#allocation2 + $0x18] sm:$0xf] %vm777, %v771
          %785 = vst.msk [vmem:[#allocation2 + $0x1c] sm:$0xf] %vm777, %v775
          %786 = vrot.lane.b32.xlu0 %v554, 96
          %v787 = vpop.permute.xlu0 %786
          %788 = vrot.lane.b32.xlu0 %v557, 96
          %v789 = vpop.permute.xlu0 %788
          %790 = vrot.lane.b32.xlu0 %v560, 96
          %v791 = vpop.permute.xlu0 %790
          %792 = vrot.lane.b32.xlu0 %v563, 96
          %v793 = vpop.permute.xlu0 %792
          %794 = vrot.lane.b32.xlu0 %v566, 96
          %v795 = vpop.permute.xlu0 %794
          %796 = vrot.lane.b32.xlu0 %v569, 96
          %v797 = vpop.permute.xlu0 %796
          %798 = vrot.lane.b32.xlu0 %v572, 96
          %v799 = vpop.permute.xlu0 %798
          %800 = vrot.lane.b32.xlu0 %v575, 96
          %v801 = vpop.permute.xlu0 %800
          %v810 = vcombine.low %v787, %v795
          %v812 = vunpack.c.l.s4 1983009808
          %v813 = vunpack.c.0.s8 %v812
          %v814 = vlaneseq
          %v815 = vshrl.u32 %v814, 7
          %v816 = vsub.s32 %v813, %v815
          %v817 = vrot.slane %v810, %v816
          %v818 = vcombine.low %v791, %v799
          %v820 = vunpack.c.l.s4 1983009808
          %v821 = vunpack.c.0.s8 %v820
          %v822 = vlaneseq
          %v823 = vshrl.u32 %v822, 7
          %v824 = vsub.s32 %v821, %v823
          %v825 = vrot.slane %v818, %v824
          %v826 = vcombine.low %v817, %v825
          %v827 = vcombine.high %v817, %v825
          %v829 = vunpack.c.l.s4 1934713408
          %v830 = vunpack.c.0.s8 %v829
          %v831 = vlaneseq
          %v832 = vshrl.u32 %v831, 7
          %v833 = vsub.s32 %v830, %v832
          %v834 = vrot.slane %v826, %v833
          %v836 = vunpack.c.l.s4 1934713408
          %v837 = vunpack.c.0.s8 %v836
          %v838 = vlaneseq
          %v839 = vshrl.u32 %v838, 7
          %v840 = vsub.s32 %v837, %v839
          %v841 = vrot.slane %v827, %v840
          %v842 = vcombine.high %v834, 0
          %v843 = vcombine.high %v841, 0
          %v844 = vcombine.low %v789, %v797
          %v846 = vunpack.c.l.s4 1983009808
          %v847 = vunpack.c.0.s8 %v846
          %v848 = vlaneseq
          %v849 = vshrl.u32 %v848, 7
          %v850 = vsub.s32 %v847, %v849
          %v851 = vrot.slane %v844, %v850
          %v852 = vcombine.low %v793, %v801
          %v854 = vunpack.c.l.s4 1983009808
          %v855 = vunpack.c.0.s8 %v854
          %v856 = vlaneseq
          %v857 = vshrl.u32 %v856, 7
          %v858 = vsub.s32 %v855, %v857
          %v859 = vrot.slane %v852, %v858
          %v860 = vcombine.low %v851, %v859
          %v861 = vcombine.high %v851, %v859
          %v863 = vunpack.c.l.s4 1934713408
          %v864 = vunpack.c.0.s8 %v863
          %v865 = vlaneseq
          %v866 = vshrl.u32 %v865, 7
          %v867 = vsub.s32 %v864, %v866
          %v868 = vrot.slane %v860, %v867
          %v870 = vunpack.c.l.s4 1934713408
          %v871 = vunpack.c.0.s8 %v870
          %v872 = vlaneseq
          %v873 = vshrl.u32 %v872, 7
          %v874 = vsub.s32 %v871, %v873
          %v875 = vrot.slane %v861, %v874
          %v876 = vcombine.high %v868, 0
          %v877 = vcombine.high %v875, 0
          %v880 = vpack.i.b16 %v868, %v834
          %v882 = vshrl.u32 %v834, 16
          %v883 = vshrl.u32 %v868, 16
          %v884 = vpack.i.b16 %v883, %v882
          %v888 = vpack.i.b16 %v876, %v842
          %v890 = vshrl.u32 %v842, 16
          %v891 = vshrl.u32 %v876, 16
          %v892 = vpack.i.b16 %v891, %v890
          %v896 = vpack.i.b16 %v875, %v841
          %v898 = vshrl.u32 %v841, 16
          %v899 = vshrl.u32 %v875, 16
          %v900 = vpack.i.b16 %v899, %v898
          %v904 = vpack.i.b16 %v877, %v843
          %v906 = vshrl.u32 %v843, 16
          %v907 = vshrl.u32 %v877, 16
          %v908 = vpack.i.b16 %v907, %v906
          %v910 = vcombine.low %v880, %v896
          %v912 = vunpack.c.l.s4 1983009808
          %v913 = vunpack.c.0.s8 %v912
          %v914 = vlaneseq
          %v915 = vshrl.u32 %v914, 7
          %v916 = vsub.s32 %v913, %v915
          %v917 = vrot.slane %v910, %v916
          %v918 = vcombine.low %v888, %v904
          %v920 = vunpack.c.l.s4 1983009808
          %v921 = vunpack.c.0.s8 %v920
          %v922 = vlaneseq
          %v923 = vshrl.u32 %v922, 7
          %v924 = vsub.s32 %v921, %v923
          %v925 = vrot.slane %v918, %v924
          %v926 = vcombine.low %v917, %v925
          %v927 = vcombine.high %v917, %v925
          %v929 = vunpack.c.l.s4 1934713408
          %v930 = vunpack.c.0.s8 %v929
          %v931 = vlaneseq
          %v932 = vshrl.u32 %v931, 7
          %v933 = vsub.s32 %v930, %v932
          %v934 = vrot.slane %v926, %v933
          %v936 = vunpack.c.l.s4 1934713408
          %v937 = vunpack.c.0.s8 %v936
          %v938 = vlaneseq
          %v939 = vshrl.u32 %v938, 7
          %v940 = vsub.s32 %v937, %v939
          %v941 = vrot.slane %v927, %v940
          %v942 = vcombine.high %v934, 0
          %v943 = vcombine.high %v941, 0
          %v944 = vcombine.low %v884, %v900
          %v946 = vunpack.c.l.s4 1983009808
          %v947 = vunpack.c.0.s8 %v946
          %v948 = vlaneseq
          %v949 = vshrl.u32 %v948, 7
          %v950 = vsub.s32 %v947, %v949
          %v951 = vrot.slane %v944, %v950
          %v952 = vcombine.low %v892, %v908
          %v954 = vunpack.c.l.s4 1983009808
          %v955 = vunpack.c.0.s8 %v954
          %v956 = vlaneseq
          %v957 = vshrl.u32 %v956, 7
          %v958 = vsub.s32 %v955, %v957
          %v959 = vrot.slane %v952, %v958
          %v960 = vcombine.low %v951, %v959
          %v961 = vcombine.high %v951, %v959
          %v963 = vunpack.c.l.s4 1934713408
          %v964 = vunpack.c.0.s8 %v963
          %v965 = vlaneseq
          %v966 = vshrl.u32 %v965, 7
          %v967 = vsub.s32 %v964, %v966
          %v968 = vrot.slane %v960, %v967
          %v970 = vunpack.c.l.s4 1934713408
          %v971 = vunpack.c.0.s8 %v970
          %v972 = vlaneseq
          %v973 = vshrl.u32 %v972, 7
          %v974 = vsub.s32 %v971, %v973
          %v975 = vrot.slane %v961, %v974
          %v976 = vcombine.high %v968, 0
          %v977 = vcombine.high %v975, 0
          %v980 = vpack.i.b16 %v968, %v934
          %v982 = vshrl.u32 %v934, 16
          %v983 = vshrl.u32 %v968, 16
          %v984 = vpack.i.b16 %v983, %v982
          %v988 = vpack.i.b16 %v976, %v942
          %v990 = vshrl.u32 %v942, 16
          %v991 = vshrl.u32 %v976, 16
          %v992 = vpack.i.b16 %v991, %v990
          %v996 = vpack.i.b16 %v975, %v941
          %v998 = vshrl.u32 %v941, 16
          %v999 = vshrl.u32 %v975, 16
          %v1000 = vpack.i.b16 %v999, %v998
          %v1004 = vpack.i.b16 %v977, %v943
          %v1006 = vshrl.u32 %v943, 16
          %v1007 = vshrl.u32 %v977, 16
          %v1008 = vpack.i.b16 %v1007, %v1006
          %1010 = vst.msk [vmem:[#allocation3] sm:$0xf] %vm777, %v980
          %1011 = vst.msk [vmem:[#allocation3 + $0x4] sm:$0xf] %vm777, %v984
          %1012 = vst.msk [vmem:[#allocation3 + $0x8] sm:$0xf] %vm777, %v988
          %1013 = vst.msk [vmem:[#allocation3 + $0xc] sm:$0xf] %vm777, %v992
          %1014 = vst.msk [vmem:[#allocation3 + $0x10] sm:$0xf] %vm777, %v996
          %1015 = vst.msk [vmem:[#allocation3 + $0x14] sm:$0xf] %vm777, %v1000
          %1016 = vst.msk [vmem:[#allocation3 + $0x18] sm:$0xf] %vm777, %v1004
          %1017 = vst.msk [vmem:[#allocation3 + $0x1c] sm:$0xf] %vm777, %v1008
        $region80: #{tpu_custom_call.1} parent=59 // pred_fallthru
          _
        %v1018 = vld [vmem:[#allocation2] sm:$0xf]
        %v1019 = vld [vmem:[#allocation2 + $0x4] sm:$0xf]
        %v1020 = vld [vmem:[#allocation2 + $0x8] sm:$0xf]
        %v1021 = vld [vmem:[#allocation2 + $0xc] sm:$0xf]
        %v1022 = vld [vmem:[#allocation2 + $0x10] sm:$0xf]
        %v1023 = vld [vmem:[#allocation2 + $0x14] sm:$0xf]
        %v1024 = vld [vmem:[#allocation2 + $0x18] sm:$0xf]
        %v1025 = vld [vmem:[#allocation2 + $0x1c] sm:$0xf]
        %v1026 = vld [vmem:[#allocation3] sm:$0xf]
        %v1027 = vld [vmem:[#allocation3 + $0x4] sm:$0xf]
        %v1028 = vld [vmem:[#allocation3 + $0x8] sm:$0xf]
        %v1029 = vld [vmem:[#allocation3 + $0xc] sm:$0xf]
        %v1030 = vld [vmem:[#allocation3 + $0x10] sm:$0xf]
        %v1031 = vld [vmem:[#allocation3 + $0x14] sm:$0xf]
        %v1032 = vld [vmem:[#allocation3 + $0x18] sm:$0xf]
        %v1033 = vld [vmem:[#allocation3 + $0x1c] sm:$0xf]
        %vm1034 = vcmask 261120
        %v1035 = vsel %vm1034, %v455, 0.0
        %1036 = vadd.xlane.f32.xlu0 %v1035
        %v1037 = vpop.xlane.xlu0 %1036
        %v1038 = vrcp.pop 32.0
        %v1039 = vmul.f32 %v1037, %v1038
        %v1040 = vsub.f32 %v455, %v1039
        %v1041 = vmul.f32 %v1040, %v1040
        %v1042 = vsel %vm1034, %v1041, 0.0
        %1043 = vadd.xlane.f32.xlu0 %v1042
        %v1044 = vpop.xlane.xlu0 %1043
        %v1045 = vmul.f32 %v1044, %v1038
        %v1046 = vadd.f32 %v1045, 1e-05
        %v1047 = vrsqrt.pop %v1046
        %v1048 = vmul.f32 %v1040, %v1047
        %v1049 = vlaneseq
        %v1050 = vshrl.u32 %v1049, 7
        %v1051 = vsub.s32 0, %v1050
        %v1052 = vrot.slane %v456, %v1051
        %v1053 = vmul.f32 %v1048, %v1052
        %v1054 = vlaneseq
        %v1055 = vshrl.u32 %v1054, 7
        %v1056 = vsub.s32 1, %v1055
        %v1057 = vrot.slane %v456, %v1056
        %v1058 = vadd.f32 %v1053, %v1057
        %v1059 = vpack.c.bf16 %v1058, %v1058
        %v1060 = vld [vmem:[%s3] sm:$0xf]
        %v1061 = vld [vmem:[%s3 + $0x4] sm:$0xf]
        %v1062 = vld [vmem:[%s3 + $0x8] sm:$0xf]
        %v1063 = vld [vmem:[%s3 + $0xc] sm:$0xf]
        %v1064 = vlaneseq
        %v1065 = vshrl.u32 %v1064, 7
        %v1066 = vsub.s32 4, %v1065
        %v1067 = vrot.slane %v456, %v1066
        %v1072 = vunpack.c.l.b16 %v1060
        %v1073 = vunpack.c.l.b16 %v1061
        %v1074 = vunpack.c.l.b16 %v1062
        %v1075 = vunpack.c.l.b16 %v1063
        %v1076 = vpack.c.b16 %v1073, %v1072
        %v1077 = vpack.c.b16 %v1075, %v1074
        %v1081 = vsel %vm1034, %v1059, 0
        %1083 = vmatprep.subr.bf16.mxu0 0
        %1084 = vmatpush1.bf16.msra.mxu0 %v1076
        %1085 = vmatprep.subr.bf16.mxu0 0
        %1086 = vmatpush1.bf16.msra.mxu0 %v1077
        %1087 = vmatprep.subr.bf16.mxu0 0
        %1088 = vmatpush1.bf16.msra.mxu0 0
        %1089 = vmatprep.subr.bf16.mxu0 0
        %1090 = vmatpush1.bf16.msra.mxu0 0
        %1091 = vmatprep.subr.bf16.mxu0 0
        %1092 = vmatpush1.bf16.msra.mxu0 0
        %1093 = vmatprep.subr.bf16.mxu0 0
        %1094 = vmatpush1.bf16.msra.mxu0 0
        %1095 = vmatprep.subr.bf16.mxu0 0
        %1096 = vmatpush1.bf16.msra.mxu0 0
        %1097 = vmatprep.subr.bf16.mxu0 0
        %1098 = vmatpush1.bf16.msra.mxu0 0
        %1099 = vmatprep.subr.bf16.mxu0 0
        %1100 = vmatpush1.bf16.msra.mxu0 0
        %1101 = vmatprep.subr.bf16.mxu0 0
        %1102 = vmatpush1.bf16.msra.mxu0 0
        %1103 = vmatprep.subr.bf16.mxu0 0
        %1104 = vmatpush1.bf16.msra.mxu0 0
        %1105 = vmatprep.subr.bf16.mxu0 0
        %1106 = vmatpush1.bf16.msra.mxu0 0
        %1107 = vmatprep.subr.bf16.mxu0 0
        %1108 = vmatpush1.bf16.msra.mxu0 0
        %1109 = vmatprep.subr.bf16.mxu0 0
        %1110 = vmatpush1.bf16.msra.mxu0 0
        %1111 = vmatprep.subr.bf16.mxu0 0
        %1112 = vmatpush1.bf16.msra.mxu0 0
        %1113 = vmatprep.subr.bf16.mxu0 0
        %1114 = vmatpush1.bf16.msra.mxu0 0
        %1115 = vmatprep.mubr.bf16.mxu0 0
        %1116 = vmatmul.mubr.bf16.gmra.mrb[0].mxu0 %v1081
        %v1117 = vpop.f32.mrb[0].mxu0
        %v1118 = vadd.f32 %v1067, %v1117
        %v1119 = vpop.f32.mrb[0].mxu0
        %v1120 = vpop.f32.mrb[0].mxu0
        %v1121 = vpop.f32.mrb[0].mxu0
        %1122 = vdwg.mxu0
        %1124 = vrot.lane.b32.xlu0 %v1118, 124
        %v1125 = vpop.permute.xlu0 %1124
        %1127 = vrot.lane.b32.xlu0 %v1118, 120
        %v1128 = vpop.permute.xlu0 %1127
        %1130 = vrot.lane.b32.xlu0 %v1118, 116
        %v1131 = vpop.permute.xlu0 %1130
        %1133 = vrot.lane.b32.xlu0 %v1118, 112
        %v1134 = vpop.permute.xlu0 %1133
        %1136 = vrot.lane.b32.xlu0 %v1118, 108
        %v1137 = vpop.permute.xlu0 %1136
        %1139 = vrot.lane.b32.xlu0 %v1118, 104
        %v1140 = vpop.permute.xlu0 %1139
        %1142 = vrot.lane.b32.xlu0 %v1118, 100
        %v1143 = vpop.permute.xlu0 %1142
        %v1145 = vcombine.low %v1118, %v1128
        %v1146 = vcombine.high %v1118, %v1128
        %v1148 = vunpack.c.l.s4 1983009808
        %v1149 = vunpack.c.0.s8 %v1148
        %v1150 = vlaneseq
        %v1151 = vshrl.u32 %v1150, 7
        %v1152 = vsub.s32 %v1149, %v1151
        %v1153 = vrot.slane %v1145, %v1152
        %v1155 = vunpack.c.l.s4 1983009808
        %v1156 = vunpack.c.0.s8 %v1155
        %v1157 = vlaneseq
        %v1158 = vshrl.u32 %v1157, 7
        %v1159 = vsub.s32 %v1156, %v1158
        %v1160 = vrot.slane %v1146, %v1159
        %v1161 = vcombine.low %v1125, %v1131
        %v1162 = vcombine.high %v1125, %v1131
        %v1164 = vunpack.c.l.s4 1983009808
        %v1165 = vunpack.c.0.s8 %v1164
        %v1166 = vlaneseq
        %v1167 = vshrl.u32 %v1166, 7
        %v1168 = vsub.s32 %v1165, %v1167
        %v1169 = vrot.slane %v1161, %v1168
        %v1171 = vunpack.c.l.s4 1983009808
        %v1172 = vunpack.c.0.s8 %v1171
        %v1173 = vlaneseq
        %v1174 = vshrl.u32 %v1173, 7
        %v1175 = vsub.s32 %v1172, %v1174
        %v1176 = vrot.slane %v1162, %v1175
        %v1177 = vcombine.low %v1134, %v1140
        %v1178 = vcombine.high %v1134, %v1140
        %v1180 = vunpack.c.l.s4 1983009808
        %v1181 = vunpack.c.0.s8 %v1180
        %v1182 = vlaneseq
        %v1183 = vshrl.u32 %v1182, 7
        %v1184 = vsub.s32 %v1181, %v1183
        %v1185 = vrot.slane %v1177, %v1184
        %v1187 = vunpack.c.l.s4 1983009808
        %v1188 = vunpack.c.0.s8 %v1187
        %v1189 = vlaneseq
        %v1190 = vshrl.u32 %v1189, 7
        %v1191 = vsub.s32 %v1188, %v1190
        %v1192 = vrot.slane %v1178, %v1191
        %v1193 = vcombine.low %v1137, %v1143
        %v1194 = vcombine.high %v1137, %v1143
        %v1196 = vunpack.c.l.s4 1983009808
        %v1197 = vunpack.c.0.s8 %v1196
        %v1198 = vlaneseq
        %v1199 = vshrl.u32 %v1198, 7
        %v1200 = vsub.s32 %v1197, %v1199
        %v1201 = vrot.slane %v1193, %v1200
        %v1203 = vunpack.c.l.s4 1983009808
        %v1204 = vunpack.c.0.s8 %v1203
        %v1205 = vlaneseq
        %v1206 = vshrl.u32 %v1205, 7
        %v1207 = vsub.s32 %v1204, %v1206
        %v1208 = vrot.slane %v1194, %v1207
        %v1209 = vcombine.low %v1153, %v1169
        %v1210 = vcombine.high %v1153, %v1169
        %v1212 = vunpack.c.l.s4 1934713408
        %v1213 = vunpack.c.0.s8 %v1212
        %v1214 = vlaneseq
        %v1215 = vshrl.u32 %v1214, 7
        %v1216 = vsub.s32 %v1213, %v1215
        %v1217 = vrot.slane %v1209, %v1216
        %v1219 = vunpack.c.l.s4 1934713408
        %v1220 = vunpack.c.0.s8 %v1219
        %v1221 = vlaneseq
        %v1222 = vshrl.u32 %v1221, 7
        %v1223 = vsub.s32 %v1220, %v1222
        %v1224 = vrot.slane %v1210, %v1223
        %v1225 = vcombine.low %v1160, %v1176
        %v1226 = vcombine.high %v1160, %v1176
        %v1228 = vunpack.c.l.s4 1934713408
        %v1229 = vunpack.c.0.s8 %v1228
        %v1230 = vlaneseq
        %v1231 = vshrl.u32 %v1230, 7
        %v1232 = vsub.s32 %v1229, %v1231
        %v1233 = vrot.slane %v1225, %v1232
        %v1235 = vunpack.c.l.s4 1934713408
        %v1236 = vunpack.c.0.s8 %v1235
        %v1237 = vlaneseq
        %v1238 = vshrl.u32 %v1237, 7
        %v1239 = vsub.s32 %v1236, %v1238
        %v1240 = vrot.slane %v1226, %v1239
        %v1241 = vcombine.low %v1185, %v1201
        %v1242 = vcombine.high %v1185, %v1201
        %v1244 = vunpack.c.l.s4 1934713408
        %v1245 = vunpack.c.0.s8 %v1244
        %v1246 = vlaneseq
        %v1247 = vshrl.u32 %v1246, 7
        %v1248 = vsub.s32 %v1245, %v1247
        %v1249 = vrot.slane %v1241, %v1248
        %v1251 = vunpack.c.l.s4 1934713408
        %v1252 = vunpack.c.0.s8 %v1251
        %v1253 = vlaneseq
        %v1254 = vshrl.u32 %v1253, 7
        %v1255 = vsub.s32 %v1252, %v1254
        %v1256 = vrot.slane %v1242, %v1255
        %v1257 = vcombine.low %v1192, %v1208
        %v1258 = vcombine.high %v1192, %v1208
        %v1260 = vunpack.c.l.s4 1934713408
        %v1261 = vunpack.c.0.s8 %v1260
        %v1262 = vlaneseq
        %v1263 = vshrl.u32 %v1262, 7
        %v1264 = vsub.s32 %v1261, %v1263
        %v1265 = vrot.slane %v1257, %v1264
        %v1267 = vunpack.c.l.s4 1934713408
        %v1268 = vunpack.c.0.s8 %v1267
        %v1269 = vlaneseq
        %v1270 = vshrl.u32 %v1269, 7
        %v1271 = vsub.s32 %v1268, %v1270
        %v1272 = vrot.slane %v1258, %v1271
        %v1273 = vcombine.low %v1217, %v1249
        %v1274 = vcombine.high %v1217, %v1249
        %v1275 = vcombine.low %v1224, %v1256
        %v1276 = vcombine.high %v1224, %v1256
        %v1277 = vcombine.low %v1233, %v1265
        %v1278 = vcombine.high %v1233, %v1265
        %v1279 = vcombine.low %v1240, %v1272
        %v1280 = vcombine.high %v1240, %v1272
        %v1281 = vcombine.low %v1273, %v1275
        %v1282 = vcombine.high %v1273, %v1275
        %v1284 = vunpack.c.l.s4 1983009808
        %v1285 = vunpack.c.0.s8 %v1284
        %v1286 = vlaneseq
        %v1287 = vshrl.u32 %v1286, 7
        %v1288 = vsub.s32 %v1285, %v1287
        %v1289 = vrot.slane %v1281, %v1288
        %v1291 = vunpack.c.l.s4 1983009808
        %v1292 = vunpack.c.0.s8 %v1291
        %v1293 = vlaneseq
        %v1294 = vshrl.u32 %v1293, 7
        %v1295 = vsub.s32 %v1292, %v1294
        %v1296 = vrot.slane %v1282, %v1295
        %v1297 = vcombine.low %v1274, %v1276
        %v1298 = vcombine.high %v1274, %v1276
        %v1300 = vunpack.c.l.s4 1983009808
        %v1301 = vunpack.c.0.s8 %v1300
        %v1302 = vlaneseq
        %v1303 = vshrl.u32 %v1302, 7
        %v1304 = vsub.s32 %v1301, %v1303
        %v1305 = vrot.slane %v1297, %v1304
        %v1307 = vunpack.c.l.s4 1983009808
        %v1308 = vunpack.c.0.s8 %v1307
        %v1309 = vlaneseq
        %v1310 = vshrl.u32 %v1309, 7
        %v1311 = vsub.s32 %v1308, %v1310
        %v1312 = vrot.slane %v1298, %v1311
        %v1313 = vcombine.low %v1277, %v1279
        %v1314 = vcombine.high %v1277, %v1279
        %v1316 = vunpack.c.l.s4 1983009808
        %v1317 = vunpack.c.0.s8 %v1316
        %v1318 = vlaneseq
        %v1319 = vshrl.u32 %v1318, 7
        %v1320 = vsub.s32 %v1317, %v1319
        %v1321 = vrot.slane %v1313, %v1320
        %v1323 = vunpack.c.l.s4 1983009808
        %v1324 = vunpack.c.0.s8 %v1323
        %v1325 = vlaneseq
        %v1326 = vshrl.u32 %v1325, 7
        %v1327 = vsub.s32 %v1324, %v1326
        %v1328 = vrot.slane %v1314, %v1327
        %v1329 = vcombine.low %v1278, %v1280
        %v1330 = vcombine.high %v1278, %v1280
        %v1332 = vunpack.c.l.s4 1983009808
        %v1333 = vunpack.c.0.s8 %v1332
        %v1334 = vlaneseq
        %v1335 = vshrl.u32 %v1334, 7
        %v1336 = vsub.s32 %v1333, %v1335
        %v1337 = vrot.slane %v1329, %v1336
        %v1339 = vunpack.c.l.s4 1983009808
        %v1340 = vunpack.c.0.s8 %v1339
        %v1341 = vlaneseq
        %v1342 = vshrl.u32 %v1341, 7
        %v1343 = vsub.s32 %v1340, %v1342
        %v1344 = vrot.slane %v1330, %v1343
        %v1345 = vcombine.low %v1289, %v1305
        %v1346 = vcombine.high %v1289, %v1305
        %v1348 = vunpack.c.l.s4 1934713408
        %v1349 = vunpack.c.0.s8 %v1348
        %v1350 = vlaneseq
        %v1351 = vshrl.u32 %v1350, 7
        %v1352 = vsub.s32 %v1349, %v1351
        %v1353 = vrot.slane %v1345, %v1352
        %v1355 = vunpack.c.l.s4 1934713408
        %v1356 = vunpack.c.0.s8 %v1355
        %v1357 = vlaneseq
        %v1358 = vshrl.u32 %v1357, 7
        %v1359 = vsub.s32 %v1356, %v1358
        %v1360 = vrot.slane %v1346, %v1359
        %v1361 = vcombine.low %v1296, %v1312
        %v1362 = vcombine.high %v1296, %v1312
        %v1364 = vunpack.c.l.s4 1934713408
        %v1365 = vunpack.c.0.s8 %v1364
        %v1366 = vlaneseq
        %v1367 = vshrl.u32 %v1366, 7
        %v1368 = vsub.s32 %v1365, %v1367
        %v1369 = vrot.slane %v1361, %v1368
        %v1371 = vunpack.c.l.s4 1934713408
        %v1372 = vunpack.c.0.s8 %v1371
        %v1373 = vlaneseq
        %v1374 = vshrl.u32 %v1373, 7
        %v1375 = vsub.s32 %v1372, %v1374
        %v1376 = vrot.slane %v1362, %v1375
        %v1377 = vcombine.low %v1321, %v1337
        %v1378 = vcombine.high %v1321, %v1337
        %v1380 = vunpack.c.l.s4 1934713408
        %v1381 = vunpack.c.0.s8 %v1380
        %v1382 = vlaneseq
        %v1383 = vshrl.u32 %v1382, 7
        %v1384 = vsub.s32 %v1381, %v1383
        %v1385 = vrot.slane %v1377, %v1384
        %v1387 = vunpack.c.l.s4 1934713408
        %v1388 = vunpack.c.0.s8 %v1387
        %v1389 = vlaneseq
        %v1390 = vshrl.u32 %v1389, 7
        %v1391 = vsub.s32 %v1388, %v1390
        %v1392 = vrot.slane %v1378, %v1391
        %v1393 = vcombine.low %v1328, %v1344
        %v1394 = vcombine.high %v1328, %v1344
        %v1396 = vunpack.c.l.s4 1934713408
        %v1397 = vunpack.c.0.s8 %v1396
        %v1398 = vlaneseq
        %v1399 = vshrl.u32 %v1398, 7
        %v1400 = vsub.s32 %v1397, %v1399
        %v1401 = vrot.slane %v1393, %v1400
        %v1403 = vunpack.c.l.s4 1934713408
        %v1404 = vunpack.c.0.s8 %v1403
        %v1405 = vlaneseq
        %v1406 = vshrl.u32 %v1405, 7
        %v1407 = vsub.s32 %v1404, %v1406
        %v1408 = vrot.slane %v1394, %v1407
        %v1409 = vcombine.low %v1353, %v1385
        %v1410 = vcombine.high %v1353, %v1385
        %v1411 = vcombine.low %v1360, %v1392
        %v1412 = vcombine.high %v1360, %v1392
        %v1413 = vcombine.low %v1369, %v1401
        %v1414 = vcombine.high %v1369, %v1401
        %v1415 = vcombine.low %v1376, %v1408
        %v1416 = vcombine.high %v1376, %v1408
        %v1417 = vpack.c.bf16 %v1409, %v1409
        %v1418 = vpack.c.bf16 %v1410, %v1410
        %v1419 = vpack.c.bf16 %v1411, %v1411
        %v1420 = vpack.c.bf16 %v1412, %v1412
        %v1421 = vpack.c.bf16 %v1413, %v1413
        %v1422 = vpack.c.bf16 %v1414, %v1414
        %v1423 = vpack.c.bf16 %v1415, %v1415
        %v1424 = vpack.c.bf16 %v1416, %v1416
        %vm1425 = vcmask 31744
        %v1427 = vsel %vm1425, %v1417, 0
        %v1430 = vsel %vm1425, %v1018, 0
        %1432 = vmatprep.subr.bf16.mxu0 0
        %1433 = vmatpush1.bf16.xpose.msra.mxu0 %v1430
        %1434 = vmatprep.subr.bf16.mxu0 0
        %1435 = vmatpush1.bf16.xpose.msra.mxu0 0
        %1436 = vmatprep.subr.bf16.mxu0 0
        %1437 = vmatpush1.bf16.xpose.msra.mxu0 0
        %1438 = vmatprep.subr.bf16.mxu0 0
        %1439 = vmatpush1.bf16.xpose.msra.mxu0 0
        %1440 = vmatprep.subr.bf16.mxu0 0
        %1441 = vmatpush1.bf16.xpose.msra.mxu0 0
        %1442 = vmatprep.subr.bf16.mxu0 0
        %1443 = vmatpush1.bf16.xpose.msra.mxu0 0
        %1444 = vmatprep.subr.bf16.mxu0 0
        %1445 = vmatpush1.bf16.xpose.msra.mxu0 0
        %1446 = vmatprep.subr.bf16.mxu0 0
        %1447 = vmatpush1.bf16.xpose.msra.mxu0 0
        %1448 = vmatprep.subr.bf16.mxu0 0
        %1449 = vmatpush1.bf16.xpose.msra.mxu0 0
        %1450 = vmatprep.subr.bf16.mxu0 0
        %1451 = vmatpush1.bf16.xpose.msra.mxu0 0
        %1452 = vmatprep.subr.bf16.mxu0 0
        %1453 = vmatpush1.bf16.xpose.msra.mxu0 0
        %1454 = vmatprep.subr.bf16.mxu0 0
        %1455 = vmatpush1.bf16.xpose.msra.mxu0 0
        %1456 = vmatprep.subr.bf16.mxu0 0
        %1457 = vmatpush1.bf16.xpose.msra.mxu0 0
        %1458 = vmatprep.subr.bf16.mxu0 0
        %1459 = vmatpush1.bf16.xpose.msra.mxu0 0
        %1460 = vmatprep.subr.bf16.mxu0 0
        %1461 = vmatpush1.bf16.xpose.msra.mxu0 0
        %1462 = vmatprep.subr.bf16.mxu0 0
        %1463 = vmatpush1.bf16.xpose.msra.mxu0 0
        %1464 = vmatprep.mubr.bf16.mxu0 0
        %1465 = vmatmul.mubr.bf16.gmra.mrb[0].mxu0 %v1427
        %v1466 = vpop.f32.mrb[0].mxu0
        %v1467 = vadd.f32 0.0, %v1466
        %v1468 = vpop.f32.mrb[0].mxu0
        %v1469 = vpop.f32.mrb[0].mxu0
        %v1470 = vpop.f32.mrb[0].mxu0
        %1471 = vdwg.mxu0
        %v1473 = vsel %vm1425, %v1418, 0
        %v1476 = vsel %vm1425, %v1019, 0
        %1478 = vmatprep.subr.bf16.mxu0 0
        %1479 = vmatpush1.bf16.xpose.msra.mxu0 %v1476
        %1480 = vmatprep.subr.bf16.mxu0 0
        %1481 = vmatpush1.bf16.xpose.msra.mxu0 0
        %1482 = vmatprep.subr.bf16.mxu0 0
        %1483 = vmatpush1.bf16.xpose.msra.mxu0 0
        %1484 = vmatprep.subr.bf16.mxu0 0
        %1485 = vmatpush1.bf16.xpose.msra.mxu0 0
        %1486 = vmatprep.subr.bf16.mxu0 0
        %1487 = vmatpush1.bf16.xpose.msra.mxu0 0
        %1488 = vmatprep.subr.bf16.mxu0 0
        %1489 = vmatpush1.bf16.xpose.msra.mxu0 0
        %1490 = vmatprep.subr.bf16.mxu0 0
        %1491 = vmatpush1.bf16.xpose.msra.mxu0 0
        %1492 = vmatprep.subr.bf16.mxu0 0
        %1493 = vmatpush1.bf16.xpose.msra.mxu0 0
        %1494 = vmatprep.subr.bf16.mxu0 0
        %1495 = vmatpush1.bf16.xpose.msra.mxu0 0
        %1496 = vmatprep.subr.bf16.mxu0 0
        %1497 = vmatpush1.bf16.xpose.msra.mxu0 0
        %1498 = vmatprep.subr.bf16.mxu0 0
        %1499 = vmatpush1.bf16.xpose.msra.mxu0 0
        %1500 = vmatprep.subr.bf16.mxu0 0
        %1501 = vmatpush1.bf16.xpose.msra.mxu0 0
        %1502 = vmatprep.subr.bf16.mxu0 0
        %1503 = vmatpush1.bf16.xpose.msra.mxu0 0
        %1504 = vmatprep.subr.bf16.mxu0 0
        %1505 = vmatpush1.bf16.xpose.msra.mxu0 0
        %1506 = vmatprep.subr.bf16.mxu0 0
        %1507 = vmatpush1.bf16.xpose.msra.mxu0 0
        %1508 = vmatprep.subr.bf16.mxu0 0
        %1509 = vmatpush1.bf16.xpose.msra.mxu0 0
        %1510 = vmatprep.mubr.bf16.mxu0 0
        %1511 = vmatmul.mubr.bf16.gmra.mrb[0].mxu0 %v1473
        %v1512 = vpop.f32.mrb[0].mxu0
        %v1513 = vadd.f32 0.0, %v1512
        %v1514 = vpop.f32.mrb[0].mxu0
        %v1515 = vpop.f32.mrb[0].mxu0
        %v1516 = vpop.f32.mrb[0].mxu0
        %1517 = vdwg.mxu0
        %v1519 = vsel %vm1425, %v1419, 0
        %v1522 = vsel %vm1425, %v1020, 0
        %1524 = vmatprep.subr.bf16.mxu0 0
        %1525 = vmatpush1.bf16.xpose.msra.mxu0 %v1522
        %1526 = vmatprep.subr.bf16.mxu0 0
        %1527 = vmatpush1.bf16.xpose.msra.mxu0 0
        %1528 = vmatprep.subr.bf16.mxu0 0
        %1529 = vmatpush1.bf16.xpose.msra.mxu0 0
        %1530 = vmatprep.subr.bf16.mxu0 0
        %1531 = vmatpush1.bf16.xpose.msra.mxu0 0
        %1532 = vmatprep.subr.bf16.mxu0 0
        %1533 = vmatpush1.bf16.xpose.msra.mxu0 0
        %1534 = vmatprep.subr.bf16.mxu0 0
        %1535 = vmatpush1.bf16.xpose.msra.mxu0 0
        %1536 = vmatprep.subr.bf16.mxu0 0
        %1537 = vmatpush1.bf16.xpose.msra.mxu0 0
        %1538 = vmatprep.subr.bf16.mxu0 0
        %1539 = vmatpush1.bf16.xpose.msra.mxu0 0
        %1540 = vmatprep.subr.bf16.mxu0 0
        %1541 = vmatpush1.bf16.xpose.msra.mxu0 0
        %1542 = vmatprep.subr.bf16.mxu0 0
        %1543 = vmatpush1.bf16.xpose.msra.mxu0 0
        %1544 = vmatprep.subr.bf16.mxu0 0
        %1545 = vmatpush1.bf16.xpose.msra.mxu0 0
        %1546 = vmatprep.subr.bf16.mxu0 0
        %1547 = vmatpush1.bf16.xpose.msra.mxu0 0
        %1548 = vmatprep.subr.bf16.mxu0 0
        %1549 = vmatpush1.bf16.xpose.msra.mxu0 0
        %1550 = vmatprep.subr.bf16.mxu0 0
        %1551 = vmatpush1.bf16.xpose.msra.mxu0 0
        %1552 = vmatprep.subr.bf16.mxu0 0
        %1553 = vmatpush1.bf16.xpose.msra.mxu0 0
        %1554 = vmatprep.subr.bf16.mxu0 0
        %1555 = vmatpush1.bf16.xpose.msra.mxu0 0
        %1556 = vmatprep.mubr.bf16.mxu0 0
        %1557 = vmatmul.mubr.bf16.gmra.mrb[0].mxu0 %v1519
        %v1558 = vpop.f32.mrb[0].mxu0
        %v1559 = vadd.f32 0.0, %v1558
        %v1560 = vpop.f32.mrb[0].mxu0
        %v1561 = vpop.f32.mrb[0].mxu0
        %v1562 = vpop.f32.mrb[0].mxu0
        %1563 = vdwg.mxu0
        %v1565 = vsel %vm1425, %v1420, 0
        %v1568 = vsel %vm1425, %v1021, 0
        %1570 = vmatprep.subr.bf16.mxu0 0
        %1571 = vmatpush1.bf16.xpose.msra.mxu0 %v1568
        %1572 = vmatprep.subr.bf16.mxu0 0
        %1573 = vmatpush1.bf16.xpose.msra.mxu0 0
        %1574 = vmatprep.subr.bf16.mxu0 0
        %1575 = vmatpush1.bf16.xpose.msra.mxu0 0
        %1576 = vmatprep.subr.bf16.mxu0 0
        %1577 = vmatpush1.bf16.xpose.msra.mxu0 0
        %1578 = vmatprep.subr.bf16.mxu0 0
        %1579 = vmatpush1.bf16.xpose.msra.mxu0 0
        %1580 = vmatprep.subr.bf16.mxu0 0
        %1581 = vmatpush1.bf16.xpose.msra.mxu0 0
        %1582 = vmatprep.subr.bf16.mxu0 0
        %1583 = vmatpush1.bf16.xpose.msra.mxu0 0
        %1584 = vmatprep.subr.bf16.mxu0 0
        %1585 = vmatpush1.bf16.xpose.msra.mxu0 0
        %1586 = vmatprep.subr.bf16.mxu0 0
        %1587 = vmatpush1.bf16.xpose.msra.mxu0 0
        %1588 = vmatprep.subr.bf16.mxu0 0
        %1589 = vmatpush1.bf16.xpose.msra.mxu0 0
        %1590 = vmatprep.subr.bf16.mxu0 0
        %1591 = vmatpush1.bf16.xpose.msra.mxu0 0
        %1592 = vmatprep.subr.bf16.mxu0 0
        %1593 = vmatpush1.bf16.xpose.msra.mxu0 0
        %1594 = vmatprep.subr.bf16.mxu0 0
        %1595 = vmatpush1.bf16.xpose.msra.mxu0 0
        %1596 = vmatprep.subr.bf16.mxu0 0
        %1597 = vmatpush1.bf16.xpose.msra.mxu0 0
        %1598 = vmatprep.subr.bf16.mxu0 0
        %1599 = vmatpush1.bf16.xpose.msra.mxu0 0
        %1600 = vmatprep.subr.bf16.mxu0 0
        %1601 = vmatpush1.bf16.xpose.msra.mxu0 0
        %1602 = vmatprep.mubr.bf16.mxu0 0
        %1603 = vmatmul.mubr.bf16.gmra.mrb[0].mxu0 %v1565
        %v1604 = vpop.f32.mrb[0].mxu0
        %v1605 = vadd.f32 0.0, %v1604
        %v1606 = vpop.f32.mrb[0].mxu0
        %v1607 = vpop.f32.mrb[0].mxu0
        %v1608 = vpop.f32.mrb[0].mxu0
        %1609 = vdwg.mxu0
        %v1611 = vsel %vm1425, %v1421, 0
        %v1614 = vsel %vm1425, %v1022, 0
        %1616 = vmatprep.subr.bf16.mxu0 0
        %1617 = vmatpush1.bf16.xpose.msra.mxu0 %v1614
        %1618 = vmatprep.subr.bf16.mxu0 0
        %1619 = vmatpush1.bf16.xpose.msra.mxu0 0
        %1620 = vmatprep.subr.bf16.mxu0 0
        %1621 = vmatpush1.bf16.xpose.msra.mxu0 0
        %1622 = vmatprep.subr.bf16.mxu0 0
        %1623 = vmatpush1.bf16.xpose.msra.mxu0 0
        %1624 = vmatprep.subr.bf16.mxu0 0
        %1625 = vmatpush1.bf16.xpose.msra.mxu0 0
        %1626 = vmatprep.subr.bf16.mxu0 0
        %1627 = vmatpush1.bf16.xpose.msra.mxu0 0
        %1628 = vmatprep.subr.bf16.mxu0 0
        %1629 = vmatpush1.bf16.xpose.msra.mxu0 0
        %1630 = vmatprep.subr.bf16.mxu0 0
        %1631 = vmatpush1.bf16.xpose.msra.mxu0 0
        %1632 = vmatprep.subr.bf16.mxu0 0
        %1633 = vmatpush1.bf16.xpose.msra.mxu0 0
        %1634 = vmatprep.subr.bf16.mxu0 0
        %1635 = vmatpush1.bf16.xpose.msra.mxu0 0
        %1636 = vmatprep.subr.bf16.mxu0 0
        %1637 = vmatpush1.bf16.xpose.msra.mxu0 0
        %1638 = vmatprep.subr.bf16.mxu0 0
        %1639 = vmatpush1.bf16.xpose.msra.mxu0 0
        %1640 = vmatprep.subr.bf16.mxu0 0
        %1641 = vmatpush1.bf16.xpose.msra.mxu0 0
        %1642 = vmatprep.subr.bf16.mxu0 0
        %1643 = vmatpush1.bf16.xpose.msra.mxu0 0
        %1644 = vmatprep.subr.bf16.mxu0 0
        %1645 = vmatpush1.bf16.xpose.msra.mxu0 0
        %1646 = vmatprep.subr.bf16.mxu0 0
        %1647 = vmatpush1.bf16.xpose.msra.mxu0 0
        %1648 = vmatprep.mubr.bf16.mxu0 0
        %1649 = vmatmul.mubr.bf16.gmra.mrb[0].mxu0 %v1611
        %v1650 = vpop.f32.mrb[0].mxu0
        %v1651 = vadd.f32 0.0, %v1650
        %v1652 = vpop.f32.mrb[0].mxu0
        %v1653 = vpop.f32.mrb[0].mxu0
        %v1654 = vpop.f32.mrb[0].mxu0
        %1655 = vdwg.mxu0
        %v1657 = vsel %vm1425, %v1422, 0
        %v1660 = vsel %vm1425, %v1023, 0
        %1662 = vmatprep.subr.bf16.mxu0 0
        %1663 = vmatpush1.bf16.xpose.msra.mxu0 %v1660
        %1664 = vmatprep.subr.bf16.mxu0 0
        %1665 = vmatpush1.bf16.xpose.msra.mxu0 0
        %1666 = vmatprep.subr.bf16.mxu0 0
        %1667 = vmatpush1.bf16.xpose.msra.mxu0 0
        %1668 = vmatprep.subr.bf16.mxu0 0
        %1669 = vmatpush1.bf16.xpose.msra.mxu0 0
        %1670 = vmatprep.subr.bf16.mxu0 0
        %1671 = vmatpush1.bf16.xpose.msra.mxu0 0
        %1672 = vmatprep.subr.bf16.mxu0 0
        %1673 = vmatpush1.bf16.xpose.msra.mxu0 0
        %1674 = vmatprep.subr.bf16.mxu0 0
        %1675 = vmatpush1.bf16.xpose.msra.mxu0 0
        %1676 = vmatprep.subr.bf16.mxu0 0
        %1677 = vmatpush1.bf16.xpose.msra.mxu0 0
        %1678 = vmatprep.subr.bf16.mxu0 0
        %1679 = vmatpush1.bf16.xpose.msra.mxu0 0
        %1680 = vmatprep.subr.bf16.mxu0 0
        %1681 = vmatpush1.bf16.xpose.msra.mxu0 0
        %1682 = vmatprep.subr.bf16.mxu0 0
        %1683 = vmatpush1.bf16.xpose.msra.mxu0 0
        %1684 = vmatprep.subr.bf16.mxu0 0
        %1685 = vmatpush1.bf16.xpose.msra.mxu0 0
        %1686 = vmatprep.subr.bf16.mxu0 0
        %1687 = vmatpush1.bf16.xpose.msra.mxu0 0
        %1688 = vmatprep.subr.bf16.mxu0 0
        %1689 = vmatpush1.bf16.xpose.msra.mxu0 0
        %1690 = vmatprep.subr.bf16.mxu0 0
        %1691 = vmatpush1.bf16.xpose.msra.mxu0 0
        %1692 = vmatprep.subr.bf16.mxu0 0
        %1693 = vmatpush1.bf16.xpose.msra.mxu0 0
        %1694 = vmatprep.mubr.bf16.mxu0 0
        %1695 = vmatmul.mubr.bf16.gmra.mrb[0].mxu0 %v1657
        %v1696 = vpop.f32.mrb[0].mxu0
        %v1697 = vadd.f32 0.0, %v1696
        %v1698 = vpop.f32.mrb[0].mxu0
        %v1699 = vpop.f32.mrb[0].mxu0
        %v1700 = vpop.f32.mrb[0].mxu0
        %1701 = vdwg.mxu0
        %v1703 = vsel %vm1425, %v1423, 0
        %v1706 = vsel %vm1425, %v1024, 0
        %1708 = vmatprep.subr.bf16.mxu0 0
        %1709 = vmatpush1.bf16.xpose.msra.mxu0 %v1706
        %1710 = vmatprep.subr.bf16.mxu0 0
        %1711 = vmatpush1.bf16.xpose.msra.mxu0 0
        %1712 = vmatprep.subr.bf16.mxu0 0
        %1713 = vmatpush1.bf16.xpose.msra.mxu0 0
        %1714 = vmatprep.subr.bf16.mxu0 0
        %1715 = vmatpush1.bf16.xpose.msra.mxu0 0
        %1716 = vmatprep.subr.bf16.mxu0 0
        %1717 = vmatpush1.bf16.xpose.msra.mxu0 0
        %1718 = vmatprep.subr.bf16.mxu0 0
        %1719 = vmatpush1.bf16.xpose.msra.mxu0 0
        %1720 = vmatprep.subr.bf16.mxu0 0
        %1721 = vmatpush1.bf16.xpose.msra.mxu0 0
        %1722 = vmatprep.subr.bf16.mxu0 0
        %1723 = vmatpush1.bf16.xpose.msra.mxu0 0
        %1724 = vmatprep.subr.bf16.mxu0 0
        %1725 = vmatpush1.bf16.xpose.msra.mxu0 0
        %1726 = vmatprep.subr.bf16.mxu0 0
        %1727 = vmatpush1.bf16.xpose.msra.mxu0 0
        %1728 = vmatprep.subr.bf16.mxu0 0
        %1729 = vmatpush1.bf16.xpose.msra.mxu0 0
        %1730 = vmatprep.subr.bf16.mxu0 0
        %1731 = vmatpush1.bf16.xpose.msra.mxu0 0
        %1732 = vmatprep.subr.bf16.mxu0 0
        %1733 = vmatpush1.bf16.xpose.msra.mxu0 0
        %1734 = vmatprep.subr.bf16.mxu0 0
        %1735 = vmatpush1.bf16.xpose.msra.mxu0 0
        %1736 = vmatprep.subr.bf16.mxu0 0
        %1737 = vmatpush1.bf16.xpose.msra.mxu0 0
        %1738 = vmatprep.subr.bf16.mxu0 0
        %1739 = vmatpush1.bf16.xpose.msra.mxu0 0
        %1740 = vmatprep.mubr.bf16.mxu0 0
        %1741 = vmatmul.mubr.bf16.gmra.mrb[0].mxu0 %v1703
        %v1742 = vpop.f32.mrb[0].mxu0
        %v1743 = vadd.f32 0.0, %v1742
        %v1744 = vpop.f32.mrb[0].mxu0
        %v1745 = vpop.f32.mrb[0].mxu0
        %v1746 = vpop.f32.mrb[0].mxu0
        %1747 = vdwg.mxu0
        %v1749 = vsel %vm1425, %v1424, 0
        %v1752 = vsel %vm1425, %v1025, 0
        %1754 = vmatprep.subr.bf16.mxu0 0
        %1755 = vmatpush1.bf16.xpose.msra.mxu0 %v1752
        %1756 = vmatprep.subr.bf16.mxu0 0
        %1757 = vmatpush1.bf16.xpose.msra.mxu0 0
        %1758 = vmatprep.subr.bf16.mxu0 0
        %1759 = vmatpush1.bf16.xpose.msra.mxu0 0
        %1760 = vmatprep.subr.bf16.mxu0 0
        %1761 = vmatpush1.bf16.xpose.msra.mxu0 0
        %1762 = vmatprep.subr.bf16.mxu0 0
        %1763 = vmatpush1.bf16.xpose.msra.mxu0 0
        %1764 = vmatprep.subr.bf16.mxu0 0
        %1765 = vmatpush1.bf16.xpose.msra.mxu0 0
        %1766 = vmatprep.subr.bf16.mxu0 0
        %1767 = vmatpush1.bf16.xpose.msra.mxu0 0
        %1768 = vmatprep.subr.bf16.mxu0 0
        %1769 = vmatpush1.bf16.xpose.msra.mxu0 0
        %1770 = vmatprep.subr.bf16.mxu0 0
        %1771 = vmatpush1.bf16.xpose.msra.mxu0 0
        %1772 = vmatprep.subr.bf16.mxu0 0
        %1773 = vmatpush1.bf16.xpose.msra.mxu0 0
        %1774 = vmatprep.subr.bf16.mxu0 0
        %1775 = vmatpush1.bf16.xpose.msra.mxu0 0
        %1776 = vmatprep.subr.bf16.mxu0 0
        %1777 = vmatpush1.bf16.xpose.msra.mxu0 0
        %1778 = vmatprep.subr.bf16.mxu0 0
        %1779 = vmatpush1.bf16.xpose.msra.mxu0 0
        %1780 = vmatprep.subr.bf16.mxu0 0
        %1781 = vmatpush1.bf16.xpose.msra.mxu0 0
        %1782 = vmatprep.subr.bf16.mxu0 0
        %1783 = vmatpush1.bf16.xpose.msra.mxu0 0
        %1784 = vmatprep.subr.bf16.mxu0 0
        %1785 = vmatpush1.bf16.xpose.msra.mxu0 0
        %1786 = vmatprep.mubr.bf16.mxu0 0
        %1787 = vmatmul.mubr.bf16.gmra.mrb[0].mxu0 %v1749
        %v1788 = vpop.f32.mrb[0].mxu0
        %v1789 = vadd.f32 0.0, %v1788
        %v1790 = vpop.f32.mrb[0].mxu0
        %v1791 = vpop.f32.mrb[0].mxu0
        %v1792 = vpop.f32.mrb[0].mxu0
        %1793 = vdwg.mxu0
        %vm1794 = vcmask 64512
        %v1795 = vsel %vm1794, %v1467, -inf
        %1796 = vmax.xlane.f32.xlu0 %v1795
        %v1797 = vpop.xlane.xlu0 %1796
        %v1798 = vsel %vm1794, %v1513, -inf
        %1799 = vmax.xlane.f32.xlu0 %v1798
        %v1800 = vpop.xlane.xlu0 %1799
        %v1801 = vsel %vm1794, %v1559, -inf
        %1802 = vmax.xlane.f32.xlu0 %v1801
        %v1803 = vpop.xlane.xlu0 %1802
        %v1804 = vsel %vm1794, %v1605, -inf
        %1805 = vmax.xlane.f32.xlu0 %v1804
        %v1806 = vpop.xlane.xlu0 %1805
        %v1807 = vsel %vm1794, %v1651, -inf
        %1808 = vmax.xlane.f32.xlu0 %v1807
        %v1809 = vpop.xlane.xlu0 %1808
        %v1810 = vsel %vm1794, %v1697, -inf
        %1811 = vmax.xlane.f32.xlu0 %v1810
        %v1812 = vpop.xlane.xlu0 %1811
        %v1813 = vsel %vm1794, %v1743, -inf
        %1814 = vmax.xlane.f32.xlu0 %v1813
        %v1815 = vpop.xlane.xlu0 %1814
        %v1816 = vsel %vm1794, %v1789, -inf
        %1817 = vmax.xlane.f32.xlu0 %v1816
        %v1818 = vpop.xlane.xlu0 %1817
        %v1819 = vsub.f32 %v1467, %v1797
        %v1820 = vsub.f32 %v1513, %v1800
        %v1821 = vsub.f32 %v1559, %v1803
        %v1822 = vsub.f32 %v1605, %v1806
        %v1823 = vsub.f32 %v1651, %v1809
        %v1824 = vsub.f32 %v1697, %v1812
        %v1825 = vsub.f32 %v1743, %v1815
        %v1826 = vsub.f32 %v1789, %v1818
        %v1827 = vmul.f32 %v1819, 1.442695
        %v1828 = vpow.pop %v1827
        %v1829 = vmul.f32 %v1820, 1.442695
        %v1830 = vpow.pop %v1829
        %v1831 = vmul.f32 %v1821, 1.442695
        %v1832 = vpow.pop %v1831
        %v1833 = vmul.f32 %v1822, 1.442695
        %v1834 = vpow.pop %v1833
        %v1835 = vmul.f32 %v1823, 1.442695
        %v1836 = vpow.pop %v1835
        %v1837 = vmul.f32 %v1824, 1.442695
        %v1838 = vpow.pop %v1837
        %v1839 = vmul.f32 %v1825, 1.442695
        %v1840 = vpow.pop %v1839
        %v1841 = vmul.f32 %v1826, 1.442695
        %v1842 = vpow.pop %v1841
        %v1843 = vsel %vm1794, %v1828, 0.0
        %1844 = vadd.xlane.f32.xlu0 %v1843
        %v1845 = vpop.xlane.xlu0 %1844
        %v1846 = vsel %vm1794, %v1830, 0.0
        %1847 = vadd.xlane.f32.xlu0 %v1846
        %v1848 = vpop.xlane.xlu0 %1847
        %v1849 = vsel %vm1794, %v1832, 0.0
        %1850 = vadd.xlane.f32.xlu0 %v1849
        %v1851 = vpop.xlane.xlu0 %1850
        %v1852 = vsel %vm1794, %v1834, 0.0
        %1853 = vadd.xlane.f32.xlu0 %v1852
        %v1854 = vpop.xlane.xlu0 %1853
        %v1855 = vsel %vm1794, %v1836, 0.0
        %1856 = vadd.xlane.f32.xlu0 %v1855
        %v1857 = vpop.xlane.xlu0 %1856
        %v1858 = vsel %vm1794, %v1838, 0.0
        %1859 = vadd.xlane.f32.xlu0 %v1858
        %v1860 = vpop.xlane.xlu0 %1859
        %v1861 = vsel %vm1794, %v1840, 0.0
        %1862 = vadd.xlane.f32.xlu0 %v1861
        %v1863 = vpop.xlane.xlu0 %1862
        %v1864 = vsel %vm1794, %v1842, 0.0
        %1865 = vadd.xlane.f32.xlu0 %v1864
        %v1866 = vpop.xlane.xlu0 %1865
        %v1867 = vpack.c.bf16 %v1828, %v1828
        %v1868 = vpack.c.bf16 %v1830, %v1830
        %v1869 = vpack.c.bf16 %v1832, %v1832
        %v1870 = vpack.c.bf16 %v1834, %v1834
        %v1871 = vpack.c.bf16 %v1836, %v1836
        %v1872 = vpack.c.bf16 %v1838, %v1838
        %v1873 = vpack.c.bf16 %v1840, %v1840
        %v1874 = vpack.c.bf16 %v1842, %v1842
        %v1876 = vsel %vm1794, %v1867, 0
        %vm1878 = vcmask 1043456
        %v1880 = vsel %vm1878, %v1026, 0
        %1882 = vmatprep.subr.bf16.mxu0 0
        %1883 = vmatpush1.bf16.msra.mxu0 %v1880
        %1884 = vmatprep.subr.bf16.mxu0 0
        %1885 = vmatpush1.bf16.msra.mxu0 0
        %1886 = vmatprep.subr.bf16.mxu0 0
        %1887 = vmatpush1.bf16.msra.mxu0 0
        %1888 = vmatprep.subr.bf16.mxu0 0
        %1889 = vmatpush1.bf16.msra.mxu0 0
        %1890 = vmatprep.subr.bf16.mxu0 0
        %1891 = vmatpush1.bf16.msra.mxu0 0
        %1892 = vmatprep.subr.bf16.mxu0 0
        %1893 = vmatpush1.bf16.msra.mxu0 0
        %1894 = vmatprep.subr.bf16.mxu0 0
        %1895 = vmatpush1.bf16.msra.mxu0 0
        %1896 = vmatprep.subr.bf16.mxu0 0
        %1897 = vmatpush1.bf16.msra.mxu0 0
        %1898 = vmatprep.subr.bf16.mxu0 0
        %1899 = vmatpush1.bf16.msra.mxu0 0
        %1900 = vmatprep.subr.bf16.mxu0 0
        %1901 = vmatpush1.bf16.msra.mxu0 0
        %1902 = vmatprep.subr.bf16.mxu0 0
        %1903 = vmatpush1.bf16.msra.mxu0 0
        %1904 = vmatprep.subr.bf16.mxu0 0
        %1905 = vmatpush1.bf16.msra.mxu0 0
        %1906 = vmatprep.subr.bf16.mxu0 0
        %1907 = vmatpush1.bf16.msra.mxu0 0
        %1908 = vmatprep.subr.bf16.mxu0 0
        %1909 = vmatpush1.bf16.msra.mxu0 0
        %1910 = vmatprep.subr.bf16.mxu0 0
        %1911 = vmatpush1.bf16.msra.mxu0 0
        %1912 = vmatprep.subr.bf16.mxu0 0
        %1913 = vmatpush1.bf16.msra.mxu0 0
        %1914 = vmatprep.mubr.bf16.mxu0 0
        %1915 = vmatmul.mubr.bf16.gmra.mrb[0].mxu0 %v1876
        %v1916 = vpop.f32.mrb[0].mxu0
        %v1917 = vadd.f32 0.0, %v1916
        %v1918 = vpop.f32.mrb[0].mxu0
        %v1919 = vpop.f32.mrb[0].mxu0
        %v1920 = vpop.f32.mrb[0].mxu0
        %1921 = vdwg.mxu0
        %v1923 = vsel %vm1794, %v1868, 0
        %v1926 = vsel %vm1878, %v1027, 0
        %1928 = vmatprep.subr.bf16.mxu0 0
        %1929 = vmatpush1.bf16.msra.mxu0 %v1926
        %1930 = vmatprep.subr.bf16.mxu0 0
        %1931 = vmatpush1.bf16.msra.mxu0 0
        %1932 = vmatprep.subr.bf16.mxu0 0
        %1933 = vmatpush1.bf16.msra.mxu0 0
        %1934 = vmatprep.subr.bf16.mxu0 0
        %1935 = vmatpush1.bf16.msra.mxu0 0
        %1936 = vmatprep.subr.bf16.mxu0 0
        %1937 = vmatpush1.bf16.msra.mxu0 0
        %1938 = vmatprep.subr.bf16.mxu0 0
        %1939 = vmatpush1.bf16.msra.mxu0 0
        %1940 = vmatprep.subr.bf16.mxu0 0
        %1941 = vmatpush1.bf16.msra.mxu0 0
        %1942 = vmatprep.subr.bf16.mxu0 0
        %1943 = vmatpush1.bf16.msra.mxu0 0
        %1944 = vmatprep.subr.bf16.mxu0 0
        %1945 = vmatpush1.bf16.msra.mxu0 0
        %1946 = vmatprep.subr.bf16.mxu0 0
        %1947 = vmatpush1.bf16.msra.mxu0 0
        %1948 = vmatprep.subr.bf16.mxu0 0
        %1949 = vmatpush1.bf16.msra.mxu0 0
        %1950 = vmatprep.subr.bf16.mxu0 0
        %1951 = vmatpush1.bf16.msra.mxu0 0
        %1952 = vmatprep.subr.bf16.mxu0 0
        %1953 = vmatpush1.bf16.msra.mxu0 0
        %1954 = vmatprep.subr.bf16.mxu0 0
        %1955 = vmatpush1.bf16.msra.mxu0 0
        %1956 = vmatprep.subr.bf16.mxu0 0
        %1957 = vmatpush1.bf16.msra.mxu0 0
        %1958 = vmatprep.subr.bf16.mxu0 0
        %1959 = vmatpush1.bf16.msra.mxu0 0
        %1960 = vmatprep.mubr.bf16.mxu0 0
        %1961 = vmatmul.mubr.bf16.gmra.mrb[0].mxu0 %v1923
        %v1962 = vpop.f32.mrb[0].mxu0
        %v1963 = vadd.f32 0.0, %v1962
        %v1964 = vpop.f32.mrb[0].mxu0
        %v1965 = vpop.f32.mrb[0].mxu0
        %v1966 = vpop.f32.mrb[0].mxu0
        %1967 = vdwg.mxu0
        %v1969 = vsel %vm1794, %v1869, 0
        %v1972 = vsel %vm1878, %v1028, 0
        %1974 = vmatprep.subr.bf16.mxu0 0
        %1975 = vmatpush1.bf16.msra.mxu0 %v1972
        %1976 = vmatprep.subr.bf16.mxu0 0
        %1977 = vmatpush1.bf16.msra.mxu0 0
        %1978 = vmatprep.subr.bf16.mxu0 0
        %1979 = vmatpush1.bf16.msra.mxu0 0
        %1980 = vmatprep.subr.bf16.mxu0 0
        %1981 = vmatpush1.bf16.msra.mxu0 0
        %1982 = vmatprep.subr.bf16.mxu0 0
        %1983 = vmatpush1.bf16.msra.mxu0 0
        %1984 = vmatprep.subr.bf16.mxu0 0
        %1985 = vmatpush1.bf16.msra.mxu0 0
        %1986 = vmatprep.subr.bf16.mxu0 0
        %1987 = vmatpush1.bf16.msra.mxu0 0
        %1988 = vmatprep.subr.bf16.mxu0 0
        %1989 = vmatpush1.bf16.msra.mxu0 0
        %1990 = vmatprep.subr.bf16.mxu0 0
        %1991 = vmatpush1.bf16.msra.mxu0 0
        %1992 = vmatprep.subr.bf16.mxu0 0
        %1993 = vmatpush1.bf16.msra.mxu0 0
        %1994 = vmatprep.subr.bf16.mxu0 0
        %1995 = vmatpush1.bf16.msra.mxu0 0
        %1996 = vmatprep.subr.bf16.mxu0 0
        %1997 = vmatpush1.bf16.msra.mxu0 0
        %1998 = vmatprep.subr.bf16.mxu0 0
        %1999 = vmatpush1.bf16.msra.mxu0 0
        %2000 = vmatprep.subr.bf16.mxu0 0
        %2001 = vmatpush1.bf16.msra.mxu0 0
        %2002 = vmatprep.subr.bf16.mxu0 0
        %2003 = vmatpush1.bf16.msra.mxu0 0
        %2004 = vmatprep.subr.bf16.mxu0 0
        %2005 = vmatpush1.bf16.msra.mxu0 0
        %2006 = vmatprep.mubr.bf16.mxu0 0
        %2007 = vmatmul.mubr.bf16.gmra.mrb[0].mxu0 %v1969
        %v2008 = vpop.f32.mrb[0].mxu0
        %v2009 = vadd.f32 0.0, %v2008
        %v2010 = vpop.f32.mrb[0].mxu0
        %v2011 = vpop.f32.mrb[0].mxu0
        %v2012 = vpop.f32.mrb[0].mxu0
        %2013 = vdwg.mxu0
        %v2015 = vsel %vm1794, %v1870, 0
        %v2018 = vsel %vm1878, %v1029, 0
        %2020 = vmatprep.subr.bf16.mxu0 0
        %2021 = vmatpush1.bf16.msra.mxu0 %v2018
        %2022 = vmatprep.subr.bf16.mxu0 0
        %2023 = vmatpush1.bf16.msra.mxu0 0
        %2024 = vmatprep.subr.bf16.mxu0 0
        %2025 = vmatpush1.bf16.msra.mxu0 0
        %2026 = vmatprep.subr.bf16.mxu0 0
        %2027 = vmatpush1.bf16.msra.mxu0 0
        %2028 = vmatprep.subr.bf16.mxu0 0
        %2029 = vmatpush1.bf16.msra.mxu0 0
        %2030 = vmatprep.subr.bf16.mxu0 0
        %2031 = vmatpush1.bf16.msra.mxu0 0
        %2032 = vmatprep.subr.bf16.mxu0 0
        %2033 = vmatpush1.bf16.msra.mxu0 0
        %2034 = vmatprep.subr.bf16.mxu0 0
        %2035 = vmatpush1.bf16.msra.mxu0 0
        %2036 = vmatprep.subr.bf16.mxu0 0
        %2037 = vmatpush1.bf16.msra.mxu0 0
        %2038 = vmatprep.subr.bf16.mxu0 0
        %2039 = vmatpush1.bf16.msra.mxu0 0
        %2040 = vmatprep.subr.bf16.mxu0 0
        %2041 = vmatpush1.bf16.msra.mxu0 0
        %2042 = vmatprep.subr.bf16.mxu0 0
        %2043 = vmatpush1.bf16.msra.mxu0 0
        %2044 = vmatprep.subr.bf16.mxu0 0
        %2045 = vmatpush1.bf16.msra.mxu0 0
        %2046 = vmatprep.subr.bf16.mxu0 0
        %2047 = vmatpush1.bf16.msra.mxu0 0
        %2048 = vmatprep.subr.bf16.mxu0 0
        %2049 = vmatpush1.bf16.msra.mxu0 0
        %2050 = vmatprep.subr.bf16.mxu0 0
        %2051 = vmatpush1.bf16.msra.mxu0 0
        %2052 = vmatprep.mubr.bf16.mxu0 0
        %2053 = vmatmul.mubr.bf16.gmra.mrb[0].mxu0 %v2015
        %v2054 = vpop.f32.mrb[0].mxu0
        %v2055 = vadd.f32 0.0, %v2054
        %v2056 = vpop.f32.mrb[0].mxu0
        %v2057 = vpop.f32.mrb[0].mxu0
        %v2058 = vpop.f32.mrb[0].mxu0
        %2059 = vdwg.mxu0
        %v2061 = vsel %vm1794, %v1871, 0
        %v2064 = vsel %vm1878, %v1030, 0
        %2066 = vmatprep.subr.bf16.mxu0 0
        %2067 = vmatpush1.bf16.msra.mxu0 %v2064
        %2068 = vmatprep.subr.bf16.mxu0 0
        %2069 = vmatpush1.bf16.msra.mxu0 0
        %2070 = vmatprep.subr.bf16.mxu0 0
        %2071 = vmatpush1.bf16.msra.mxu0 0
        %2072 = vmatprep.subr.bf16.mxu0 0
        %2073 = vmatpush1.bf16.msra.mxu0 0
        %2074 = vmatprep.subr.bf16.mxu0 0
        %2075 = vmatpush1.bf16.msra.mxu0 0
        %2076 = vmatprep.subr.bf16.mxu0 0
        %2077 = vmatpush1.bf16.msra.mxu0 0
        %2078 = vmatprep.subr.bf16.mxu0 0
        %2079 = vmatpush1.bf16.msra.mxu0 0
        %2080 = vmatprep.subr.bf16.mxu0 0
        %2081 = vmatpush1.bf16.msra.mxu0 0
        %2082 = vmatprep.subr.bf16.mxu0 0
        %2083 = vmatpush1.bf16.msra.mxu0 0
        %2084 = vmatprep.subr.bf16.mxu0 0
        %2085 = vmatpush1.bf16.msra.mxu0 0
        %2086 = vmatprep.subr.bf16.mxu0 0
        %2087 = vmatpush1.bf16.msra.mxu0 0
        %2088 = vmatprep.subr.bf16.mxu0 0
        %2089 = vmatpush1.bf16.msra.mxu0 0
        %2090 = vmatprep.subr.bf16.mxu0 0
        %2091 = vmatpush1.bf16.msra.mxu0 0
        %2092 = vmatprep.subr.bf16.mxu0 0
        %2093 = vmatpush1.bf16.msra.mxu0 0
        %2094 = vmatprep.subr.bf16.mxu0 0
        %2095 = vmatpush1.bf16.msra.mxu0 0
        %2096 = vmatprep.subr.bf16.mxu0 0
        %2097 = vmatpush1.bf16.msra.mxu0 0
        %2098 = vmatprep.mubr.bf16.mxu0 0
        %2099 = vmatmul.mubr.bf16.gmra.mrb[0].mxu0 %v2061
        %v2100 = vpop.f32.mrb[0].mxu0
        %v2101 = vadd.f32 0.0, %v2100
        %v2102 = vpop.f32.mrb[0].mxu0
        %v2103 = vpop.f32.mrb[0].mxu0
        %v2104 = vpop.f32.mrb[0].mxu0
        %2105 = vdwg.mxu0
        %v2107 = vsel %vm1794, %v1872, 0
        %v2110 = vsel %vm1878, %v1031, 0
        %2112 = vmatprep.subr.bf16.mxu0 0
        %2113 = vmatpush1.bf16.msra.mxu0 %v2110
        %2114 = vmatprep.subr.bf16.mxu0 0
        %2115 = vmatpush1.bf16.msra.mxu0 0
        %2116 = vmatprep.subr.bf16.mxu0 0
        %2117 = vmatpush1.bf16.msra.mxu0 0
        %2118 = vmatprep.subr.bf16.mxu0 0
        %2119 = vmatpush1.bf16.msra.mxu0 0
        %2120 = vmatprep.subr.bf16.mxu0 0
        %2121 = vmatpush1.bf16.msra.mxu0 0
        %2122 = vmatprep.subr.bf16.mxu0 0
        %2123 = vmatpush1.bf16.msra.mxu0 0
        %2124 = vmatprep.subr.bf16.mxu0 0
        %2125 = vmatpush1.bf16.msra.mxu0 0
        %2126 = vmatprep.subr.bf16.mxu0 0
        %2127 = vmatpush1.bf16.msra.mxu0 0
        %2128 = vmatprep.subr.bf16.mxu0 0
        %2129 = vmatpush1.bf16.msra.mxu0 0
        %2130 = vmatprep.subr.bf16.mxu0 0
        %2131 = vmatpush1.bf16.msra.mxu0 0
        %2132 = vmatprep.subr.bf16.mxu0 0
        %2133 = vmatpush1.bf16.msra.mxu0 0
        %2134 = vmatprep.subr.bf16.mxu0 0
        %2135 = vmatpush1.bf16.msra.mxu0 0
        %2136 = vmatprep.subr.bf16.mxu0 0
        %2137 = vmatpush1.bf16.msra.mxu0 0
        %2138 = vmatprep.subr.bf16.mxu0 0
        %2139 = vmatpush1.bf16.msra.mxu0 0
        %2140 = vmatprep.subr.bf16.mxu0 0
        %2141 = vmatpush1.bf16.msra.mxu0 0
        %2142 = vmatprep.subr.bf16.mxu0 0
        %2143 = vmatpush1.bf16.msra.mxu0 0
        %2144 = vmatprep.mubr.bf16.mxu0 0
        %2145 = vmatmul.mubr.bf16.gmra.mrb[0].mxu0 %v2107
        %v2146 = vpop.f32.mrb[0].mxu0
        %v2147 = vadd.f32 0.0, %v2146
        %v2148 = vpop.f32.mrb[0].mxu0
        %v2149 = vpop.f32.mrb[0].mxu0
        %v2150 = vpop.f32.mrb[0].mxu0
        %2151 = vdwg.mxu0
        %v2153 = vsel %vm1794, %v1873, 0
        %v2156 = vsel %vm1878, %v1032, 0
        %2158 = vmatprep.subr.bf16.mxu0 0
        %2159 = vmatpush1.bf16.msra.mxu0 %v2156
        %2160 = vmatprep.subr.bf16.mxu0 0
        %2161 = vmatpush1.bf16.msra.mxu0 0
        %2162 = vmatprep.subr.bf16.mxu0 0
        %2163 = vmatpush1.bf16.msra.mxu0 0
        %2164 = vmatprep.subr.bf16.mxu0 0
        %2165 = vmatpush1.bf16.msra.mxu0 0
        %2166 = vmatprep.subr.bf16.mxu0 0
        %2167 = vmatpush1.bf16.msra.mxu0 0
        %2168 = vmatprep.subr.bf16.mxu0 0
        %2169 = vmatpush1.bf16.msra.mxu0 0
        %2170 = vmatprep.subr.bf16.mxu0 0
        %2171 = vmatpush1.bf16.msra.mxu0 0
        %2172 = vmatprep.subr.bf16.mxu0 0
        %2173 = vmatpush1.bf16.msra.mxu0 0
        %2174 = vmatprep.subr.bf16.mxu0 0
        %2175 = vmatpush1.bf16.msra.mxu0 0
        %2176 = vmatprep.subr.bf16.mxu0 0
        %2177 = vmatpush1.bf16.msra.mxu0 0
        %2178 = vmatprep.subr.bf16.mxu0 0
        %2179 = vmatpush1.bf16.msra.mxu0 0
        %2180 = vmatprep.subr.bf16.mxu0 0
        %2181 = vmatpush1.bf16.msra.mxu0 0
        %2182 = vmatprep.subr.bf16.mxu0 0
        %2183 = vmatpush1.bf16.msra.mxu0 0
        %2184 = vmatprep.subr.bf16.mxu0 0
        %2185 = vmatpush1.bf16.msra.mxu0 0
        %2186 = vmatprep.subr.bf16.mxu0 0
        %2187 = vmatpush1.bf16.msra.mxu0 0
        %2188 = vmatprep.subr.bf16.mxu0 0
        %2189 = vmatpush1.bf16.msra.mxu0 0
        %2190 = vmatprep.mubr.bf16.mxu0 0
        %2191 = vmatmul.mubr.bf16.gmra.mrb[0].mxu0 %v2153
        %v2192 = vpop.f32.mrb[0].mxu0
        %v2193 = vadd.f32 0.0, %v2192
        %v2194 = vpop.f32.mrb[0].mxu0
        %v2195 = vpop.f32.mrb[0].mxu0
        %v2196 = vpop.f32.mrb[0].mxu0
        %2197 = vdwg.mxu0
        %v2199 = vsel %vm1794, %v1874, 0
        %v2202 = vsel %vm1878, %v1033, 0
        %2204 = vmatprep.subr.bf16.mxu0 0
        %2205 = vmatpush1.bf16.msra.mxu0 %v2202
        %2206 = vmatprep.subr.bf16.mxu0 0
        %2207 = vmatpush1.bf16.msra.mxu0 0
        %2208 = vmatprep.subr.bf16.mxu0 0
        %2209 = vmatpush1.bf16.msra.mxu0 0
        %2210 = vmatprep.subr.bf16.mxu0 0
        %2211 = vmatpush1.bf16.msra.mxu0 0
        %2212 = vmatprep.subr.bf16.mxu0 0
        %2213 = vmatpush1.bf16.msra.mxu0 0
        %2214 = vmatprep.subr.bf16.mxu0 0
        %2215 = vmatpush1.bf16.msra.mxu0 0
        %2216 = vmatprep.subr.bf16.mxu0 0
        %2217 = vmatpush1.bf16.msra.mxu0 0
        %2218 = vmatprep.subr.bf16.mxu0 0
        %2219 = vmatpush1.bf16.msra.mxu0 0
        %2220 = vmatprep.subr.bf16.mxu0 0
        %2221 = vmatpush1.bf16.msra.mxu0 0
        %2222 = vmatprep.subr.bf16.mxu0 0
        %2223 = vmatpush1.bf16.msra.mxu0 0
        %2224 = vmatprep.subr.bf16.mxu0 0
        %2225 = vmatpush1.bf16.msra.mxu0 0
        %2226 = vmatprep.subr.bf16.mxu0 0
        %2227 = vmatpush1.bf16.msra.mxu0 0
        %2228 = vmatprep.subr.bf16.mxu0 0
        %2229 = vmatpush1.bf16.msra.mxu0 0
        %2230 = vmatprep.subr.bf16.mxu0 0
        %2231 = vmatpush1.bf16.msra.mxu0 0
        %2232 = vmatprep.subr.bf16.mxu0 0
        %2233 = vmatpush1.bf16.msra.mxu0 0
        %2234 = vmatprep.subr.bf16.mxu0 0
        %2235 = vmatpush1.bf16.msra.mxu0 0
        %2236 = vmatprep.mubr.bf16.mxu0 0
        %2237 = vmatmul.mubr.bf16.gmra.mrb[0].mxu0 %v2199
        %v2238 = vpop.f32.mrb[0].mxu0
        %v2239 = vadd.f32 0.0, %v2238
        %v2240 = vpop.f32.mrb[0].mxu0
        %v2241 = vpop.f32.mrb[0].mxu0
        %v2242 = vpop.f32.mrb[0].mxu0
        %2243 = vdwg.mxu0
        %v2244 = vrcp.pop %v1845
        %v2245 = vrcp.pop %v1848
        %v2246 = vrcp.pop %v1851
        %v2247 = vrcp.pop %v1854
        %v2248 = vrcp.pop %v1857
        %v2249 = vrcp.pop %v1860
        %v2250 = vrcp.pop %v1863
        %v2251 = vrcp.pop %v1866
        %v2252 = vmul.f32 %v1917, %v2244
        %v2253 = vmul.f32 %v1963, %v2245
        %v2254 = vmul.f32 %v2009, %v2246
        %v2255 = vmul.f32 %v2055, %v2247
        %v2256 = vmul.f32 %v2101, %v2248
        %v2257 = vmul.f32 %v2147, %v2249
        %v2258 = vmul.f32 %v2193, %v2250
        %v2259 = vmul.f32 %v2239, %v2251
        %v2260 = vcombine.low %v2252, %v2254
        %v2261 = vcombine.high %v2252, %v2254
        %v2263 = vunpack.c.l.s4 1983009808
        %v2264 = vunpack.c.0.s8 %v2263
        %v2265 = vlaneseq
        %v2266 = vshrl.u32 %v2265, 7
        %v2267 = vsub.s32 %v2264, %v2266
        %v2268 = vrot.slane %v2260, %v2267
        %v2270 = vunpack.c.l.s4 1983009808
        %v2271 = vunpack.c.0.s8 %v2270
        %v2272 = vlaneseq
        %v2273 = vshrl.u32 %v2272, 7
        %v2274 = vsub.s32 %v2271, %v2273
        %v2275 = vrot.slane %v2261, %v2274
        %v2276 = vcombine.low %v2253, %v2255
        %v2277 = vcombine.high %v2253, %v2255
        %v2279 = vunpack.c.l.s4 1983009808
        %v2280 = vunpack.c.0.s8 %v2279
        %v2281 = vlaneseq
        %v2282 = vshrl.u32 %v2281, 7
        %v2283 = vsub.s32 %v2280, %v2282
        %v2284 = vrot.slane %v2276, %v2283
        %v2286 = vunpack.c.l.s4 1983009808
        %v2287 = vunpack.c.0.s8 %v2286
        %v2288 = vlaneseq
        %v2289 = vshrl.u32 %v2288, 7
        %v2290 = vsub.s32 %v2287, %v2289
        %v2291 = vrot.slane %v2277, %v2290
        %v2292 = vcombine.low %v2256, %v2258
        %v2293 = vcombine.high %v2256, %v2258
        %v2295 = vunpack.c.l.s4 1983009808
        %v2296 = vunpack.c.0.s8 %v2295
        %v2297 = vlaneseq
        %v2298 = vshrl.u32 %v2297, 7
        %v2299 = vsub.s32 %v2296, %v2298
        %v2300 = vrot.slane %v2292, %v2299
        %v2302 = vunpack.c.l.s4 1983009808
        %v2303 = vunpack.c.0.s8 %v2302
        %v2304 = vlaneseq
        %v2305 = vshrl.u32 %v2304, 7
        %v2306 = vsub.s32 %v2303, %v2305
        %v2307 = vrot.slane %v2293, %v2306
        %v2308 = vcombine.low %v2257, %v2259
        %v2309 = vcombine.high %v2257, %v2259
        %v2311 = vunpack.c.l.s4 1983009808
        %v2312 = vunpack.c.0.s8 %v2311
        %v2313 = vlaneseq
        %v2314 = vshrl.u32 %v2313, 7
        %v2315 = vsub.s32 %v2312, %v2314
        %v2316 = vrot.slane %v2308, %v2315
        %v2318 = vunpack.c.l.s4 1983009808
        %v2319 = vunpack.c.0.s8 %v2318
        %v2320 = vlaneseq
        %v2321 = vshrl.u32 %v2320, 7
        %v2322 = vsub.s32 %v2319, %v2321
        %v2323 = vrot.slane %v2309, %v2322
        %v2324 = vcombine.low %v2268, %v2284
        %v2325 = vcombine.high %v2268, %v2284
        %v2327 = vunpack.c.l.s4 1934713408
        %v2328 = vunpack.c.0.s8 %v2327
        %v2329 = vlaneseq
        %v2330 = vshrl.u32 %v2329, 7
        %v2331 = vsub.s32 %v2328, %v2330
        %v2332 = vrot.slane %v2324, %v2331
        %v2334 = vunpack.c.l.s4 1934713408
        %v2335 = vunpack.c.0.s8 %v2334
        %v2336 = vlaneseq
        %v2337 = vshrl.u32 %v2336, 7
        %v2338 = vsub.s32 %v2335, %v2337
        %v2339 = vrot.slane %v2325, %v2338
        %v2340 = vcombine.low %v2275, %v2291
        %v2341 = vcombine.high %v2275, %v2291
        %v2343 = vunpack.c.l.s4 1934713408
        %v2344 = vunpack.c.0.s8 %v2343
        %v2345 = vlaneseq
        %v2346 = vshrl.u32 %v2345, 7
        %v2347 = vsub.s32 %v2344, %v2346
        %v2348 = vrot.slane %v2340, %v2347
        %v2350 = vunpack.c.l.s4 1934713408
        %v2351 = vunpack.c.0.s8 %v2350
        %v2352 = vlaneseq
        %v2353 = vshrl.u32 %v2352, 7
        %v2354 = vsub.s32 %v2351, %v2353
        %v2355 = vrot.slane %v2341, %v2354
        %v2356 = vcombine.low %v2300, %v2316
        %v2357 = vcombine.high %v2300, %v2316
        %v2359 = vunpack.c.l.s4 1934713408
        %v2360 = vunpack.c.0.s8 %v2359
        %v2361 = vlaneseq
        %v2362 = vshrl.u32 %v2361, 7
        %v2363 = vsub.s32 %v2360, %v2362
        %v2364 = vrot.slane %v2356, %v2363
        %v2366 = vunpack.c.l.s4 1934713408
        %v2367 = vunpack.c.0.s8 %v2366
        %v2368 = vlaneseq
        %v2369 = vshrl.u32 %v2368, 7
        %v2370 = vsub.s32 %v2367, %v2369
        %v2371 = vrot.slane %v2357, %v2370
        %v2372 = vcombine.low %v2307, %v2323
        %v2373 = vcombine.high %v2307, %v2323
        %v2375 = vunpack.c.l.s4 1934713408
        %v2376 = vunpack.c.0.s8 %v2375
        %v2377 = vlaneseq
        %v2378 = vshrl.u32 %v2377, 7
        %v2379 = vsub.s32 %v2376, %v2378
        %v2380 = vrot.slane %v2372, %v2379
        %v2382 = vunpack.c.l.s4 1934713408
        %v2383 = vunpack.c.0.s8 %v2382
        %v2384 = vlaneseq
        %v2385 = vshrl.u32 %v2384, 7
        %v2386 = vsub.s32 %v2383, %v2385
        %v2387 = vrot.slane %v2373, %v2386
        %v2388 = vcombine.low %v2332, %v2364
        %v2389 = vcombine.high %v2332, %v2364
        %v2390 = vcombine.low %v2339, %v2371
        %v2391 = vcombine.high %v2339, %v2371
        %v2392 = vcombine.low %v2348, %v2380
        %v2393 = vcombine.high %v2348, %v2380
        %v2394 = vcombine.low %v2355, %v2387
        %v2395 = vcombine.high %v2355, %v2387
        %v2396 = vcombine.low %v2388, %v2390
        %v2397 = vcombine.high %v2388, %v2390
        %v2399 = vunpack.c.l.s4 1983009808
        %v2400 = vunpack.c.0.s8 %v2399
        %v2401 = vlaneseq
        %v2402 = vshrl.u32 %v2401, 7
        %v2403 = vsub.s32 %v2400, %v2402
        %v2404 = vrot.slane %v2396, %v2403
        %v2406 = vunpack.c.l.s4 1983009808
        %v2407 = vunpack.c.0.s8 %v2406
        %v2408 = vlaneseq
        %v2409 = vshrl.u32 %v2408, 7
        %v2410 = vsub.s32 %v2407, %v2409
        %v2411 = vrot.slane %v2397, %v2410
        %v2412 = vcombine.low %v2389, %v2391
        %v2413 = vcombine.high %v2389, %v2391
        %v2415 = vunpack.c.l.s4 1983009808
        %v2416 = vunpack.c.0.s8 %v2415
        %v2417 = vlaneseq
        %v2418 = vshrl.u32 %v2417, 7
        %v2419 = vsub.s32 %v2416, %v2418
        %v2420 = vrot.slane %v2412, %v2419
        %v2422 = vunpack.c.l.s4 1983009808
        %v2423 = vunpack.c.0.s8 %v2422
        %v2424 = vlaneseq
        %v2425 = vshrl.u32 %v2424, 7
        %v2426 = vsub.s32 %v2423, %v2425
        %v2427 = vrot.slane %v2413, %v2426
        %v2428 = vcombine.low %v2392, %v2394
        %v2429 = vcombine.high %v2392, %v2394
        %v2431 = vunpack.c.l.s4 1983009808
        %v2432 = vunpack.c.0.s8 %v2431
        %v2433 = vlaneseq
        %v2434 = vshrl.u32 %v2433, 7
        %v2435 = vsub.s32 %v2432, %v2434
        %v2436 = vrot.slane %v2428, %v2435
        %v2438 = vunpack.c.l.s4 1983009808
        %v2439 = vunpack.c.0.s8 %v2438
        %v2440 = vlaneseq
        %v2441 = vshrl.u32 %v2440, 7
        %v2442 = vsub.s32 %v2439, %v2441
        %v2443 = vrot.slane %v2429, %v2442
        %v2444 = vcombine.low %v2393, %v2395
        %v2445 = vcombine.high %v2393, %v2395
        %v2447 = vunpack.c.l.s4 1983009808
        %v2448 = vunpack.c.0.s8 %v2447
        %v2449 = vlaneseq
        %v2450 = vshrl.u32 %v2449, 7
        %v2451 = vsub.s32 %v2448, %v2450
        %v2452 = vrot.slane %v2444, %v2451
        %v2454 = vunpack.c.l.s4 1983009808
        %v2455 = vunpack.c.0.s8 %v2454
        %v2456 = vlaneseq
        %v2457 = vshrl.u32 %v2456, 7
        %v2458 = vsub.s32 %v2455, %v2457
        %v2459 = vrot.slane %v2445, %v2458
        %v2460 = vcombine.low %v2404, %v2420
        %v2461 = vcombine.high %v2404, %v2420
        %v2463 = vunpack.c.l.s4 1934713408
        %v2464 = vunpack.c.0.s8 %v2463
        %v2465 = vlaneseq
        %v2466 = vshrl.u32 %v2465, 7
        %v2467 = vsub.s32 %v2464, %v2466
        %v2468 = vrot.slane %v2460, %v2467
        %v2470 = vunpack.c.l.s4 1934713408
        %v2471 = vunpack.c.0.s8 %v2470
        %v2472 = vlaneseq
        %v2473 = vshrl.u32 %v2472, 7
        %v2474 = vsub.s32 %v2471, %v2473
        %v2475 = vrot.slane %v2461, %v2474
        %v2476 = vcombine.low %v2411, %v2427
        %v2477 = vcombine.high %v2411, %v2427
        %v2479 = vunpack.c.l.s4 1934713408
        %v2480 = vunpack.c.0.s8 %v2479
        %v2481 = vlaneseq
        %v2482 = vshrl.u32 %v2481, 7
        %v2483 = vsub.s32 %v2480, %v2482
        %v2484 = vrot.slane %v2476, %v2483
        %v2486 = vunpack.c.l.s4 1934713408
        %v2487 = vunpack.c.0.s8 %v2486
        %v2488 = vlaneseq
        %v2489 = vshrl.u32 %v2488, 7
        %v2490 = vsub.s32 %v2487, %v2489
        %v2491 = vrot.slane %v2477, %v2490
        %v2492 = vcombine.low %v2436, %v2452
        %v2493 = vcombine.high %v2436, %v2452
        %v2495 = vunpack.c.l.s4 1934713408
        %v2496 = vunpack.c.0.s8 %v2495
        %v2497 = vlaneseq
        %v2498 = vshrl.u32 %v2497, 7
        %v2499 = vsub.s32 %v2496, %v2498
        %v2500 = vrot.slane %v2492, %v2499
        %v2502 = vunpack.c.l.s4 1934713408
        %v2503 = vunpack.c.0.s8 %v2502
        %v2504 = vlaneseq
        %v2505 = vshrl.u32 %v2504, 7
        %v2506 = vsub.s32 %v2503, %v2505
        %v2507 = vrot.slane %v2493, %v2506
        %v2508 = vcombine.low %v2443, %v2459
        %v2509 = vcombine.high %v2443, %v2459
        %v2511 = vunpack.c.l.s4 1934713408
        %v2512 = vunpack.c.0.s8 %v2511
        %v2513 = vlaneseq
        %v2514 = vshrl.u32 %v2513, 7
        %v2515 = vsub.s32 %v2512, %v2514
        %v2516 = vrot.slane %v2508, %v2515
        %v2518 = vunpack.c.l.s4 1934713408
        %v2519 = vunpack.c.0.s8 %v2518
        %v2520 = vlaneseq
        %v2521 = vshrl.u32 %v2520, 7
        %v2522 = vsub.s32 %v2519, %v2521
        %v2523 = vrot.slane %v2509, %v2522
        %v2524 = vcombine.low %v2468, %v2500
        %v2525 = vcombine.high %v2468, %v2500
        %v2526 = vcombine.low %v2475, %v2507
        %v2527 = vcombine.high %v2475, %v2507
        %v2528 = vcombine.low %v2484, %v2516
        %v2529 = vcombine.high %v2484, %v2516
        %v2530 = vcombine.low %v2491, %v2523
        %v2531 = vcombine.high %v2491, %v2523
        %2533 = vrot.lane.b32.xlu0 %v2525, 4
        %v2534 = vpop.permute.xlu0 %2533
        %2537 = vrot.lane.b32.xlu0 %v2526, 8
        %v2538 = vpop.permute.xlu0 %2537
        %2541 = vrot.lane.b32.xlu0 %v2527, 12
        %v2542 = vpop.permute.xlu0 %2541
        %2545 = vrot.lane.b32.xlu0 %v2528, 16
        %v2546 = vpop.permute.xlu0 %2545
        %2549 = vrot.lane.b32.xlu0 %v2529, 20
        %v2550 = vpop.permute.xlu0 %2549
        %2553 = vrot.lane.b32.xlu0 %v2530, 24
        %v2554 = vpop.permute.xlu0 %2553
        %2557 = vrot.lane.b32.xlu0 %v2531, 28
        %v2558 = vpop.permute.xlu0 %2557
        %v2560 = vsel %vm1425, %v2524, %v2534
        %v2561 = vsel %vm1794, %v2560, %v2538
        %vm2562 = vcmask 97280
        %v2563 = vsel %vm2562, %v2561, %v2542
        %vm2564 = vcmask 130048
        %v2565 = vsel %vm2564, %v2563, %v2546
        %vm2566 = vcmask 162816
        %v2567 = vsel %vm2566, %v2565, %v2550
        %vm2568 = vcmask 195584
        %v2569 = vsel %vm2568, %v2567, %v2554
        %vm2570 = vcmask 228352
        %v2571 = vsel %vm2570, %v2569, %v2558
        %v2572 = vpack.c.bf16 %v2571, %v2571
        %v2573 = vld [vmem:[#allocation9] sm:$0xf]
        %v2574 = vld [vmem:[#allocation9 + $0x4] sm:$0xf]
        %v2575 = vld [vmem:[#allocation9 + $0x8] sm:$0xf]
        %v2576 = vld [vmem:[#allocation9 + $0xc] sm:$0xf]
        %v2577 = vlaneseq
        %v2578 = vshrl.u32 %v2577, 7
        %v2579 = vsub.s32 5, %v2578
        %v2580 = vrot.slane %v456, %v2579
        %v2585 = vunpack.c.l.b16 %v2573
        %v2586 = vunpack.c.l.b16 %v2574
        %v2587 = vunpack.c.l.b16 %v2575
        %v2588 = vunpack.c.l.b16 %v2576
        %v2589 = vpack.c.b16 %v2586, %v2585
        %v2590 = vpack.c.b16 %v2588, %v2587
        %v2594 = vsel %vm1034, %v2572, 0
        %2596 = vmatprep.subr.bf16.mxu0 0
        %2597 = vmatpush1.bf16.msra.mxu0 %v2589
        %2598 = vmatprep.subr.bf16.mxu0 0
        %2599 = vmatpush1.bf16.msra.mxu0 %v2590
        %2600 = vmatprep.subr.bf16.mxu0 0
        %2601 = vmatpush1.bf16.msra.mxu0 0
        %2602 = vmatprep.subr.bf16.mxu0 0
        %2603 = vmatpush1.bf16.msra.mxu0 0
        %2604 = vmatprep.subr.bf16.mxu0 0
        %2605 = vmatpush1.bf16.msra.mxu0 0
        %2606 = vmatprep.subr.bf16.mxu0 0
        %2607 = vmatpush1.bf16.msra.mxu0 0
        %2608 = vmatprep.subr.bf16.mxu0 0
        %2609 = vmatpush1.bf16.msra.mxu0 0
        %2610 = vmatprep.subr.bf16.mxu0 0
        %2611 = vmatpush1.bf16.msra.mxu0 0
        %2612 = vmatprep.subr.bf16.mxu0 0
        %2613 = vmatpush1.bf16.msra.mxu0 0
        %2614 = vmatprep.subr.bf16.mxu0 0
        %2615 = vmatpush1.bf16.msra.mxu0 0
        %2616 = vmatprep.subr.bf16.mxu0 0
        %2617 = vmatpush1.bf16.msra.mxu0 0
        %2618 = vmatprep.subr.bf16.mxu0 0
        %2619 = vmatpush1.bf16.msra.mxu0 0
        %2620 = vmatprep.subr.bf16.mxu0 0
        %2621 = vmatpush1.bf16.msra.mxu0 0
        %2622 = vmatprep.subr.bf16.mxu0 0
        %2623 = vmatpush1.bf16.msra.mxu0 0
        %2624 = vmatprep.subr.bf16.mxu0 0
        %2625 = vmatpush1.bf16.msra.mxu0 0
        %2626 = vmatprep.subr.bf16.mxu0 0
        %2627 = vmatpush1.bf16.msra.mxu0 0
        %2628 = vmatprep.mubr.bf16.mxu0 0
        %2629 = vmatmul.mubr.bf16.gmra.mrb[0].mxu0 %v2594
        %v2630 = vpop.f32.mrb[0].mxu0
        %v2631 = vadd.f32 %v2580, %v2630
        %v2632 = vpop.f32.mrb[0].mxu0
        %v2633 = vpop.f32.mrb[0].mxu0
        %v2634 = vpop.f32.mrb[0].mxu0
        %2635 = vdwg.mxu0
        %v2636 = vadd.f32 %v455, %v2631
        %v2637 = vsel %vm1034, %v2636, 0.0
        %2638 = vadd.xlane.f32.xlu0 %v2637
        %v2639 = vpop.xlane.xlu0 %2638
        %v2640 = vmul.f32 %v2639, %v1038
        %v2641 = vsub.f32 %v2636, %v2640
        %v2642 = vmul.f32 %v2641, %v2641
        %v2643 = vsel %vm1034, %v2642, 0.0
        %2644 = vadd.xlane.f32.xlu0 %v2643
        %v2645 = vpop.xlane.xlu0 %2644
        %v2646 = vmul.f32 %v2645, %v1038
        %v2647 = vadd.f32 %v2646, 1e-05
        %v2648 = vrsqrt.pop %v2647
        %v2649 = vmul.f32 %v2641, %v2648
        %v2650 = vlaneseq
        %v2651 = vshrl.u32 %v2650, 7
        %v2652 = vsub.s32 2, %v2651
        %v2653 = vrot.slane %v456, %v2652
        %v2654 = vmul.f32 %v2649, %v2653
        %v2655 = vlaneseq
        %v2656 = vshrl.u32 %v2655, 7
        %v2657 = vsub.s32 3, %v2656
        %v2658 = vrot.slane %v456, %v2657
        %v2659 = vadd.f32 %v2654, %v2658
        %v2660 = vpack.c.bf16 %v2659, %v2659
        %v2661 = vld [vmem:[#allocation10] sm:$0xf]
        %v2662 = vld [vmem:[#allocation10 + $0x4] sm:$0xf]
        %v2663 = vld [vmem:[#allocation10 + $0x8] sm:$0xf]
        %v2664 = vld [vmem:[#allocation10 + $0xc] sm:$0xf]
        %v2665 = vld [vmem:[%s8] sm:$0x1]
        %v2667 = vlaneseq
        %v2668 = vshrl.u32 %v2667, 7
        %v2669 = vsub.s32 0, %v2668
        %v2670 = vrot.slane %v2665, %v2669
        %v2676 = vunpack.c.l.b16 %v2661
        %v2677 = vunpack.c.l.b16 %v2662
        %v2678 = vunpack.c.l.b16 %v2663
        %v2679 = vunpack.c.l.b16 %v2664
        %v2680 = vpack.c.b16 %v2677, %v2676
        %v2681 = vpack.c.b16 %v2679, %v2678
        %v2685 = vsel %vm1034, %v2660, 0
        %2687 = vmatprep.subr.bf16.mxu0 0
        %2688 = vmatpush1.bf16.msra.mxu0 %v2680
        %2689 = vmatprep.subr.bf16.mxu0 0
        %2690 = vmatpush1.bf16.msra.mxu0 %v2681
        %2691 = vmatprep.subr.bf16.mxu0 0
        %2692 = vmatpush1.bf16.msra.mxu0 0
        %2693 = vmatprep.subr.bf16.mxu0 0
        %2694 = vmatpush1.bf16.msra.mxu0 0
        %2695 = vmatprep.subr.bf16.mxu0 0
        %2696 = vmatpush1.bf16.msra.mxu0 0
        %2697 = vmatprep.subr.bf16.mxu0 0
        %2698 = vmatpush1.bf16.msra.mxu0 0
        %2699 = vmatprep.subr.bf16.mxu0 0
        %2700 = vmatpush1.bf16.msra.mxu0 0
        %2701 = vmatprep.subr.bf16.mxu0 0
        %2702 = vmatpush1.bf16.msra.mxu0 0
        %2703 = vmatprep.subr.bf16.mxu0 0
        %2704 = vmatpush1.bf16.msra.mxu0 0
        %2705 = vmatprep.subr.bf16.mxu0 0
        %2706 = vmatpush1.bf16.msra.mxu0 0
        %2707 = vmatprep.subr.bf16.mxu0 0
        %2708 = vmatpush1.bf16.msra.mxu0 0
        %2709 = vmatprep.subr.bf16.mxu0 0
        %2710 = vmatpush1.bf16.msra.mxu0 0
        %2711 = vmatprep.subr.bf16.mxu0 0
        %2712 = vmatpush1.bf16.msra.mxu0 0
        %2713 = vmatprep.subr.bf16.mxu0 0
        %2714 = vmatpush1.bf16.msra.mxu0 0
        %2715 = vmatprep.subr.bf16.mxu0 0
        %2716 = vmatpush1.bf16.msra.mxu0 0
        %2717 = vmatprep.subr.bf16.mxu0 0
        %2718 = vmatpush1.bf16.msra.mxu0 0
        %2719 = vmatprep.mubr.bf16.mxu0 0
        %2720 = vmatmul.mubr.bf16.gmra.mrb[0].mxu0 %v2685
        %v2721 = vpop.f32.mrb[0].mxu0
        %v2722 = vadd.f32 %v2670, %v2721
        %v2723 = vpop.f32.mrb[0].mxu0
        %v2724 = vpop.f32.mrb[0].mxu0
        %v2725 = vpop.f32.mrb[0].mxu0
        %2726 = vdwg.mxu0
        %v2727 = vmax.f32 %v2722, 0.0
        %v2728 = vpack.c.bf16 %v2727, %v2727
        %v2729 = vld [vmem:[%s9] sm:$0xf]
        %v2730 = vld [vmem:[%s9 + $0x4] sm:$0xf]
        %v2731 = vld [vmem:[%s9 + $0x8] sm:$0xf]
        %v2732 = vld [vmem:[%s9 + $0xc] sm:$0xf]
        %v2733 = vld [vmem:[%s9 + $0x10] sm:$0xf]
        %v2734 = vld [vmem:[%s9 + $0x14] sm:$0xf]
        %v2735 = vld [vmem:[%s9 + $0x18] sm:$0xf]
        %v2736 = vld [vmem:[%s9 + $0x1c] sm:$0xf]
        %v2737 = vlaneseq
        %v2738 = vshrl.u32 %v2737, 7
        %v2739 = vsub.s32 6, %v2738
        %v2740 = vrot.slane %v456, %v2739
        %v2749 = vunpack.c.l.b16 %v2729
        %v2750 = vunpack.c.l.b16 %v2730
        %v2751 = vunpack.c.l.b16 %v2731
        %v2752 = vunpack.c.l.b16 %v2732
        %v2753 = vunpack.c.l.b16 %v2733
        %v2754 = vunpack.c.l.b16 %v2734
        %v2755 = vunpack.c.l.b16 %v2735
        %v2756 = vunpack.c.l.b16 %v2736
        %v2757 = vpack.c.b16 %v2750, %v2749
        %v2758 = vpack.c.b16 %v2752, %v2751
        %v2759 = vpack.c.b16 %v2754, %v2753
        %v2760 = vpack.c.b16 %v2756, %v2755
        %vm2765 = vcmask 523264
        %v2767 = vsel %vm2765, %v2728, 0
        %2769 = vmatprep.subr.bf16.mxu0 0
        %2770 = vmatpush1.bf16.msra.mxu0 %v2757
        %2771 = vmatprep.subr.bf16.mxu0 0
        %2772 = vmatpush1.bf16.msra.mxu0 %v2758
        %2773 = vmatprep.subr.bf16.mxu0 0
        %2774 = vmatpush1.bf16.msra.mxu0 %v2759
        %2775 = vmatprep.subr.bf16.mxu0 0
        %2776 = vmatpush1.bf16.msra.mxu0 %v2760
        %2777 = vmatprep.subr.bf16.mxu0 0
        %2778 = vmatpush1.bf16.msra.mxu0 0
        %2779 = vmatprep.subr.bf16.mxu0 0
        %2780 = vmatpush1.bf16.msra.mxu0 0
        %2781 = vmatprep.subr.bf16.mxu0 0
        %2782 = vmatpush1.bf16.msra.mxu0 0
        %2783 = vmatprep.subr.bf16.mxu0 0
        %2784 = vmatpush1.bf16.msra.mxu0 0
        %2785 = vmatprep.subr.bf16.mxu0 0
        %2786 = vmatpush1.bf16.msra.mxu0 0
        %2787 = vmatprep.subr.bf16.mxu0 0
        %2788 = vmatpush1.bf16.msra.mxu0 0
        %2789 = vmatprep.subr.bf16.mxu0 0
        %2790 = vmatpush1.bf16.msra.mxu0 0
        %2791 = vmatprep.subr.bf16.mxu0 0
        %2792 = vmatpush1.bf16.msra.mxu0 0
        %2793 = vmatprep.subr.bf16.mxu0 0
        %2794 = vmatpush1.bf16.msra.mxu0 0
        %2795 = vmatprep.subr.bf16.mxu0 0
        %2796 = vmatpush1.bf16.msra.mxu0 0
        %2797 = vmatprep.subr.bf16.mxu0 0
        %2798 = vmatpush1.bf16.msra.mxu0 0
        %2799 = vmatprep.subr.bf16.mxu0 0
        %2800 = vmatpush1.bf16.msra.mxu0 0
        %2801 = vmatprep.mubr.bf16.mxu0 0
        %2802 = vmatmul.mubr.bf16.gmra.mrb[0].mxu0 %v2767
        %v2803 = vpop.f32.mrb[0].mxu0
        %v2804 = vadd.f32 %v2740, %v2803
        %v2805 = vpop.f32.mrb[0].mxu0
        %v2806 = vpop.f32.mrb[0].mxu0
        %v2807 = vpop.f32.mrb[0].mxu0
        %2808 = vdwg.mxu0
        %v2809 = vadd.f32 %v2636, %v2804
        %2810 = vst.msk [vmem:[%s442] sm:$0xff] %vm1034, %v2809
        %s2811 = sand.u32 %s271, 1
        %s2812 = scalar_lea.sflag [#allocation6], %s2811
        %s2813 = sand.u32 %s271, 1
        %s2814 = smul.addr %s2813, 8
        %s2815 = scalar_lea.vmem [#allocation12], %s2814
        // Predicated region
        $region81: #{tpu_custom_call.1} parent=59 // pred_check
          %p2816 = pneg %p281
        $region82: #{tpu_custom_call.1} parent=59 // pred_check_branch
          %2818 = sbr.rel (%p2816) target = $region84
        $region83: #{tpu_custom_call.1} parent=59 // pred_region
          %s2820 = ssub.s32 128, 128
          %2821 = vsyncadd %s2812, %s2820
          %s2822 = sadd.s32 %s32, %s31
          %s2823 = smul.addr %s2822, 128
          %s2824 = scalar_lea.hbm %s10, %s2823
          %s2826 = sshll.u32 %s2815, 4
          %s2827 = int_to_ptr.vmem [resolvable:$true] %s2826
          %2829 = dma.vmem_to_hbm [thread:$0]  %s2827, 128, %s2824, %s2812
        $region84: #{tpu_custom_call.1} parent=59 // pred_fallthru
          _
      $region60: #{tpu_custom_call.1} parent=5 // pred_fallthru
        _
      %p2830 = scmp.le.s32.totalorder 2, %s22
      // Predicated region
      $region85: #{tpu_custom_call.1} parent=5 // pred_check
        %p2831 = pneg %p2830
      $region86: #{tpu_custom_call.1} parent=5 // pred_check_branch
        %2833 = sbr.rel (%p2831) target = $region88
      $region87: #{tpu_custom_call.1} parent=5 // pred_region
        %s2834 = ssub.s32 %s22, 2
        // Predicated region
        $region89: #{tpu_custom_call.1} parent=87 // pred_check
          %p2835 = pneg %p287
        $region90: #{tpu_custom_call.1} parent=87 // pred_check_branch
          %2837 = sbr.rel (%p2835) target = $region92
        $region91: #{tpu_custom_call.1} parent=87 // pred_region
          %s2838 = sand.u32 %s272, 1
          %s2839 = scalar_lea.sflag [#allocation6], %s2838
          %s2840 = sand.u32 %s272, 1
          %s2841 = smul.addr %s2840, 8
          %s2842 = scalar_lea.vmem [#allocation12], %s2841
          %2843 = dma.done %s2839, 128
        $region92: #{tpu_custom_call.1} parent=87 // pred_fallthru
          _
      $region88: #{tpu_custom_call.1} parent=5 // pred_fallthru
        _
    $region6: #{tpu_custom_call.1} parent=1 // loop_footer
      %s26 = sadd.s32 1, %s22
    $region7: #{tpu_custom_call.1} parent=1 // loop_footer_branch
      %21 = sbr.rel target = $region3
    $region8: #{tpu_custom_call.1} parent=1 // loop_exit
      _
    %2844 = vsyncpa [#allocation5], 1
    %s2845 = scalar_lea.sflag [#allocation5], 1
    %2846 = vsyncpa %s2845, 1
    %2847 = vsyncpa [#allocation8], 1
    %2848 = vsyncpa [#allocation11], 1
    %2849 = vsyncpa [#allocation6], 1
    %s2850 = scalar_lea.sflag [#allocation6], 1
    %2851 = vsyncpa %s2850, 1

// kernel: tpu_custom_call.1
$region0: #{tpu_custom_call.1}
  #allocation0 [shape = 'u32[]', space=smem, size = 0x4, offset = 0x4, fixed_abs, tag = 'smem constant byte address 0x4 - core index']
  #allocation1 [shape = 'u32[144,128]{1,0:T(1,128)}', space=vmem, size = 0x12000, scoped, tag = 'internal scratch']
  #allocation2 [shape = 'bf16[8,8,4]{2,1,0:T(8,128)(2,1)}', space=vmem, size = 0x4000, scoped, tag = 'scratch operand']
  #allocation3 [shape = 'bf16[8,8,4]{2,1,0:T(8,128)(2,1)}', space=vmem, size = 0x4000, scoped, tag = 'scratch operand']
  %s0 = inlined_call_operand.vmem [shape: f32[2,8,32], index: 0, kind: input, shape index: {}]
  %s1 = inlined_call_operand.vmem [shape: f32[2,8,32], index: 1, kind: input, shape index: {}]
  %s2 = inlined_call_operand.hbm [shape: f32[8,32], index: 2, kind: input, shape index: {}]
  %s3 = inlined_call_operand.vmem [shape: bf16[32,32], index: 3, kind: input, shape index: {}]
  %s4 = inlined_call_operand.hbm [shape: bf16[32,64], index: 4, kind: input, shape index: {}]
  %s5 = inlined_call_operand.vmem [shape: f32[1,64], index: 5, kind: input, shape index: {}]
  %s6 = inlined_call_operand.hbm [shape: bf16[32,32], index: 6, kind: input, shape index: {}]
  %s7 = inlined_call_operand.hbm [shape: bf16[32,64], index: 7, kind: input, shape index: {}]
  %s8 = inlined_call_operand.vmem [shape: f32[1,64], index: 8, kind: input, shape index: {}]
  %s9 = inlined_call_operand.vmem [shape: bf16[64,32], index: 9, kind: input, shape index: {}]
  %s10 = inlined_call_operand.hbm [shape: f32[2,8,32], index: 10, kind: output, shape index: {}]
  %s11 = sld [smem:[#allocation0]]
  $region93: #{tpu_custom_call.1} parent=0
    _
  %s13 = ssub.s32 1, %s11
  %s14 = scalar_select 0, %s13, %s11
  $region1: #{tpu_custom_call.1} parent=0
    #allocation4 [shape = 'u8[4096]{0}', space=vmem, size = 0x1000, scoped, tag = 'input window, operand 2, single buffered']
    #allocation5 [shape = 's32[2]{0}', space=sflag, size = 0x8, scoped, tag = 'scoped memory for tpu_custom_call.1']
    #allocation6 [shape = 's32[2]{0}', space=sflag, size = 0x8, scoped, tag = 'scoped memory for tpu_custom_call.1']
    #allocation7 [shape = 'u8[8192]{0}', space=vmem, size = 0x2000, scoped, tag = 'input window, operand 4, single buffered']
    #allocation8 [shape = 's32[1]{0}', space=sflag, size = 0x4, scoped, tag = 'scoped memory for tpu_custom_call.1']
    #allocation9 [shape = 'u8[8192]{0}', space=vmem, size = 0x2000, scoped, tag = 'input window, operand 6, single buffered']
    #allocation10 [shape = 'u8[8192]{0}', space=vmem, size = 0x2000, scoped, tag = 'input window, operand 7, single buffered']
    #allocation11 [shape = 's32[1]{0}', space=sflag, size = 0x4, scoped, tag = 'scoped memory for tpu_custom_call.1']
    #allocation12 [shape = 'u8[8192]{0}', space=vmem, size = 0x2000, scoped, tag = 'output window, operand 0']
    %15 = vsyncpa [#allocation5], 0
    %16 = vsyncpa [#allocation8], 0
    %17 = vsyncpa [#allocation11], 0
    %18 = vsyncpa [#allocation6], 0
    %s19 = scalar_lea.sflag [#allocation6], 1
    %20 = vsyncpa %s19, 0
    loop: start=0, step=1, limit=4
    $region2: #{tpu_custom_call.1} parent=1 // loop_pre_header
      _
    $region3: #{tpu_custom_call.1} parent=1 // loop_header
      %s22 = sphi 0, %s26
      %p23 = scmp.ge.s32.totalorder %s22, 4
      %s29 = sphi 0, %s41
      %s30 = sphi 0, %s37
      %s31 = sphi 0, %s29
      %s32 = sphi 0, %s30
      %s33 = sphi 0, %s31
      %s34 = sphi 0, %s32
      %s46 = sphi 0, %s48
      %s49 = sphi 0, %s46
      %s50 = sphi 0, %s49
      %s66 = sphi 0, %s50
      %s72 = sphi 0, %s74
      %s75 = sphi 0, %s72
      %s76 = sphi 0, %s75
      %s92 = sphi 0, %s76
      %s96 = sphi 0, %s96
      %s98 = sphi 0, %s96
      %s99 = sphi 0, %s98
      %s113 = sphi 0, %s99
      %s117 = sphi 0, %s117
      %s119 = sphi 0, %s117
      %s120 = sphi 0, %s119
      %s134 = sphi 0, %s120
      %s138 = sphi 0, %s138
      %s140 = sphi 0, %s138
      %s141 = sphi 0, %s140
      %s155 = sphi 0, %s141
      %s159 = sphi 0, %s159
      %s161 = sphi 0, %s159
      %s162 = sphi 0, %s161
      %s176 = sphi 0, %s162
      %s180 = sphi 0, %s180
      %s182 = sphi 0, %s180
      %s183 = sphi 0, %s182
      %s197 = sphi 0, %s183
      %s201 = sphi 0, %s201
      %s203 = sphi 0, %s201
      %s204 = sphi 0, %s203
      %s218 = sphi 0, %s204
      %s222 = sphi 0, %s222
      %s224 = sphi 0, %s222
      %s225 = sphi 0, %s224
      %s239 = sphi 0, %s225
      %s243 = sphi 0, %s243
      %s245 = sphi 0, %s243
      %s246 = sphi 0, %s245
      %s260 = sphi 0, %s246
      %s268 = sphi 0, %s270
      %s271 = sphi 0, %s268
      %s272 = sphi 0, %s271
      %s288 = sphi 0, %s272
    $region4: #{tpu_custom_call.1} parent=1 // loop_header_branch
      %25 = sbr.rel (%p23) target = $region8
    $region5: #{tpu_custom_call.1} parent=1 // loop_body
      %s27 = ssub.s32 %s22, 1
      %s28 = ssub.s32 %s22, 2
      %s35 = sadd.s32 1, %s30
      %p36 = scmp.ge.s32.totalorder %s35, 1
      %s37 = scalar_select %p36, 0, %s35
      %s38 = sadd.s32 1, %s29
      %s39 = scalar_select %p36, %s38, %s29
      %p40 = scmp.ge.s32.totalorder %s39, 2
      %s41 = scalar_select %p40, 0, %s39
      %s42 = ssub.s32 %s29, %s41
      %s43 = ssub.s32 %s30, %s37
      %s44 = sor.u32 %s42, %s43
      %p45 = scmp.eq.s32.totalorder %s44, 0
      %s47 = sadd.s32 %s46, 1
      %s48 = scalar_select %p45, %s46, %s47
      %p51 = pneg %p45
      %p52 = scmp.eq.s32.totalorder %s22, 1
      %p53 = por %p51, %p52
      %p54 = scmp.ne.s32.totalorder %s46, %s49
      %p55 = scmp.eq.s32.totalorder %s22, 0
      %p56 = por %p54, %p55
      %p57 = scmp.ne.s32.totalorder %s46, %s49
      %p58 = scmp.eq.s32.totalorder %s27, 1
      %p59 = por %p57, %p58
      %p60 = scmp.ne.s32.totalorder %s49, %s50
      %p61 = scmp.eq.s32.totalorder %s27, 0
      %p62 = por %p60, %p61
      %p63 = scmp.ne.s32.totalorder %s49, %s50
      %p64 = scmp.eq.s32.totalorder %s28, 1
      %p65 = por %p63, %p64
      %p67 = scmp.ne.s32.totalorder %s50, %s66
      %p68 = scmp.eq.s32.totalorder %s28, 0
      %p69 = por %p67, %p68
      %s70 = ssub.s32 %s29, %s41
      %p71 = scmp.eq.s32.totalorder %s70, 0
      %s73 = sadd.s32 %s72, 1
      %s74 = scalar_select %p71, %s72, %s73
      %p77 = pneg %p71
      %p78 = scmp.eq.s32.totalorder %s22, 1
      %p79 = por %p77, %p78
      %p80 = scmp.ne.s32.totalorder %s72, %s75
      %p81 = scmp.eq.s32.totalorder %s22, 0
      %p82 = por %p80, %p81
      %p83 = scmp.ne.s32.totalorder %s72, %s75
      %p84 = scmp.eq.s32.totalorder %s27, 1
      %p85 = por %p83, %p84
      %p86 = scmp.ne.s32.totalorder %s75, %s76
      %p87 = scmp.eq.s32.totalorder %s27, 0
      %p88 = por %p86, %p87
      %p89 = scmp.ne.s32.totalorder %s75, %s76
      %p90 = scmp.eq.s32.totalorder %s28, 1
      %p91 = por %p89, %p90
      %p93 = scmp.ne.s32.totalorder %s76, %s92
      %p94 = scmp.eq.s32.totalorder %s28, 0
      %p95 = por %p93, %p94
      %s97 = sadd.s32 %s96, 1
      %p100 = scmp.eq.s32.totalorder %s22, 1
      %p101 = scmp.ne.s32.totalorder %s96, %s98
      %p102 = scmp.eq.s32.totalorder %s22, 0
      %p103 = por %p101, %p102
      %p104 = scmp.ne.s32.totalorder %s96, %s98
      %p105 = scmp.eq.s32.totalorder %s27, 1
      %p106 = por %p104, %p105
      %p107 = scmp.ne.s32.totalorder %s98, %s99
      %p108 = scmp.eq.s32.totalorder %s27, 0
      %p109 = por %p107, %p108
      %p110 = scmp.ne.s32.totalorder %s98, %s99
      %p111 = scmp.eq.s32.totalorder %s28, 1
      %p112 = por %p110, %p111
      %p114 = scmp.ne.s32.totalorder %s99, %s113
      %p115 = scmp.eq.s32.totalorder %s28, 0
      %p116 = por %p114, %p115
      %s118 = sadd.s32 %s117, 1
      %p121 = scmp.eq.s32.totalorder %s22, 1
      %p122 = scmp.ne.s32.totalorder %s117, %s119
      %p123 = scmp.eq.s32.totalorder %s22, 0
      %p124 = por %p122, %p123
      %p125 = scmp.ne.s32.totalorder %s117, %s119
      %p126 = scmp.eq.s32.totalorder %s27, 1
      %p127 = por %p125, %p126
      %p128 = scmp.ne.s32.totalorder %s119, %s120
      %p129 = scmp.eq.s32.totalorder %s27, 0
      %p130 = por %p128, %p129
      %p131 = scmp.ne.s32.totalorder %s119, %s120
      %p132 = scmp.eq.s32.totalorder %s28, 1
      %p133 = por %p131, %p132
      %p135 = scmp.ne.s32.totalorder %s120, %s134
      %p136 = scmp.eq.s32.totalorder %s28, 0
      %p137 = por %p135, %p136
      %s139 = sadd.s32 %s138, 1
      %p142 = scmp.eq.s32.totalorder %s22, 1
      %p143 = scmp.ne.s32.totalorder %s138, %s140
      %p144 = scmp.eq.s32.totalorder %s22, 0
      %p145 = por %p143, %p144
      %p146 = scmp.ne.s32.totalorder %s138, %s140
      %p147 = scmp.eq.s32.totalorder %s27, 1
      %p148 = por %p146, %p147
      %p149 = scmp.ne.s32.totalorder %s140, %s141
      %p150 = scmp.eq.s32.totalorder %s27, 0
      %p151 = por %p149, %p150
      %p152 = scmp.ne.s32.totalorder %s140, %s141
      %p153 = scmp.eq.s32.totalorder %s28, 1
      %p154 = por %p152, %p153
      %p156 = scmp.ne.s32.totalorder %s141, %s155
      %p157 = scmp.eq.s32.totalorder %s28, 0
      %p158 = por %p156, %p157
      %s160 = sadd.s32 %s159, 1
      %p163 = scmp.eq.s32.totalorder %s22, 1
      %p164 = scmp.ne.s32.totalorder %s159, %s161
      %p165 = scmp.eq.s32.totalorder %s22, 0
      %p166 = por %p164, %p165
      %p167 = scmp.ne.s32.totalorder %s159, %s161
      %p168 = scmp.eq.s32.totalorder %s27, 1
      %p169 = por %p167, %p168
      %p170 = scmp.ne.s32.totalorder %s161, %s162
      %p171 = scmp.eq.s32.totalorder %s27, 0
      %p172 = por %p170, %p171
      %p173 = scmp.ne.s32.totalorder %s161, %s162
      %p174 = scmp.eq.s32.totalorder %s28, 1
      %p175 = por %p173, %p174
      %p177 = scmp.ne.s32.totalorder %s162, %s176
      %p178 = scmp.eq.s32.totalorder %s28, 0
      %p179 = por %p177, %p178
      %s181 = sadd.s32 %s180, 1
      %p184 = scmp.eq.s32.totalorder %s22, 1
      %p185 = scmp.ne.s32.totalorder %s180, %s182
      %p186 = scmp.eq.s32.totalorder %s22, 0
      %p187 = por %p185, %p186
      %p188 = scmp.ne.s32.totalorder %s180, %s182
      %p189 = scmp.eq.s32.totalorder %s27, 1
      %p190 = por %p188, %p189
      %p191 = scmp.ne.s32.totalorder %s182, %s183
      %p192 = scmp.eq.s32.totalorder %s27, 0
      %p193 = por %p191, %p192
      %p194 = scmp.ne.s32.totalorder %s182, %s183
      %p195 = scmp.eq.s32.totalorder %s28, 1
      %p196 = por %p194, %p195
      %p198 = scmp.ne.s32.totalorder %s183, %s197
      %p199 = scmp.eq.s32.totalorder %s28, 0
      %p200 = por %p198, %p199
      %s202 = sadd.s32 %s201, 1
      %p205 = scmp.eq.s32.totalorder %s22, 1
      %p206 = scmp.ne.s32.totalorder %s201, %s203
      %p207 = scmp.eq.s32.totalorder %s22, 0
      %p208 = por %p206, %p207
      %p209 = scmp.ne.s32.totalorder %s201, %s203
      %p210 = scmp.eq.s32.totalorder %s27, 1
      %p211 = por %p209, %p210
      %p212 = scmp.ne.s32.totalorder %s203, %s204
      %p213 = scmp.eq.s32.totalorder %s27, 0
      %p214 = por %p212, %p213
      %p215 = scmp.ne.s32.totalorder %s203, %s204
      %p216 = scmp.eq.s32.totalorder %s28, 1
      %p217 = por %p215, %p216
      %p219 = scmp.ne.s32.totalorder %s204, %s218
      %p220 = scmp.eq.s32.totalorder %s28, 0
      %p221 = por %p219, %p220
      %s223 = sadd.s32 %s222, 1
      %p226 = scmp.eq.s32.totalorder %s22, 1
      %p227 = scmp.ne.s32.totalorder %s222, %s224
      %p228 = scmp.eq.s32.totalorder %s22, 0
      %p229 = por %p227, %p228
      %p230 = scmp.ne.s32.totalorder %s222, %s224
      %p231 = scmp.eq.s32.totalorder %s27, 1
      %p232 = por %p230, %p231
      %p233 = scmp.ne.s32.totalorder %s224, %s225
      %p234 = scmp.eq.s32.totalorder %s27, 0
      %p235 = por %p233, %p234
      %p236 = scmp.ne.s32.totalorder %s224, %s225
      %p237 = scmp.eq.s32.totalorder %s28, 1
      %p238 = por %p236, %p237
      %p240 = scmp.ne.s32.totalorder %s225, %s239
      %p241 = scmp.eq.s32.totalorder %s28, 0
      %p242 = por %p240, %p241
      %s244 = sadd.s32 %s243, 1
      %p247 = scmp.eq.s32.totalorder %s22, 1
      %p248 = scmp.ne.s32.totalorder %s243, %s245
      %p249 = scmp.eq.s32.totalorder %s22, 0
      %p250 = por %p248, %p249
      %p251 = scmp.ne.s32.totalorder %s243, %s245
      %p252 = scmp.eq.s32.totalorder %s27, 1
      %p253 = por %p251, %p252
      %p254 = scmp.ne.s32.totalorder %s245, %s246
      %p255 = scmp.eq.s32.totalorder %s27, 0
      %p256 = por %p254, %p255
      %p257 = scmp.ne.s32.totalorder %s245, %s246
      %p258 = scmp.eq.s32.totalorder %s28, 1
      %p259 = por %p257, %p258
      %p261 = scmp.ne.s32.totalorder %s246, %s260
      %p262 = scmp.eq.s32.totalorder %s28, 0
      %p263 = por %p261, %p262
      %s264 = ssub.s32 %s29, %s41
      %s265 = ssub.s32 %s30, %s37
      %s266 = sor.u32 %s264, %s265
      %p267 = scmp.eq.s32.totalorder %s266, 0
      %s269 = sadd.s32 %s268, 1
      %s270 = scalar_select %p267, %s268, %s269
      %p273 = pneg %p267
      %p274 = scmp.eq.s32.totalorder %s22, 1
      %p275 = por %p273, %p274
      %p276 = scmp.ne.s32.totalorder %s268, %s271
      %p277 = scmp.eq.s32.totalorder %s22, 0
      %p278 = por %p276, %p277
      %p279 = scmp.ne.s32.totalorder %s268, %s271
      %p280 = scmp.eq.s32.totalorder %s27, 1
      %p281 = por %p279, %p280
      %p282 = scmp.ne.s32.totalorder %s271, %s272
      %p283 = scmp.eq.s32.totalorder %s27, 0
      %p284 = por %p282, %p283
      %p285 = scmp.ne.s32.totalorder %s271, %s272
      %p286 = scmp.eq.s32.totalorder %s28, 1
      %p287 = por %p285, %p286
      %p289 = scmp.ne.s32.totalorder %s272, %s288
      %p290 = scmp.eq.s32.totalorder %s28, 0
      %p291 = por %p289, %p290
      %p292 = scmp.le.s32.totalorder 1, %s22
      %p293 = scmp.lt.s32.totalorder %s22, 3
      %p294 = pnand %p292, %p293
      %p295 = pneg %p294
      // Predicated region
      $region9: #{tpu_custom_call.1} parent=5 // pred_check
        _
      $region10: #{tpu_custom_call.1} parent=5 // pred_check_branch
        %297 = sbr.rel (%p294) target = $region12
      $region11: #{tpu_custom_call.1} parent=5 // pred_region
        %s298 = ssub.s32 %s22, 1
        // Predicated region
        $region13: #{tpu_custom_call.1} parent=11 // pred_check
          %p299 = pneg %p109
        $region14: #{tpu_custom_call.1} parent=11 // pred_check_branch
          %301 = sbr.rel (%p299) target = $region16
        $region15: #{tpu_custom_call.1} parent=11 // pred_region
          %s303 = ssub.s32 128, 128
          %304 = vsyncadd [#allocation5], %s303
          %s306 = sshll.u32 [#allocation4], 4
          %s307 = int_to_ptr.vmem [resolvable:$true] %s306
          %309 = dma.hbm_to_vmem [thread:$0]  %s2, 128, %s307, [#allocation5]
        $region16: #{tpu_custom_call.1} parent=11 // pred_fallthru
          _
        // Predicated region
        $region17: #{tpu_custom_call.1} parent=11 // pred_check
          %p310 = pneg %p130
        $region18: #{tpu_custom_call.1} parent=11 // pred_check_branch
          %312 = sbr.rel (%p310) target = $region20
        $region19: #{tpu_custom_call.1} parent=11 // pred_region
          _
        $region20: #{tpu_custom_call.1} parent=11 // pred_fallthru
          _
        // Predicated region
        $region21: #{tpu_custom_call.1} parent=11 // pred_check
          %p313 = pneg %p151
        $region22: #{tpu_custom_call.1} parent=11 // pred_check_branch
          %315 = sbr.rel (%p313) target = $region24
        $region23: #{tpu_custom_call.1} parent=11 // pred_region
          %s317 = ssub.s32 256, 256
          %318 = vsyncadd [#allocation8], %s317
          %s319 = sshll.u32 [#allocation7], 4
          %s320 = int_to_ptr.vmem [resolvable:$true] %s319
          %325 = dma.hbm_to_vmem [thread:$0]  %s4, 256, %s320, [#allocation8], 64, 64, 4
        $region24: #{tpu_custom_call.1} parent=11 // pred_fallthru
          _
        // Predicated region
        $region25: #{tpu_custom_call.1} parent=11 // pred_check
          %p326 = pneg %p172
        $region26: #{tpu_custom_call.1} parent=11 // pred_check_branch
          %328 = sbr.rel (%p326) target = $region28
        $region27: #{tpu_custom_call.1} parent=11 // pred_region
          _
        $region28: #{tpu_custom_call.1} parent=11 // pred_fallthru
          _
        // Predicated region
        $region29: #{tpu_custom_call.1} parent=11 // pred_check
          %p329 = pneg %p193
        $region30: #{tpu_custom_call.1} parent=11 // pred_check_branch
          %331 = sbr.rel (%p329) target = $region32
        $region31: #{tpu_custom_call.1} parent=11 // pred_region
          %s333 = ssub.s32 256, 256
          %334 = vsyncadd [#allocation8], %s333
          %s335 = sshll.u32 [#allocation9], 4
          %s336 = int_to_ptr.vmem [resolvable:$true] %s335
          %341 = dma.hbm_to_vmem [thread:$0]  %s6, 256, %s336, [#allocation8], 64, 64, 4
        $region32: #{tpu_custom_call.1} parent=11 // pred_fallthru
          _
        // Predicated region
        $region33: #{tpu_custom_call.1} parent=11 // pred_check
          %p342 = pneg %p214
        $region34: #{tpu_custom_call.1} parent=11 // pred_check_branch
          %344 = sbr.rel (%p342) target = $region36
        $region35: #{tpu_custom_call.1} parent=11 // pred_region
          %s346 = ssub.s32 256, 256
          %347 = vsyncadd [#allocation11], %s346
          %s348 = sshll.u32 [#allocation10], 4
          %s349 = int_to_ptr.vmem [resolvable:$true] %s348
          %354 = dma.hbm_to_vmem [thread:$0]  %s7, 256, %s349, [#allocation11], 64, 64, 4
        $region36: #{tpu_custom_call.1} parent=11 // pred_fallthru
          _
        // Predicated region
        $region37: #{tpu_custom_call.1} parent=11 // pred_check
          %p355 = pneg %p235
        $region38: #{tpu_custom_call.1} parent=11 // pred_check_branch
          %357 = sbr.rel (%p355) target = $region40
        $region39: #{tpu_custom_call.1} parent=11 // pred_region
          _
        $region40: #{tpu_custom_call.1} parent=11 // pred_fallthru
          _
        // Predicated region
        $region41: #{tpu_custom_call.1} parent=11 // pred_check
          %p358 = pneg %p256
        $region42: #{tpu_custom_call.1} parent=11 // pred_check_branch
          %360 = sbr.rel (%p358) target = $region44
        $region43: #{tpu_custom_call.1} parent=11 // pred_region
          _
        $region44: #{tpu_custom_call.1} parent=11 // pred_fallthru
          _
      $region12: #{tpu_custom_call.1} parent=5 // pred_fallthru
        _
      %p361 = scmp.lt.s32.totalorder %s22, 2
      // Predicated region
      $region45: #{tpu_custom_call.1} parent=5 // pred_check
        %p362 = pneg %p361
      $region46: #{tpu_custom_call.1} parent=5 // pred_check_branch
        %364 = sbr.rel (%p362) target = $region48
      $region47: #{tpu_custom_call.1} parent=5 // pred_region
        // Predicated region
        $region49: #{tpu_custom_call.1} parent=47 // pred_check
          %p365 = pneg %p56
        $region50: #{tpu_custom_call.1} parent=47 // pred_check_branch
          %367 = sbr.rel (%p365) target = $region52
        $region51: #{tpu_custom_call.1} parent=47 // pred_region
          %p368 = scmp.lt.s32.totalorder %s29, 1
          %s369 = scalar_select %p368, %s29, 1
          %p370 = scmp.lt.s32.totalorder %s30, 0
          %s371 = scalar_select %p370, %s30, 0
          %s372 = sadd.s32 %s371, %s369
          %s373 = smul.addr %s372, 8
          %s374 = scalar_lea.vmem %s0, %s373
        $region52: #{tpu_custom_call.1} parent=47 // pred_fallthru
          _
        // Predicated region
        $region53: #{tpu_custom_call.1} parent=47 // pred_check
          %p375 = pneg %p82
        $region54: #{tpu_custom_call.1} parent=47 // pred_check_branch
          %377 = sbr.rel (%p375) target = $region56
        $region55: #{tpu_custom_call.1} parent=47 // pred_region
          %p378 = scmp.lt.s32.totalorder %s29, 1
          %s379 = scalar_select %p378, %s29, 1
          %s380 = smul.addr %s379, 8
          %s381 = scalar_lea.vmem %s1, %s380
        $region56: #{tpu_custom_call.1} parent=47 // pred_fallthru
          _
      $region48: #{tpu_custom_call.1} parent=5 // pred_fallthru
        _
      %p382 = scmp.le.s32.totalorder 1, %s22
      %p383 = scmp.lt.s32.totalorder %s22, 3
      %p384 = pnand %p382, %p383
      %p385 = pneg %p384
      // Predicated region
      $region57: #{tpu_custom_call.1} parent=5 // pred_check
        _
      $region58: #{tpu_custom_call.1} parent=5 // pred_check_branch
        %387 = sbr.rel (%p384) target = $region60
      $region59: #{tpu_custom_call.1} parent=5 // pred_region
        %s388 = ssub.s32 %s22, 1
        // Predicated region
        $region61: #{tpu_custom_call.1} parent=59 // pred_check
          %p389 = pneg %p109
        $region62: #{tpu_custom_call.1} parent=59 // pred_check_branch
          %391 = sbr.rel (%p389) target = $region64
        $region63: #{tpu_custom_call.1} parent=59 // pred_region
          %392 = dma.done [#allocation5], 128
        $region64: #{tpu_custom_call.1} parent=59 // pred_fallthru
          _
        // Predicated region
        $region65: #{tpu_custom_call.1} parent=59 // pred_check
          %p393 = pneg %p151
        $region66: #{tpu_custom_call.1} parent=59 // pred_check_branch
          %395 = sbr.rel (%p393) target = $region68
        $region67: #{tpu_custom_call.1} parent=59 // pred_region
          %396 = dma.done [#allocation8], 256
        $region68: #{tpu_custom_call.1} parent=59 // pred_fallthru
          _
        // Predicated region
        $region69: #{tpu_custom_call.1} parent=59 // pred_check
          %p397 = pneg %p193
        $region70: #{tpu_custom_call.1} parent=59 // pred_check_branch
          %399 = sbr.rel (%p397) target = $region72
        $region71: #{tpu_custom_call.1} parent=59 // pred_region
          %400 = dma.done [#allocation8], 256
        $region72: #{tpu_custom_call.1} parent=59 // pred_fallthru
          _
        // Predicated region
        $region73: #{tpu_custom_call.1} parent=59 // pred_check
          %p401 = pneg %p214
        $region74: #{tpu_custom_call.1} parent=59 // pred_check_branch
          %403 = sbr.rel (%p401) target = $region76
        $region75: #{tpu_custom_call.1} parent=59 // pred_region
          %404 = dma.done [#allocation11], 256
        $region76: #{tpu_custom_call.1} parent=59 // pred_fallthru
          _
        %p405 = scmp.lt.s32.totalorder %s31, 1
        %s406 = scalar_select %p405, %s31, 1
        %p407 = scmp.lt.s32.totalorder %s32, 0
        %s408 = scalar_select %p407, %s32, 0
        %s409 = sadd.s32 %s408, %s406
        %s410 = smul.addr %s409, 8
        %s411 = scalar_lea.vmem %s0, %s410
        %p412 = pneg %p62
        %p413 = pneg %p59
        %p414 = scmp.lt.s32.totalorder %s31, 1
        %s415 = scalar_select %p414, %s31, 1
        %s416 = smul.addr %s415, 8
        %s417 = scalar_lea.vmem %s1, %s416
        %p418 = pneg %p88
        %p419 = pneg %p85
        %p420 = pneg %p109
        %p421 = pneg %p106
        %p422 = pneg %p130
        %p423 = pneg %p127
        %p424 = pneg %p151
        %p425 = pneg %p148
        %p426 = pneg %p172
        %p427 = pneg %p169
        %p428 = pneg %p193
        %p429 = pneg %p190
        %p430 = pneg %p214
        %p431 = pneg %p211
        %p432 = pneg %p235
        %p433 = pneg %p232
        %p434 = pneg %p256
        %p435 = pneg %p253
        %p436 = pneg %p284
        %p437 = pneg %p281
        %s438 = sand.u32 %s271, 1
        %s439 = scalar_lea.sflag [#allocation6], %s438
        %s440 = sand.u32 %s271, 1
        %s441 = smul.addr %s440, 8
        %s442 = scalar_lea.vmem [#allocation12], %s441
        %p443 = scmp.lt.s32.totalorder %s31, 1
        %s444 = scalar_select %p443, %s31, 1
        %p445 = scmp.lt.s32.totalorder %s32, 0
        %s446 = scalar_select %p445, %s32, 0
        %s447 = sadd.s32 %s446, %s444
        %s448 = smul.addr %s447, 8
        %s449 = scalar_lea.vmem %s0, %s448
        %p450 = scmp.lt.s32.totalorder %s31, 1
        %s451 = scalar_select %p450, %s31, 1
        %s452 = smul.addr %s451, 8
        %s453 = scalar_lea.vmem %s1, %s452
        %v455 = vld [vmem:[%s449] sm:$0xff]
        %v456 = vld [vmem:[#allocation4] sm:$0xff]
        %p457 = scmp.eq.s32.totalorder %s32, 0
        // Predicated region
        $region77: #{tpu_custom_call.1} parent=59 // pred_check
          %p458 = pneg %p457
        $region78: #{tpu_custom_call.1} parent=59 // pred_check_branch
          %460 = sbr.rel (%p458) target = $region80
        $region79: #{tpu_custom_call.1} parent=59 // pred_region
          %v461 = vld [vmem:[%s453] sm:$0xff]
          %vm462 = vcmask 261120
          %v463 = vsel %vm462, %v461, 0.0
          %464 = vadd.xlane.f32.xlu0 %v463
          %v465 = vpop.xlane.xlu0 %464
          %v466 = vrcp.pop 32.0
          %v467 = vmul.f32 %v465, %v466
          %v468 = vsub.f32 %v461, %v467
          %v469 = vmul.f32 %v468, %v468
          %v470 = vsel %vm462, %v469, 0.0
          %471 = vadd.xlane.f32.xlu0 %v470
          %v472 = vpop.xlane.xlu0 %471
          %v473 = vmul.f32 %v472, %v466
          %v474 = vadd.f32 %v473, 1e-05
          %v475 = vrsqrt.pop %v474
          %v476 = vmul.f32 %v468, %v475
          %v477 = vlaneseq
          %v478 = vshrl.u32 %v477, 7
          %v479 = vsub.s32 0, %v478
          %v480 = vrot.slane %v456, %v479
          %v481 = vmul.f32 %v476, %v480
          %v482 = vlaneseq
          %v483 = vshrl.u32 %v482, 7
          %v484 = vsub.s32 1, %v483
          %v485 = vrot.slane %v456, %v484
          %v486 = vadd.f32 %v481, %v485
          %v487 = vpack.c.bf16 %v486, %v486
          %v488 = vld [vmem:[#allocation7] sm:$0xf]
          %v489 = vld [vmem:[#allocation7 + $0x4] sm:$0xf]
          %v490 = vld [vmem:[#allocation7 + $0x8] sm:$0xf]
          %v491 = vld [vmem:[#allocation7 + $0xc] sm:$0xf]
          %v492 = vld [vmem:[%s5] sm:$0x1]
          %v494 = vlaneseq
          %v495 = vshrl.u32 %v494, 7
          %v496 = vsub.s32 0, %v495
          %v497 = vrot.slane %v492, %v496
          %v503 = vunpack.c.l.b16 %v488
          %v504 = vunpack.c.l.b16 %v489
          %v505 = vunpack.c.l.b16 %v490
          %v506 = vunpack.c.l.b16 %v491
          %v507 = vpack.c.b16 %v504, %v503
          %v508 = vpack.c.b16 %v506, %v505
          %v512 = vsel %vm462, %v487, 0
          %514 = vmatprep.subr.bf16.mxu0 0
          %515 = vmatpush1.bf16.msra.mxu0 %v507
          %516 = vmatprep.subr.bf16.mxu0 0
          %517 = vmatpush1.bf16.msra.mxu0 %v508
          %518 = vmatprep.subr.bf16.mxu0 0
          %519 = vmatpush1.bf16.msra.mxu0 0
          %520 = vmatprep.subr.bf16.mxu0 0
          %521 = vmatpush1.bf16.msra.mxu0 0
          %522 = vmatprep.subr.bf16.mxu0 0
          %523 = vmatpush1.bf16.msra.mxu0 0
          %524 = vmatprep.subr.bf16.mxu0 0
          %525 = vmatpush1.bf16.msra.mxu0 0
          %526 = vmatprep.subr.bf16.mxu0 0
          %527 = vmatpush1.bf16.msra.mxu0 0
          %528 = vmatprep.subr.bf16.mxu0 0
          %529 = vmatpush1.bf16.msra.mxu0 0
          %530 = vmatprep.subr.bf16.mxu0 0
          %531 = vmatpush1.bf16.msra.mxu0 0
          %532 = vmatprep.subr.bf16.mxu0 0
          %533 = vmatpush1.bf16.msra.mxu0 0
          %534 = vmatprep.subr.bf16.mxu0 0
          %535 = vmatpush1.bf16.msra.mxu0 0
          %536 = vmatprep.subr.bf16.mxu0 0
          %537 = vmatpush1.bf16.msra.mxu0 0
          %538 = vmatprep.subr.bf16.mxu0 0
          %539 = vmatpush1.bf16.msra.mxu0 0
          %540 = vmatprep.subr.bf16.mxu0 0
          %541 = vmatpush1.bf16.msra.mxu0 0
          %542 = vmatprep.subr.bf16.mxu0 0
          %543 = vmatpush1.bf16.msra.mxu0 0
          %544 = vmatprep.subr.bf16.mxu0 0
          %545 = vmatpush1.bf16.msra.mxu0 0
          %546 = vmatprep.mubr.bf16.mxu0 0
          %547 = vmatmul.mubr.bf16.gmra.mrb[0].mxu0 %v512
          %v548 = vpop.f32.mrb[0].mxu0
          %v549 = vadd.f32 %v497, %v548
          %v550 = vpop.f32.mrb[0].mxu0
          %v551 = vpop.f32.mrb[0].mxu0
          %v552 = vpop.f32.mrb[0].mxu0
          %553 = vdwg.mxu0
          %v554 = vpack.c.bf16 %v549, %v549
          %556 = vrot.lane.b32.xlu0 %v554, 124
          %v557 = vpop.permute.xlu0 %556
          %559 = vrot.lane.b32.xlu0 %v554, 120
          %v560 = vpop.permute.xlu0 %559
          %562 = vrot.lane.b32.xlu0 %v554, 116
          %v563 = vpop.permute.xlu0 %562
          %565 = vrot.lane.b32.xlu0 %v554, 112
          %v566 = vpop.permute.xlu0 %565
          %568 = vrot.lane.b32.xlu0 %v554, 108
          %v569 = vpop.permute.xlu0 %568
          %571 = vrot.lane.b32.xlu0 %v554, 104
          %v572 = vpop.permute.xlu0 %571
          %574 = vrot.lane.b32.xlu0 %v554, 100
          %v575 = vpop.permute.xlu0 %574
          %v577 = vcombine.low %v554, %v566
          %v579 = vunpack.c.l.s4 1983009808
          %v580 = vunpack.c.0.s8 %v579
          %v581 = vlaneseq
          %v582 = vshrl.u32 %v581, 7
          %v583 = vsub.s32 %v580, %v582
          %v584 = vrot.slane %v577, %v583
          %v585 = vcombine.low %v560, %v572
          %v587 = vunpack.c.l.s4 1983009808
          %v588 = vunpack.c.0.s8 %v587
          %v589 = vlaneseq
          %v590 = vshrl.u32 %v589, 7
          %v591 = vsub.s32 %v588, %v590
          %v592 = vrot.slane %v585, %v591
          %v593 = vcombine.low %v584, %v592
          %v594 = vcombine.high %v584, %v592
          %v596 = vunpack.c.l.s4 1934713408
          %v597 = vunpack.c.0.s8 %v596
          %v598 = vlaneseq
          %v599 = vshrl.u32 %v598, 7
          %v600 = vsub.s32 %v597, %v599
          %v601 = vrot.slane %v593, %v600
          %v603 = vunpack.c.l.s4 1934713408
          %v604 = vunpack.c.0.s8 %v603
          %v605 = vlaneseq
          %v606 = vshrl.u32 %v605, 7
          %v607 = vsub.s32 %v604, %v606
          %v608 = vrot.slane %v594, %v607
          %v609 = vcombine.high %v601, 0
          %v610 = vcombine.high %v608, 0
          %v611 = vcombine.low %v557, %v569
          %v613 = vunpack.c.l.s4 1983009808
          %v614 = vunpack.c.0.s8 %v613
          %v615 = vlaneseq
          %v616 = vshrl.u32 %v615, 7
          %v617 = vsub.s32 %v614, %v616
          %v618 = vrot.slane %v611, %v617
          %v619 = vcombine.low %v563, %v575
          %v621 = vunpack.c.l.s4 1983009808
          %v622 = vunpack.c.0.s8 %v621
          %v623 = vlaneseq
          %v624 = vshrl.u32 %v623, 7
          %v625 = vsub.s32 %v622, %v624
          %v626 = vrot.slane %v619, %v625
          %v627 = vcombine.low %v618, %v626
          %v628 = vcombine.high %v618, %v626
          %v630 = vunpack.c.l.s4 1934713408
          %v631 = vunpack.c.0.s8 %v630
          %v632 = vlaneseq
          %v633 = vshrl.u32 %v632, 7
          %v634 = vsub.s32 %v631, %v633
          %v635 = vrot.slane %v627, %v634
          %v637 = vunpack.c.l.s4 1934713408
          %v638 = vunpack.c.0.s8 %v637
          %v639 = vlaneseq
          %v640 = vshrl.u32 %v639, 7
          %v641 = vsub.s32 %v638, %v640
          %v642 = vrot.slane %v628, %v641
          %v643 = vcombine.high %v635, 0
          %v644 = vcombine.high %v642, 0
          %v647 = vpack.i.b16 %v635, %v601
          %v649 = vshrl.u32 %v601, 16
          %v650 = vshrl.u32 %v635, 16
          %v651 = vpack.i.b16 %v650, %v649
          %v655 = vpack.i.b16 %v643, %v609
          %v657 = vshrl.u32 %v609, 16
          %v658 = vshrl.u32 %v643, 16
          %v659 = vpack.i.b16 %v658, %v657
          %v663 = vpack.i.b16 %v642, %v608
          %v665 = vshrl.u32 %v608, 16
          %v666 = vshrl.u32 %v642, 16
          %v667 = vpack.i.b16 %v666, %v665
          %v671 = vpack.i.b16 %v644, %v610
          %v673 = vshrl.u32 %v610, 16
          %v674 = vshrl.u32 %v644, 16
          %v675 = vpack.i.b16 %v674, %v673
          %v677 = vcombine.low %v647, %v663
          %v679 = vunpack.c.l.s4 1983009808
          %v680 = vunpack.c.0.s8 %v679
          %v681 = vlaneseq
          %v682 = vshrl.u32 %v681, 7
          %v683 = vsub.s32 %v680, %v682
          %v684 = vrot.slane %v677, %v683
          %v685 = vcombine.low %v655, %v671
          %v687 = vunpack.c.l.s4 1983009808
          %v688 = vunpack.c.0.s8 %v687
          %v689 = vlaneseq
          %v690 = vshrl.u32 %v689, 7
          %v691 = vsub.s32 %v688, %v690
          %v692 = vrot.slane %v685, %v691
          %v693 = vcombine.low %v684, %v692
          %v694 = vcombine.high %v684, %v692
          %v696 = vunpack.c.l.s4 1934713408
          %v697 = vunpack.c.0.s8 %v696
          %v698 = vlaneseq
          %v699 = vshrl.u32 %v698, 7
          %v700 = vsub.s32 %v697, %v699
          %v701 = vrot.slane %v693, %v700
          %v703 = vunpack.c.l.s4 1934713408
          %v704 = vunpack.c.0.s8 %v703
          %v705 = vlaneseq
          %v706 = vshrl.u32 %v705, 7
          %v707 = vsub.s32 %v704, %v706
          %v708 = vrot.slane %v694, %v707
          %v709 = vcombine.high %v701, 0
          %v710 = vcombine.high %v708, 0
          %v711 = vcombine.low %v651, %v667
          %v713 = vunpack.c.l.s4 1983009808
          %v714 = vunpack.c.0.s8 %v713
          %v715 = vlaneseq
          %v716 = vshrl.u32 %v715, 7
          %v717 = vsub.s32 %v714, %v716
          %v718 = vrot.slane %v711, %v717
          %v719 = vcombine.low %v659, %v675
          %v721 = vunpack.c.l.s4 1983009808
          %v722 = vunpack.c.0.s8 %v721
          %v723 = vlaneseq
          %v724 = vshrl.u32 %v723, 7
          %v725 = vsub.s32 %v722, %v724
          %v726 = vrot.slane %v719, %v725
          %v727 = vcombine.low %v718, %v726
          %v728 = vcombine.high %v718, %v726
          %v730 = vunpack.c.l.s4 1934713408
          %v731 = vunpack.c.0.s8 %v730
          %v732 = vlaneseq
          %v733 = vshrl.u32 %v732, 7
          %v734 = vsub.s32 %v731, %v733
          %v735 = vrot.slane %v727, %v734
          %v737 = vunpack.c.l.s4 1934713408
          %v738 = vunpack.c.0.s8 %v737
          %v739 = vlaneseq
          %v740 = vshrl.u32 %v739, 7
          %v741 = vsub.s32 %v738, %v740
          %v742 = vrot.slane %v728, %v741
          %v743 = vcombine.high %v735, 0
          %v744 = vcombine.high %v742, 0
          %v747 = vpack.i.b16 %v735, %v701
          %v749 = vshrl.u32 %v701, 16
          %v750 = vshrl.u32 %v735, 16
          %v751 = vpack.i.b16 %v750, %v749
          %v755 = vpack.i.b16 %v743, %v709
          %v757 = vshrl.u32 %v709, 16
          %v758 = vshrl.u32 %v743, 16
          %v759 = vpack.i.b16 %v758, %v757
          %v763 = vpack.i.b16 %v742, %v708
          %v765 = vshrl.u32 %v708, 16
          %v766 = vshrl.u32 %v742, 16
          %v767 = vpack.i.b16 %v766, %v765
          %v771 = vpack.i.b16 %v744, %v710
          %v773 = vshrl.u32 %v710, 16
          %v774 = vshrl.u32 %v744, 16
          %v775 = vpack.i.b16 %v774, %v773
          %vm777 = vcmask 27648
          %778 = vst.msk [vmem:[#allocation2] sm:$0xf] %vm777, %v747
          %779 = vst.msk [vmem:[#allocation2 + $0x4] sm:$0xf] %vm777, %v751
          %780 = vst.msk [vmem:[#allocation2 + $0x8] sm:$0xf] %vm777, %v755
          %781 = vst.msk [vmem:[#allocation2 + $0xc] sm:$0xf] %vm777, %v759
          %782 = vst.msk [vmem:[#allocation2 + $0x10] sm:$0xf] %vm777, %v763
          %783 = vst.msk [vmem:[#allocation2 + $0x14] sm:$0xf] %vm777, %v767
          %784 = vst.msk [vmem:[#allocation2 + $0x18] sm:$0xf] %vm777, %v771
          %785 = vst.msk [vmem:[#allocation2 + $0x1c] sm:$0xf] %vm777, %v775
          %786 = vrot.lane.b32.xlu0 %v554, 96
          %v787 = vpop.permute.xlu0 %786
          %788 = vrot.lane.b32.xlu0 %v557, 96
          %v789 = vpop.permute.xlu0 %788
          %790 = vrot.lane.b32.xlu0 %v560, 96
          %v791 = vpop.permute.xlu0 %790
          %792 = vrot.lane.b32.xlu0 %v563, 96
          %v793 = vpop.permute.xlu0 %792
          %794 = vrot.lane.b32.xlu0 %v566, 96
          %v795 = vpop.permute.xlu0 %794
          %796 = vrot.lane.b32.xlu0 %v569, 96
          %v797 = vpop.permute.xlu0 %796
          %798 = vrot.lane.b32.xlu0 %v572, 96
          %v799 = vpop.permute.xlu0 %798
          %800 = vrot.lane.b32.xlu0 %v575, 96
          %v801 = vpop.permute.xlu0 %800
          %v810 = vcombine.low %v787, %v795
          %v812 = vunpack.c.l.s4 1983009808
          %v813 = vunpack.c.0.s8 %v812
          %v814 = vlaneseq
          %v815 = vshrl.u32 %v814, 7
          %v816 = vsub.s32 %v813, %v815
          %v817 = vrot.slane %v810, %v816
          %v818 = vcombine.low %v791, %v799
          %v820 = vunpack.c.l.s4 1983009808
          %v821 = vunpack.c.0.s8 %v820
          %v822 = vlaneseq
          %v823 = vshrl.u32 %v822, 7
          %v824 = vsub.s32 %v821, %v823
          %v825 = vrot.slane %v818, %v824
          %v826 = vcombine.low %v817, %v825
          %v827 = vcombine.high %v817, %v825
          %v829 = vunpack.c.l.s4 1934713408
          %v830 = vunpack.c.0.s8 %v829
          %v831 = vlaneseq
          %v832 = vshrl.u32 %v831, 7
          %v833 = vsub.s32 %v830, %v832
          %v834 = vrot.slane %v826, %v833
          %v836 = vunpack.c.l.s4 1934713408
          %v837 = vunpack.c.0.s8 %v836
          %v838 = vlaneseq
          %v839 = vshrl.u32 %v838, 7
          %v840 = vsub.s32 %v837, %v839
          %v841 = vrot.slane %v827, %v840
          %v842 = vcombine.high %v834, 0
          %v843 = vcombine.high %v841, 0
          %v844 = vcombine.low %v789, %v797
          %v846 = vunpack.c.l.s4 1983009808
          %v847 = vunpack.c.0.s8 %v846
          %v848 = vlaneseq
          %v849 = vshrl.u32 %v848, 7
          %v850 = vsub.s32 %v847, %v849
          %v851 = vrot.slane %v844, %v850
          %v852 = vcombine.low %v793, %v801
          %v854 = vunpack.c.l.s4 1983009808
          %v855 = vunpack.c.0.s8 %v854
          %v856 = vlaneseq
          %v857 = vshrl.u32 %v856, 7
          %v858 = vsub.s32 %v855, %v857
          %v859 = vrot.slane %v852, %v858
          %v860 = vcombine.low %v851, %v859
          %v861 = vcombine.high %v851, %v859
          %v863 = vunpack.c.l.s4 1934713408
          %v864 = vunpack.c.0.s8 %v863
          %v865 = vlaneseq
          %v866 = vshrl.u32 %v865, 7
          %v867 = vsub.s32 %v864, %v866
          %v868 = vrot.slane %v860, %v867
          %v870 = vunpack.c.l.s4 1934713408
          %v871 = vunpack.c.0.s8 %v870
          %v872 = vlaneseq
          %v873 = vshrl.u32 %v872, 7
          %v874 = vsub.s32 %v871, %v873
          %v875 = vrot.slane %v861, %v874
          %v876 = vcombine.high %v868, 0
          %v877 = vcombine.high %v875, 0
          %v880 = vpack.i.b16 %v868, %v834
          %v882 = vshrl.u32 %v834, 16
          %v883 = vshrl.u32 %v868, 16
          %v884 = vpack.i.b16 %v883, %v882
          %v888 = vpack.i.b16 %v876, %v842
          %v890 = vshrl.u32 %v842, 16
          %v891 = vshrl.u32 %v876, 16
          %v892 = vpack.i.b16 %v891, %v890
          %v896 = vpack.i.b16 %v875, %v841
          %v898 = vshrl.u32 %v841, 16
          %v899 = vshrl.u32 %v875, 16
          %v900 = vpack.i.b16 %v899, %v898
          %v904 = vpack.i.b16 %v877, %v843
          %v906 = vshrl.u32 %v843, 16
          %v907 = vshrl.u32 %v877, 16
          %v908 = vpack.i.b16 %v907, %v906
          %v910 = vcombine.low %v880, %v896
          %v912 = vunpack.c.l.s4 1983009808
          %v913 = vunpack.c.0.s8 %v912
          %v914 = vlaneseq
          %v915 = vshrl.u32 %v914, 7
          %v916 = vsub.s32 %v913, %v915
          %v917 = vrot.slane %v910, %v916
          %v918 = vcombine.low %v888, %v904
          %v920 = vunpack.c.l.s4 1983009808
          %v921 = vunpack.c.0.s8 %v920
          %v922 = vlaneseq
          %v923 = vshrl.u32 %v922, 7
          %v924 = vsub.s32 %v921, %v923
          %v925 = vrot.slane %v918, %v924
          %v926 = vcombine.low %v917, %v925
          %v927 = vcombine.high %v917, %v925
          %v929 = vunpack.c.l.s4 1934713408
          %v930 = vunpack.c.0.s8 %v929
          %v931 = vlaneseq
          %v932 = vshrl.u32 %v931, 7
          %v933 = vsub.s32 %v930, %v932
          %v934 = vrot.slane %v926, %v933
          %v936 = vunpack.c.l.s4 1934713408
          %v937 = vunpack.c.0.s8 %v936
          %v938 = vlaneseq
          %v939 = vshrl.u32 %v938, 7
          %v940 = vsub.s32 %v937, %v939
          %v941 = vrot.slane %v927, %v940
          %v942 = vcombine.high %v934, 0
          %v943 = vcombine.high %v941, 0
          %v944 = vcombine.low %v884, %v900
          %v946 = vunpack.c.l.s4 1983009808
          %v947 = vunpack.c.0.s8 %v946
          %v948 = vlaneseq
          %v949 = vshrl.u32 %v948, 7
          %v950 = vsub.s32 %v947, %v949
          %v951 = vrot.slane %v944, %v950
          %v952 = vcombine.low %v892, %v908
          %v954 = vunpack.c.l.s4 1983009808
          %v955 = vunpack.c.0.s8 %v954
          %v956 = vlaneseq
          %v957 = vshrl.u32 %v956, 7
          %v958 = vsub.s32 %v955, %v957
          %v959 = vrot.slane %v952, %v958
          %v960 = vcombine.low %v951, %v959
          %v961 = vcombine.high %v951, %v959
          %v963 = vunpack.c.l.s4 1934713408
          %v964 = vunpack.c.0.s8 %v963
          %v965 = vlaneseq
          %v966 = vshrl.u32 %v965, 7
          %v967 = vsub.s32 %v964, %v966
          %v968 = vrot.slane %v960, %v967
          %v970 = vunpack.c.l.s4 1934713408
          %v971 = vunpack.c.0.s8 %v970
          %v972 = vlaneseq
          %v973 = vshrl.u32 %v972, 7
          %v974 = vsub.s32 %v971, %v973
          %v975 = vrot.slane %v961, %v974
          %v976 = vcombine.high %v968, 0
          %v977 = vcombine.high %v975, 0
          %v980 = vpack.i.b16 %v968, %v934
          %v982 = vshrl.u32 %v934, 16
          %v983 = vshrl.u32 %v968, 16
          %v984 = vpack.i.b16 %v983, %v982
          %v988 = vpack.i.b16 %v976, %v942
          %v990 = vshrl.u32 %v942, 16
          %v991 = vshrl.u32 %v976, 16
          %v992 = vpack.i.b16 %v991, %v990
          %v996 = vpack.i.b16 %v975, %v941
          %v998 = vshrl.u32 %v941, 16
          %v999 = vshrl.u32 %v975, 16
          %v1000 = vpack.i.b16 %v999, %v998
          %v1004 = vpack.i.b16 %v977, %v943
          %v1006 = vshrl.u32 %v943, 16
          %v1007 = vshrl.u32 %v977, 16
          %v1008 = vpack.i.b16 %v1007, %v1006
          %1010 = vst.msk [vmem:[#allocation3] sm:$0xf] %vm777, %v980
          %1011 = vst.msk [vmem:[#allocation3 + $0x4] sm:$0xf] %vm777, %v984
          %1012 = vst.msk [vmem:[#allocation3 + $0x8] sm:$0xf] %vm777, %v988
          %1013 = vst.msk [vmem:[#allocation3 + $0xc] sm:$0xf] %vm777, %v992
          %1014 = vst.msk [vmem:[#allocation3 + $0x10] sm:$0xf] %vm777, %v996
          %1015 = vst.msk [vmem:[#allocation3 + $0x14] sm:$0xf] %vm777, %v1000
          %1016 = vst.msk [vmem:[#allocation3 + $0x18] sm:$0xf] %vm777, %v1004
          %1017 = vst.msk [vmem:[#allocation3 + $0x1c] sm:$0xf] %vm777, %v1008
        $region80: #{tpu_custom_call.1} parent=59 // pred_fallthru
          _
        %v1018 = vld [vmem:[#allocation2] sm:$0xf]
        %v1019 = vld [vmem:[#allocation2 + $0x4] sm:$0xf]
        %v1020 = vld [vmem:[#allocation2 + $0x8] sm:$0xf]
        %v1021 = vld [vmem:[#allocation2 + $0xc] sm:$0xf]
        %v1022 = vld [vmem:[#allocation2 + $0x10] sm:$0xf]
        %v1023 = vld [vmem:[#allocation2 + $0x14] sm:$0xf]
        %v1024 = vld [vmem:[#allocation2 + $0x18] sm:$0xf]
        %v1025 = vld [vmem:[#allocation2 + $0x1c] sm:$0xf]
        %v1026 = vld [vmem:[#allocation3] sm:$0xf]
        %v1027 = vld [vmem:[#allocation3 + $0x4] sm:$0xf]
        %v1028 = vld [vmem:[#allocation3 + $0x8] sm:$0xf]
        %v1029 = vld [vmem:[#allocation3 + $0xc] sm:$0xf]
        %v1030 = vld [vmem:[#allocation3 + $0x10] sm:$0xf]
        %v1031 = vld [vmem:[#allocation3 + $0x14] sm:$0xf]
        %v1032 = vld [vmem:[#allocation3 + $0x18] sm:$0xf]
        %v1033 = vld [vmem:[#allocation3 + $0x1c] sm:$0xf]
        %vm1034 = vcmask 261120
        %v1035 = vsel %vm1034, %v455, 0.0
        %1036 = vadd.xlane.f32.xlu0 %v1035
        %v1037 = vpop.xlane.xlu0 %1036
        %v1038 = vrcp.pop 32.0
        %v1039 = vmul.f32 %v1037, %v1038
        %v1040 = vsub.f32 %v455, %v1039
        %v1041 = vmul.f32 %v1040, %v1040
        %v1042 = vsel %vm1034, %v1041, 0.0
        %1043 = vadd.xlane.f32.xlu0 %v1042
        %v1044 = vpop.xlane.xlu0 %1043
        %v1045 = vmul.f32 %v1044, %v1038
        %v1046 = vadd.f32 %v1045, 1e-05
        %v1047 = vrsqrt.pop %v1046
        %v1048 = vmul.f32 %v1040, %v1047
        %v1049 = vlaneseq
        %v1050 = vshrl.u32 %v1049, 7
        %v1051 = vsub.s32 0, %v1050
        %v1052 = vrot.slane %v456, %v1051
        %v1053 = vmul.f32 %v1048, %v1052
        %v1054 = vlaneseq
        %v1055 = vshrl.u32 %v1054, 7
        %v1056 = vsub.s32 1, %v1055
        %v1057 = vrot.slane %v456, %v1056
        %v1058 = vadd.f32 %v1053, %v1057
        %v1059 = vpack.c.bf16 %v1058, %v1058
        %v1060 = vld [vmem:[%s3] sm:$0xf]
        %v1061 = vld [vmem:[%s3 + $0x4] sm:$0xf]
        %v1062 = vld [vmem:[%s3 + $0x8] sm:$0xf]
        %v1063 = vld [vmem:[%s3 + $0xc] sm:$0xf]
        %v1064 = vlaneseq
        %v1065 = vshrl.u32 %v1064, 7
        %v1066 = vsub.s32 4, %v1065
        %v1067 = vrot.slane %v456, %v1066
        %v1072 = vunpack.c.l.b16 %v1060
        %v1073 = vunpack.c.l.b16 %v1061
        %v1074 = vunpack.c.l.b16 %v1062
        %v1075 = vunpack.c.l.b16 %v1063
        %v1076 = vpack.c.b16 %v1073, %v1072
        %v1077 = vpack.c.b16 %v1075, %v1074
        %v1081 = vsel %vm1034, %v1059, 0
        %1083 = vmatprep.subr.bf16.mxu0 0
        %1084 = vmatpush1.bf16.msra.mxu0 %v1076
        %1085 = vmatprep.subr.bf16.mxu0 0
        %1086 = vmatpush1.bf16.msra.mxu0 %v1077
        %1087 = vmatprep.subr.bf16.mxu0 0
        %1088 = vmatpush1.bf16.msra.mxu0 0
        %1089 = vmatprep.subr.bf16.mxu0 0
        %1090 = vmatpush1.bf16.msra.mxu0 0
        %1091 = vmatprep.subr.bf16.mxu0 0
        %1092 = vmatpush1.bf16.msra.mxu0 0
        %1093 = vmatprep.subr.bf16.mxu0 0
        %1094 = vmatpush1.bf16.msra.mxu0 0
        %1095 = vmatprep.subr.bf16.mxu0 0
        %1096 = vmatpush1.bf16.msra.mxu0 0
        %1097 = vmatprep.subr.bf16.mxu0 0
        %1098 = vmatpush1.bf16.msra.mxu0 0
        %1099 = vmatprep.subr.bf16.mxu0 0
        %1100 = vmatpush1.bf16.msra.mxu0 0
        %1101 = vmatprep.subr.bf16.mxu0 0
        %1102 = vmatpush1.bf16.msra.mxu0 0
        %1103 = vmatprep.subr.bf16.mxu0 0
        %1104 = vmatpush1.bf16.msra.mxu0 0
        %1105 = vmatprep.subr.bf16.mxu0 0
        %1106 = vmatpush1.bf16.msra.mxu0 0
        %1107 = vmatprep.subr.bf16.mxu0 0
        %1108 = vmatpush1.bf16.msra.mxu0 0
        %1109 = vmatprep.subr.bf16.mxu0 0
        %1110 = vmatpush1.bf16.msra.mxu0 0
        %1111 = vmatprep.subr.bf16.mxu0 0
        %1112 = vmatpush1.bf16.msra.mxu0 0
        %1113 = vmatprep.subr.bf16.mxu0 0
        %1114 = vmatpush1.bf16.msra.mxu0 0
        %1115 = vmatprep.mubr.bf16.mxu0 0
        %1116 = vmatmul.mubr.bf16.gmra.mrb[0].mxu0 %v1081
        %v1117 = vpop.f32.mrb[0].mxu0
        %v1118 = vadd.f32 %v1067, %v1117
        %v1119 = vpop.f32.mrb[0].mxu0
        %v1120 = vpop.f32.mrb[0].mxu0
        %v1121 = vpop.f32.mrb[0].mxu0
        %1122 = vdwg.mxu0
        %1124 = vrot.lane.b32.xlu0 %v1118, 124
        %v1125 = vpop.permute.xlu0 %1124
        %1127 = vrot.lane.b32.xlu0 %v1118, 120
        %v1128 = vpop.permute.xlu0 %1127
        %1130 = vrot.lane.b32.xlu0 %v1118, 116
        %v1131 = vpop.permute.xlu0 %1130
        %1133 = vrot.lane.b32.xlu0 %v1118, 112
        %v1134 = vpop.permute.xlu0 %1133
        %1136 = vrot.lane.b32.xlu0 %v1118, 108
        %v1137 = vpop.permute.xlu0 %1136
        %1139 = vrot.lane.b32.xlu0 %v1118, 104
        %v1140 = vpop.permute.xlu0 %1139
        %1142 = vrot.lane.b32.xlu0 %v1118, 100
        %v1143 = vpop.permute.xlu0 %1142
        %v1145 = vcombine.low %v1118, %v1128
        %v1146 = vcombine.high %v1118, %v1128
        %v1148 = vunpack.c.l.s4 1983009808
        %v1149 = vunpack.c.0.s8 %v1148
        %v1150 = vlaneseq
        %v1151 = vshrl.u32 %v1150, 7
        %v1152 = vsub.s32 %v1149, %v1151
        %v1153 = vrot.slane %v1145, %v1152
        %v1155 = vunpack.c.l.s4 1983009808
        %v1156 = vunpack.c.0.s8 %v1155
        %v1157 = vlaneseq
        %v1158 = vshrl.u32 %v1157, 7
        %v1159 = vsub.s32 %v1156, %v1158
        %v1160 = vrot.slane %v1146, %v1159
        %v1161 = vcombine.low %v1125, %v1131
        %v1162 = vcombine.high %v1125, %v1131
        %v1164 = vunpack.c.l.s4 1983009808
        %v1165 = vunpack.c.0.s8 %v1164
        %v1166 = vlaneseq
        %v1167 = vshrl.u32 %v1166, 7
        %v1168 = vsub.s32 %v1165, %v1167
        %v1169 = vrot.slane %v1161, %v1168
        %v1171 = vunpack.c.l.s4 1983009808
        %v1172 = vunpack.c.0.s8 %v1171
        %v1173 = vlaneseq
        %v1174 = vshrl.u32 %v1173, 7
        %v1175 = vsub.s32 %v1172, %v1174
        %v1176 = vrot.slane %v1162, %v1175
        %v1177 = vcombine.low %v1134, %v1140
        %v1178 = vcombine.high %v1134, %v1140
        %v1180 = vunpack.c.l.s4 1983009808
        %v1181 = vunpack.c.0.s8 %v1180
        %v1182 = vlaneseq
        %v1183 = vshrl.u32 %v1182, 7
        %v1184 = vsub.s32 %v1181, %v1183
        %v1185 = vrot.slane %v1177, %v1184
        %v1187 = vunpack.c.l.s4 1983009808
        %v1188 = vunpack.c.0.s8 %v1187
        %v1189 = vlaneseq
        %v1190 = vshrl.u32 %v1189, 7
        %v1191 = vsub.s32 %v1188, %v1190
        %v1192 = vrot.slane %v1178, %v1191
        %v1193 = vcombine.low %v1137, %v1143
        %v1194 = vcombine.high %v1137, %v1143
        %v1196 = vunpack.c.l.s4 1983009808
        %v1197 = vunpack.c.0.s8 %v1196
        %v1198 = vlaneseq
        %v1199 = vshrl.u32 %v1198, 7
        %v1200 = vsub.s32 %v1197, %v1199
        %v1201 = vrot.slane %v1193, %v1200
        %v1203 = vunpack.c.l.s4 1983009808
        %v1204 = vunpack.c.0.s8 %v1203
        %v1205 = vlaneseq
        %v1206 = vshrl.u32 %v1205, 7
        %v1207 = vsub.s32 %v1204, %v1206
        %v1208 = vrot.slane %v1194, %v1207
        %v1209 = vcombine.low %v1153, %v1169
        %v1210 = vcombine.high %v1153, %v1169
        %v1212 = vunpack.c.l.s4 1934713408
        %v1213 = vunpack.c.0.s8 %v1212
        %v1214 = vlaneseq
        %v1215 = vshrl.u32 %v1214, 7
        %v1216 = vsub.s32 %v1213, %v1215
        %v1217 = vrot.slane %v1209, %v1216
        %v1219 = vunpack.c.l.s4 1934713408
        %v1220 = vunpack.c.0.s8 %v1219
        %v1221 = vlaneseq
        %v1222 = vshrl.u32 %v1221, 7
        %v1223 = vsub.s32 %v1220, %v1222
        %v1224 = vrot.slane %v1210, %v1223
        %v1225 = vcombine.low %v1160, %v1176
        %v1226 = vcombine.high %v1160, %v1176
        %v1228 = vunpack.c.l.s4 1934713408
        %v1229 = vunpack.c.0.s8 %v1228
        %v1230 = vlaneseq
        %v1231 = vshrl.u32 %v1230, 7
        %v1232 = vsub.s32 %v1229, %v1231
        %v1233 = vrot.slane %v1225, %v1232
        %v1235 = vunpack.c.l.s4 1934713408
        %v1236 = vunpack.c.0.s8 %v1235
        %v1237 = vlaneseq
        %v1238 = vshrl.u32 %v1237, 7
        %v1239 = vsub.s32 %v1236, %v1238
        %v1240 = vrot.slane %v1226, %v1239
        %v1241 = vcombine.low %v1185, %v1201
        %v1242 = vcombine.high %v1185, %v1201
        %v1244 = vunpack.c.l.s4 1934713408
        %v1245 = vunpack.c.0.s8 %v1244
        %v1246 = vlaneseq
        %v1247 = vshrl.u32 %v1246, 7
        %v1248 = vsub.s32 %v1245, %v1247
        %v1249 = vrot.slane %v1241, %v1248
        %v1251 = vunpack.c.l.s4 1934713408
        %v1252 = vunpack.c.0.s8 %v1251
        %v1253 = vlaneseq
        %v1254 = vshrl.u32 %v1253, 7
        %v1255 = vsub.s32 %v1252, %v1254
        %v1256 = vrot.slane %v1242, %v1255
        %v1257 = vcombine.low %v1192, %v1208
        %v1258 = vcombine.high %v1192, %v1208
        %v1260 = vunpack.c.l.s4 1934713408
        %v1261 = vunpack.c.0.s8 %v1260
        %v1262 = vlaneseq
        %v1263 = vshrl.u32 %v1262, 7
        %v1264 = vsub.s32 %v1261, %v1263
        %v1265 = vrot.slane %v1257, %v1264
        %v1267 = vunpack.c.l.s4 1934713408
        %v1268 = vunpack.c.0.s8 %v1267
        %v1269 = vlaneseq
        %v1270 = vshrl.u32 %v1269, 7
        %v1271 = vsub.s32 %v1268, %v1270
        %v1272 = vrot.slane %v1258, %v1271
        %v1273 = vcombine.low %v1217, %v1249
        %v1274 = vcombine.high %v1217, %v1249
        %v1275 = vcombine.low %v1224, %v1256
        %v1276 = vcombine.high %v1224, %v1256
        %v1277 = vcombine.low %v1233, %v1265
        %v1278 = vcombine.high %v1233, %v1265
        %v1279 = vcombine.low %v1240, %v1272
        %v1280 = vcombine.high %v1240, %v1272
        %v1281 = vcombine.low %v1273, %v1275
        %v1282 = vcombine.high %v1273, %v1275
        %v1284 = vunpack.c.l.s4 1983009808
        %v1285 = vunpack.c.0.s8 %v1284
        %v1286 = vlaneseq
        %v1287 = vshrl.u32 %v1286, 7
        %v1288 = vsub.s32 %v1285, %v1287
        %v1289 = vrot.slane %v1281, %v1288
        %v1291 = vunpack.c.l.s4 1983009808
        %v1292 = vunpack.c.0.s8 %v1291
        %v1293 = vlaneseq
        %v1294 = vshrl.u32 %v1293, 7
        %v1295 = vsub.s32 %v1292, %v1294
        %v1296 = vrot.slane %v1282, %v1295
        %v1297 = vcombine.low %v1274, %v1276
        %v1298 = vcombine.high %v1274, %v1276
        %v1300 = vunpack.c.l.s4 1983009808
        %v1301 = vunpack.c.0.s8 %v1300
        %v1302 = vlaneseq
        %v1303 = vshrl.u32 %v1302, 7
        %v1304 = vsub.s32 %v1301, %v1303
        %v1305 = vrot.slane %v1297, %v1304
        %v1307 = vunpack.c.l.s4 1983009808
        %v1308 = vunpack.c.0.s8 %v1307
        %v1309 = vlaneseq
        %v1310 = vshrl.u32 %v1309, 7
        %v1311 = vsub.s32 %v1308, %v1310
        %v1312 = vrot.slane %v1298, %v1311
        %v1313 = vcombine.low %v1277, %v1279
        %v1314 = vcombine.high %v1277, %v1279
        %v1316 = vunpack.c.l.s4 1983009808
        %v1317 = vunpack.c.0.s8 %v1316
        %v1318 = vlaneseq
        %v1319 = vshrl.u32 %v1318, 7
        %v1320 = vsub.s32 %v1317, %v1319
        %v1321 = vrot.slane %v1313, %v1320
        %v1323 = vunpack.c.l.s4 1983009808
        %v1324 = vunpack.c.0.s8 %v1323
        %v1325 = vlaneseq
        %v1326 = vshrl.u32 %v1325, 7
        %v1327 = vsub.s32 %v1324, %v1326
        %v1328 = vrot.slane %v1314, %v1327
        %v1329 = vcombine.low %v1278, %v1280
        %v1330 = vcombine.high %v1278, %v1280
        %v1332 = vunpack.c.l.s4 1983009808
        %v1333 = vunpack.c.0.s8 %v1332
        %v1334 = vlaneseq
        %v1335 = vshrl.u32 %v1334, 7
        %v1336 = vsub.s32 %v1333, %v1335
        %v1337 = vrot.slane %v1329, %v1336
        %v1339 = vunpack.c.l.s4 1983009808
        %v1340 = vunpack.c.0.s8 %v1339
        %v1341 = vlaneseq
        %v1342 = vshrl.u32 %v1341, 7
        %v1343 = vsub.s32 %v1340, %v1342
        %v1344 = vrot.slane %v1330, %v1343
        %v1345 = vcombine.low %v1289, %v1305
        %v1346 = vcombine.high %v1289, %v1305
        %v1348 = vunpack.c.l.s4 1934713408
        %v1349 = vunpack.c.0.s8 %v1348
        %v1350 = vlaneseq
        %v1351 = vshrl.u32 %v1350, 7
        %v1352 = vsub.s32 %v1349, %v1351
        %v1353 = vrot.slane %v1345, %v1352
        %v1355 = vunpack.c.l.s4 1934713408
        %v1356 = vunpack.c.0.s8 %v1355
        %v1357 = vlaneseq
        %v1358 = vshrl.u32 %v1357, 7
        %v1359 = vsub.s32 %v1356, %v1358
        %v1360 = vrot.slane %v1346, %v1359
        %v1361 = vcombine.low %v1296, %v1312
        %v1362 = vcombine.high %v1296, %v1312
        %v1364 = vunpack.c.l.s4 1934713408
        %v1365 = vunpack.c.0.s8 %v1364
        %v1366 = vlaneseq
        %v1367 = vshrl.u32 %v1366, 7
        %v1368 = vsub.s32 %v1365, %v1367
        %v1369 = vrot.slane %v1361, %v1368
        %v1371 = vunpack.c.l.s4 1934713408
        %v1372 = vunpack.c.0.s8 %v1371
        %v1373 = vlaneseq
        %v1374 = vshrl.u32 %v1373, 7
        %v1375 = vsub.s32 %v1372, %v1374
        %v1376 = vrot.slane %v1362, %v1375
        %v1377 = vcombine.low %v1321, %v1337
        %v1378 = vcombine.high %v1321, %v1337
        %v1380 = vunpack.c.l.s4 1934713408
        %v1381 = vunpack.c.0.s8 %v1380
        %v1382 = vlaneseq
        %v1383 = vshrl.u32 %v1382, 7
        %v1384 = vsub.s32 %v1381, %v1383
        %v1385 = vrot.slane %v1377, %v1384
        %v1387 = vunpack.c.l.s4 1934713408
        %v1388 = vunpack.c.0.s8 %v1387
        %v1389 = vlaneseq
        %v1390 = vshrl.u32 %v1389, 7
        %v1391 = vsub.s32 %v1388, %v1390
        %v1392 = vrot.slane %v1378, %v1391
        %v1393 = vcombine.low %v1328, %v1344
        %v1394 = vcombine.high %v1328, %v1344
        %v1396 = vunpack.c.l.s4 1934713408
        %v1397 = vunpack.c.0.s8 %v1396
        %v1398 = vlaneseq
        %v1399 = vshrl.u32 %v1398, 7
        %v1400 = vsub.s32 %v1397, %v1399
        %v1401 = vrot.slane %v1393, %v1400
        %v1403 = vunpack.c.l.s4 1934713408
        %v1404 = vunpack.c.0.s8 %v1403
        %v1405 = vlaneseq
        %v1406 = vshrl.u32 %v1405, 7
        %v1407 = vsub.s32 %v1404, %v1406
        %v1408 = vrot.slane %v1394, %v1407
        %v1409 = vcombine.low %v1353, %v1385
        %v1410 = vcombine.high %v1353, %v1385
        %v1411 = vcombine.low %v1360, %v1392
        %v1412 = vcombine.high %v1360, %v1392
        %v1413 = vcombine.low %v1369, %v1401
        %v1414 = vcombine.high %v1369, %v1401
        %v1415 = vcombine.low %v1376, %v1408
        %v1416 = vcombine.high %v1376, %v1408
        %v1417 = vpack.c.bf16 %v1409, %v1409
        %v1418 = vpack.c.bf16 %v1410, %v1410
        %v1419 = vpack.c.bf16 %v1411, %v1411
        %v1420 = vpack.c.bf16 %v1412, %v1412
        %v1421 = vpack.c.bf16 %v1413, %v1413
        %v1422 = vpack.c.bf16 %v1414, %v1414
        %v1423 = vpack.c.bf16 %v1415, %v1415
        %v1424 = vpack.c.bf16 %v1416, %v1416
        %vm1425 = vcmask 31744
        %v1427 = vsel %vm1425, %v1417, 0
        %v1430 = vsel %vm1425, %v1018, 0
        %1432 = vmatprep.subr.bf16.mxu0 0
        %1433 = vmatpush1.bf16.xpose.msra.mxu0 %v1430
        %1434 = vmatprep.subr.bf16.mxu0 0
        %1435 = vmatpush1.bf16.xpose.msra.mxu0 0
        %1436 = vmatprep.subr.bf16.mxu0 0
        %1437 = vmatpush1.bf16.xpose.msra.mxu0 0
        %1438 = vmatprep.subr.bf16.mxu0 0
        %1439 = vmatpush1.bf16.xpose.msra.mxu0 0
        %1440 = vmatprep.subr.bf16.mxu0 0
        %1441 = vmatpush1.bf16.xpose.msra.mxu0 0
        %1442 = vmatprep.subr.bf16.mxu0 0
        %1443 = vmatpush1.bf16.xpose.msra.mxu0 0
        %1444 = vmatprep.subr.bf16.mxu0 0
        %1445 = vmatpush1.bf16.xpose.msra.mxu0 0
        %1446 = vmatprep.subr.bf16.mxu0 0
        %1447 = vmatpush1.bf16.xpose.msra.mxu0 0
        %1448 = vmatprep.subr.bf16.mxu0 0
        %1449 = vmatpush1.bf16.xpose.msra.mxu0 0
        %1450 = vmatprep.subr.bf16.mxu0 0
        %1451 = vmatpush1.bf16.xpose.msra.mxu0 0
        %1452 = vmatprep.subr.bf16.mxu0 0
        %1453 = vmatpush1.bf16.xpose.msra.mxu0 0
        %1454 = vmatprep.subr.bf16.mxu0 0
        %1455 = vmatpush1.bf16.xpose.msra.mxu0 0
        %1456 = vmatprep.subr.bf16.mxu0 0
        %1457 = vmatpush1.bf16.xpose.msra.mxu0 0
        %1458 = vmatprep.subr.bf16.mxu0 0
        %1459 = vmatpush1.bf16.xpose.msra.mxu0 0
        %1460 = vmatprep.subr.bf16.mxu0 0
        %1461 = vmatpush1.bf16.xpose.msra.mxu0 0
        %1462 = vmatprep.subr.bf16.mxu0 0
        %1463 = vmatpush1.bf16.xpose.msra.mxu0 0
        %1464 = vmatprep.mubr.bf16.mxu0 0
        %1465 = vmatmul.mubr.bf16.gmra.mrb[0].mxu0 %v1427
        %v1466 = vpop.f32.mrb[0].mxu0
        %v1467 = vadd.f32 0.0, %v1466
        %v1468 = vpop.f32.mrb[0].mxu0
        %v1469 = vpop.f32.mrb[0].mxu0
        %v1470 = vpop.f32.mrb[0].mxu0
        %1471 = vdwg.mxu0
        %v1473 = vsel %vm1425, %v1418, 0
        %v1476 = vsel %vm1425, %v1019, 0
        %1478 = vmatprep.subr.bf16.mxu0 0
        %1479 = vmatpush1.bf16.xpose.msra.mxu0 %v1476
        %1480 = vmatprep.subr.bf16.mxu0 0
        %1481 = vmatpush1.bf16.xpose.msra.mxu0 0
        %1482 = vmatprep.subr.bf16.mxu0 0
        %1483 = vmatpush1.bf16.xpose.msra.mxu0 0
        %1484 = vmatprep.subr.bf16.mxu0 0
        %1485 = vmatpush1.bf16.xpose.msra.mxu0 0
        %1486 = vmatprep.subr.bf16.mxu0 0
        %1487 = vmatpush1.bf16.xpose.msra.mxu0 0
        %1488 = vmatprep.subr.bf16.mxu0 0
        %1489 = vmatpush1.bf16.xpose.msra.mxu0 0
        %1490 = vmatprep.subr.bf16.mxu0 0
        %1491 = vmatpush1.bf16.xpose.msra.mxu0 0
        %1492 = vmatprep.subr.bf16.mxu0 0
        %1493 = vmatpush1.bf16.xpose.msra.mxu0 0
        %1494 = vmatprep.subr.bf16.mxu0 0
        %1495 = vmatpush1.bf16.xpose.msra.mxu0 0
        %1496 = vmatprep.subr.bf16.mxu0 0
        %1497 = vmatpush1.bf16.xpose.msra.mxu0 0
        %1498 = vmatprep.subr.bf16.mxu0 0
        %1499 = vmatpush1.bf16.xpose.msra.mxu0 0
        %1500 = vmatprep.subr.bf16.mxu0 0
        %1501 = vmatpush1.bf16.xpose.msra.mxu0 0
        %1502 = vmatprep.subr.bf16.mxu0 0
        %1503 = vmatpush1.bf16.xpose.msra.mxu0 0
        %1504 = vmatprep.subr.bf16.mxu0 0
        %1505 = vmatpush1.bf16.xpose.msra.mxu0 0
        %1506 = vmatprep.subr.bf16.mxu0 0
        %1507 = vmatpush1.bf16.xpose.msra.mxu0 0
        %1508 = vmatprep.subr.bf16.mxu0 0
        %1509 = vmatpush1.bf16.xpose.msra.mxu0 0
        %1510 = vmatprep.mubr.bf16.mxu0 0
        %1511 = vmatmul.mubr.bf16.gmra.mrb[0].mxu0 %v1473
        %v1512 = vpop.f32.mrb[0].mxu0
        %v1513 = vadd.f32 0.0, %v1512
        %v1514 = vpop.f32.mrb[0].mxu0
        %v1515 = vpop.f32.mrb[0].mxu0
        %v1516 = vpop.f32.mrb[0].mxu0
        %1517 = vdwg.mxu0
        %v1519 = vsel %vm1425, %v1419, 0
        %v1522 = vsel %vm1425, %v1020, 0
        %1524 = vmatprep.subr.bf16.mxu0 0
        %1525 = vmatpush1.bf16.xpose.msra.mxu0 %v1522
        %1526 = vmatprep.subr.bf16.mxu0 0
        %1527 = vmatpush1.bf16.xpose.msra.mxu0 0
        %1528 = vmatprep.subr.bf16.mxu0 0
        %1529 = vmatpush1.bf16.xpose.msra.mxu0 0
        %1530 = vmatprep.subr.bf16.mxu0 0
        %1531 = vmatpush1.bf16.xpose.msra.mxu0 0
        %1532 = vmatprep.subr.bf16.mxu0 0
        %1533 = vmatpush1.bf16.xpose.msra.mxu0 0
        %1534 = vmatprep.subr.bf16.mxu0 0
        %1535 = vmatpush1.bf16.xpose.msra.mxu0 0
        %1536 = vmatprep.subr.bf16.mxu0 0
        %1537 = vmatpush1.bf16.xpose.msra.mxu0 0
        %1538 = vmatprep.subr.bf16.mxu0 0
        %1539 = vmatpush1.bf16.xpose.msra.mxu0 0
        %1540 = vmatprep.subr.bf16.mxu0 0
        %1541 = vmatpush1.bf16.xpose.msra.mxu0 0
        %1542 = vmatprep.subr.bf16.mxu0 0
        %1543 = vmatpush1.bf16.xpose.msra.mxu0 0
        %1544 = vmatprep.subr.bf16.mxu0 0
        %1545 = vmatpush1.bf16.xpose.msra.mxu0 0
        %1546 = vmatprep.subr.bf16.mxu0 0
        %1547 = vmatpush1.bf16.xpose.msra.mxu0 0
        %1548 = vmatprep.subr.bf16.mxu0 0
        %1549 = vmatpush1.bf16.xpose.msra.mxu0 0
        %1550 = vmatprep.subr.bf16.mxu0 0
        %1551 = vmatpush1.bf16.xpose.msra.mxu0 0
        %1552 = vmatprep.subr.bf16.mxu0 0
        %1553 = vmatpush1.bf16.xpose.msra.mxu0 0
        %1554 = vmatprep.subr.bf16.mxu0 0
        %1555 = vmatpush1.bf16.xpose.msra.mxu0 0
        %1556 = vmatprep.mubr.bf16.mxu0 0
        %1557 = vmatmul.mubr.bf16.gmra.mrb[0].mxu0 %v1519
        %v1558 = vpop.f32.mrb[0].mxu0
        %v1559 = vadd.f32 0.0, %v1558
        %v1560 = vpop.f32.mrb[0].mxu0
        %v1561 = vpop.f32.mrb[0].mxu0
        %v1562 = vpop.f32.mrb[0].mxu0
        %1563 = vdwg.mxu0
        %v1565 = vsel %vm1425, %v1420, 0
        %v1568 = vsel %vm1425, %v1021, 0
        %1570 = vmatprep.subr.bf16.mxu0 0
        %1571 = vmatpush1.bf16.xpose.msra.mxu0 %v1568
        %1572 = vmatprep.subr.bf16.mxu0 0
        %1573 = vmatpush1.bf16.xpose.msra.mxu0 0
        %1574 = vmatprep.subr.bf16.mxu0 0
        %1575 = vmatpush1.bf16.xpose.msra.mxu0 0
        %1576 = vmatprep.subr.bf16.mxu0 0
        %1577 = vmatpush1.bf16.xpose.msra.mxu0 0
        %1578 = vmatprep.subr.bf16.mxu0 0
        %1579 = vmatpush1.bf16.xpose.msra.mxu0 0
        %1580 = vmatprep.subr.bf16.mxu0 0
        %1581 = vmatpush1.bf16.xpose.msra.mxu0 0
        %1582 = vmatprep.subr.bf16.mxu0 0
        %1583 = vmatpush1.bf16.xpose.msra.mxu0 0
        %1584 = vmatprep.subr.bf16.mxu0 0
        %1585 = vmatpush1.bf16.xpose.msra.mxu0 0
        %1586 = vmatprep.subr.bf16.mxu0 0
        %1587 = vmatpush1.bf16.xpose.msra.mxu0 0
        %1588 = vmatprep.subr.bf16.mxu0 0
        %1589 = vmatpush1.bf16.xpose.msra.mxu0 0
        %1590 = vmatprep.subr.bf16.mxu0 0
        %1591 = vmatpush1.bf16.xpose.msra.mxu0 0
        %1592 = vmatprep.subr.bf16.mxu0 0
        %1593 = vmatpush1.bf16.xpose.msra.mxu0 0
        %1594 = vmatprep.subr.bf16.mxu0 0
        %1595 = vmatpush1.bf16.xpose.msra.mxu0 0
        %1596 = vmatprep.subr.bf16.mxu0 0
        %1597 = vmatpush1.bf16.xpose.msra.mxu0 0
        %1598 = vmatprep.subr.bf16.mxu0 0
        %1599 = vmatpush1.bf16.xpose.msra.mxu0 0
        %1600 = vmatprep.subr.bf16.mxu0 0
        %1601 = vmatpush1.bf16.xpose.msra.mxu0 0
        %1602 = vmatprep.mubr.bf16.mxu0 0
        %1603 = vmatmul.mubr.bf16.gmra.mrb[0].mxu0 %v1565
        %v1604 = vpop.f32.mrb[0].mxu0
        %v1605 = vadd.f32 0.0, %v1604
        %v1606 = vpop.f32.mrb[0].mxu0
        %v1607 = vpop.f32.mrb[0].mxu0
        %v1608 = vpop.f32.mrb[0].mxu0
        %1609 = vdwg.mxu0
        %v1611 = vsel %vm1425, %v1421, 0
        %v1614 = vsel %vm1425, %v1022, 0
        %1616 = vmatprep.subr.bf16.mxu0 0
        %1617 = vmatpush1.bf16.xpose.msra.mxu0 %v1614
        %1618 = vmatprep.subr.bf16.mxu0 0
        %1619 = vmatpush1.bf16.xpose.msra.mxu0 0
        %1620 = vmatprep.subr.bf16.mxu0 0
        %1621 = vmatpush1.bf16.xpose.msra.mxu0 0
        %1622 = vmatprep.subr.bf16.mxu0 0
        %1623 = vmatpush1.bf16.xpose.msra.mxu0 0
        %1624 = vmatprep.subr.bf16.mxu0 0
        %1625 = vmatpush1.bf16.xpose.msra.mxu0 0
        %1626 = vmatprep.subr.bf16.mxu0 0
        %1627 = vmatpush1.bf16.xpose.msra.mxu0 0
        %1628 = vmatprep.subr.bf16.mxu0 0
        %1629 = vmatpush1.bf16.xpose.msra.mxu0 0
        %1630 = vmatprep.subr.bf16.mxu0 0
        %1631 = vmatpush1.bf16.xpose.msra.mxu0 0
        %1632 = vmatprep.subr.bf16.mxu0 0
        %1633 = vmatpush1.bf16.xpose.msra.mxu0 0
        %1634 = vmatprep.subr.bf16.mxu0 0
        %1635 = vmatpush1.bf16.xpose.msra.mxu0 0
        %1636 = vmatprep.subr.bf16.mxu0 0
        %1637 = vmatpush1.bf16.xpose.msra.mxu0 0
        %1638 = vmatprep.subr.bf16.mxu0 0
        %1639 = vmatpush1.bf16.xpose.msra.mxu0 0
        %1640 = vmatprep.subr.bf16.mxu0 0
        %1641 = vmatpush1.bf16.xpose.msra.mxu0 0
        %1642 = vmatprep.subr.bf16.mxu0 0
        %1643 = vmatpush1.bf16.xpose.msra.mxu0 0
        %1644 = vmatprep.subr.bf16.mxu0 0
        %1645 = vmatpush1.bf16.xpose.msra.mxu0 0
        %1646 = vmatprep.subr.bf16.mxu0 0
        %1647 = vmatpush1.bf16.xpose.msra.mxu0 0
        %1648 = vmatprep.mubr.bf16.mxu0 0
        %1649 = vmatmul.mubr.bf16.gmra.mrb[0].mxu0 %v1611
        %v1650 = vpop.f32.mrb[0].mxu0
        %v1651 = vadd.f32 0.0, %v1650
        %v1652 = vpop.f32.mrb[0].mxu0
        %v1653 = vpop.f32.mrb[0].mxu0
        %v1654 = vpop.f32.mrb[0].mxu0
        %1655 = vdwg.mxu0
        %v1657 = vsel %vm1425, %v1422, 0
        %v1660 = vsel %vm1425, %v1023, 0
        %1662 = vmatprep.subr.bf16.mxu0 0
        %1663 = vmatpush1.bf16.xpose.msra.mxu0 %v1660
        %1664 = vmatprep.subr.bf16.mxu0 0
        %1665 = vmatpush1.bf16.xpose.msra.mxu0 0
        %1666 = vmatprep.subr.bf16.mxu0 0
        %1667 = vmatpush1.bf16.xpose.msra.mxu0 0
        %1668 = vmatprep.subr.bf16.mxu0 0
        %1669 = vmatpush1.bf16.xpose.msra.mxu0 0
        %1670 = vmatprep.subr.bf16.mxu0 0
        %1671 = vmatpush1.bf16.xpose.msra.mxu0 0
        %1672 = vmatprep.subr.bf16.mxu0 0
        %1673 = vmatpush1.bf16.xpose.msra.mxu0 0
        %1674 = vmatprep.subr.bf16.mxu0 0
        %1675 = vmatpush1.bf16.xpose.msra.mxu0 0
        %1676 = vmatprep.subr.bf16.mxu0 0
        %1677 = vmatpush1.bf16.xpose.msra.mxu0 0
        %1678 = vmatprep.subr.bf16.mxu0 0
        %1679 = vmatpush1.bf16.xpose.msra.mxu0 0
        %1680 = vmatprep.subr.bf16.mxu0 0
        %1681 = vmatpush1.bf16.xpose.msra.mxu0 0
        %1682 = vmatprep.subr.bf16.mxu0 0
        %1683 = vmatpush1.bf16.xpose.msra.mxu0 0
        %1684 = vmatprep.subr.bf16.mxu0 0
        %1685 = vmatpush1.bf16.xpose.msra.mxu0 0
        %1686 = vmatprep.subr.bf16.mxu0 0
        %1687 = vmatpush1.bf16.xpose.msra.mxu0 0
        %1688 = vmatprep.subr.bf16.mxu0 0
        %1689 = vmatpush1.bf16.xpose.msra.mxu0 0
        %1690 = vmatprep.subr.bf16.mxu0 0
        %1691 = vmatpush1.bf16.xpose.msra.mxu0 0
        %1692 = vmatprep.subr.bf16.mxu0 0
        %1693 = vmatpush1.bf16.xpose.msra.mxu0 0
        %1694 = vmatprep.mubr.bf16.mxu0 0
        %1695 = vmatmul.mubr.bf16.gmra.mrb[0].mxu0 %v1657
        %v1696 = vpop.f32.mrb[0].mxu0
        %v1697 = vadd.f32 0.0, %v1696
        %v1698 = vpop.f32.mrb[0].mxu0
        %v1699 = vpop.f32.mrb[0].mxu0
        %v1700 = vpop.f32.mrb[0].mxu0
        %1701 = vdwg.mxu0
        %v1703 = vsel %vm1425, %v1423, 0
        %v1706 = vsel %vm1425, %v1024, 0
        %1708 = vmatprep.subr.bf16.mxu0 0
        %1709 = vmatpush1.bf16.xpose.msra.mxu0 %v1706
        %1710 = vmatprep.subr.bf16.mxu0 0
        %1711 = vmatpush1.bf16.xpose.msra.mxu0 0
        %1712 = vmatprep.subr.bf16.mxu0 0
        %1713 = vmatpush1.bf16.xpose.msra.mxu0 0
        %1714 = vmatprep.subr.bf16.mxu0 0
        %1715 = vmatpush1.bf16.xpose.msra.mxu0 0
        %1716 = vmatprep.subr.bf16.mxu0 0
        %1717 = vmatpush1.bf16.xpose.msra.mxu0 0
        %1718 = vmatprep.subr.bf16.mxu0 0
        %1719 = vmatpush1.bf16.xpose.msra.mxu0 0
        %1720 = vmatprep.subr.bf16.mxu0 0
        %1721 = vmatpush1.bf16.xpose.msra.mxu0 0
        %1722 = vmatprep.subr.bf16.mxu0 0
        %1723 = vmatpush1.bf16.xpose.msra.mxu0 0
        %1724 = vmatprep.subr.bf16.mxu0 0
        %1725 = vmatpush1.bf16.xpose.msra.mxu0 0
        %1726 = vmatprep.subr.bf16.mxu0 0
        %1727 = vmatpush1.bf16.xpose.msra.mxu0 0
        %1728 = vmatprep.subr.bf16.mxu0 0
        %1729 = vmatpush1.bf16.xpose.msra.mxu0 0
        %1730 = vmatprep.subr.bf16.mxu0 0
        %1731 = vmatpush1.bf16.xpose.msra.mxu0 0
        %1732 = vmatprep.subr.bf16.mxu0 0
        %1733 = vmatpush1.bf16.xpose.msra.mxu0 0
        %1734 = vmatprep.subr.bf16.mxu0 0
        %1735 = vmatpush1.bf16.xpose.msra.mxu0 0
        %1736 = vmatprep.subr.bf16.mxu0 0
        %1737 = vmatpush1.bf16.xpose.msra.mxu0 0
        %1738 = vmatprep.subr.bf16.mxu0 0
        %1739 = vmatpush1.bf16.xpose.msra.mxu0 0
        %1740 = vmatprep.mubr.bf16.mxu0 0
        %1741 = vmatmul.mubr.bf16.gmra.mrb[0].mxu0 %v1703
        %v1742 = vpop.f32.mrb[0].mxu0
        %v1743 = vadd.f32 0.0, %v1742
        %v1744 = vpop.f32.mrb[0].mxu0
        %v1745 = vpop.f32.mrb[0].mxu0
        %v1746 = vpop.f32.mrb[0].mxu0
        %1747 = vdwg.mxu0
        %v1749 = vsel %vm1425, %v1424, 0
        %v1752 = vsel %vm1425, %v1025, 0
        %1754 = vmatprep.subr.bf16.mxu0 0
        %1755 = vmatpush1.bf16.xpose.msra.mxu0 %v1752
        %1756 = vmatprep.subr.bf16.mxu0 0
        %1757 = vmatpush1.bf16.xpose.msra.mxu0 0
        %1758 = vmatprep.subr.bf16.mxu0 0
        %1759 = vmatpush1.bf16.xpose.msra.mxu0 0
        %1760 = vmatprep.subr.bf16.mxu0 0
        %1761 = vmatpush1.bf16.xpose.msra.mxu0 0
        %1762 = vmatprep.subr.bf16.mxu0 0
        %1763 = vmatpush1.bf16.xpose.msra.mxu0 0
        %1764 = vmatprep.subr.bf16.mxu0 0
        %1765 = vmatpush1.bf16.xpose.msra.mxu0 0
        %1766 = vmatprep.subr.bf16.mxu0 0
        %1767 = vmatpush1.bf16.xpose.msra.mxu0 0
        %1768 = vmatprep.subr.bf16.mxu0 0
        %1769 = vmatpush1.bf16.xpose.msra.mxu0 0
        %1770 = vmatprep.subr.bf16.mxu0 0
        %1771 = vmatpush1.bf16.xpose.msra.mxu0 0
        %1772 = vmatprep.subr.bf16.mxu0 0
        %1773 = vmatpush1.bf16.xpose.msra.mxu0 0
        %1774 = vmatprep.subr.bf16.mxu0 0
        %1775 = vmatpush1.bf16.xpose.msra.mxu0 0
        %1776 = vmatprep.subr.bf16.mxu0 0
        %1777 = vmatpush1.bf16.xpose.msra.mxu0 0
        %1778 = vmatprep.subr.bf16.mxu0 0
        %1779 = vmatpush1.bf16.xpose.msra.mxu0 0
        %1780 = vmatprep.subr.bf16.mxu0 0
        %1781 = vmatpush1.bf16.xpose.msra.mxu0 0
        %1782 = vmatprep.subr.bf16.mxu0 0
        %1783 = vmatpush1.bf16.xpose.msra.mxu0 0
        %1784 = vmatprep.subr.bf16.mxu0 0
        %1785 = vmatpush1.bf16.xpose.msra.mxu0 0
        %1786 = vmatprep.mubr.bf16.mxu0 0
        %1787 = vmatmul.mubr.bf16.gmra.mrb[0].mxu0 %v1749
        %v1788 = vpop.f32.mrb[0].mxu0
        %v1789 = vadd.f32 0.0, %v1788
        %v1790 = vpop.f32.mrb[0].mxu0
        %v1791 = vpop.f32.mrb[0].mxu0
        %v1792 = vpop.f32.mrb[0].mxu0
        %1793 = vdwg.mxu0
        %vm1794 = vcmask 64512
        %v1795 = vsel %vm1794, %v1467, -inf
        %1796 = vmax.xlane.f32.xlu0 %v1795
        %v1797 = vpop.xlane.xlu0 %1796
        %v1798 = vsel %vm1794, %v1513, -inf
        %1799 = vmax.xlane.f32.xlu0 %v1798
        %v1800 = vpop.xlane.xlu0 %1799
        %v1801 = vsel %vm1794, %v1559, -inf
        %1802 = vmax.xlane.f32.xlu0 %v1801
        %v1803 = vpop.xlane.xlu0 %1802
        %v1804 = vsel %vm1794, %v1605, -inf
        %1805 = vmax.xlane.f32.xlu0 %v1804
        %v1806 = vpop.xlane.xlu0 %1805
        %v1807 = vsel %vm1794, %v1651, -inf
        %1808 = vmax.xlane.f32.xlu0 %v1807
        %v1809 = vpop.xlane.xlu0 %1808
        %v1810 = vsel %vm1794, %v1697, -inf
        %1811 = vmax.xlane.f32.xlu0 %v1810
        %v1812 = vpop.xlane.xlu0 %1811
        %v1813 = vsel %vm1794, %v1743, -inf
        %1814 = vmax.xlane.f32.xlu0 %v1813
        %v1815 = vpop.xlane.xlu0 %1814
        %v1816 = vsel %vm1794, %v1789, -inf
        %1817 = vmax.xlane.f32.xlu0 %v1816
        %v1818 = vpop.xlane.xlu0 %1817
        %v1819 = vsub.f32 %v1467, %v1797
        %v1820 = vsub.f32 %v1513, %v1800
        %v1821 = vsub.f32 %v1559, %v1803
        %v1822 = vsub.f32 %v1605, %v1806
        %v1823 = vsub.f32 %v1651, %v1809
        %v1824 = vsub.f32 %v1697, %v1812
        %v1825 = vsub.f32 %v1743, %v1815
        %v1826 = vsub.f32 %v1789, %v1818
        %v1827 = vmul.f32 %v1819, 1.442695
        %v1828 = vpow.pop %v1827
        %v1829 = vmul.f32 %v1820, 1.442695
        %v1830 = vpow.pop %v1829
        %v1831 = vmul.f32 %v1821, 1.442695
        %v1832 = vpow.pop %v1831
        %v1833 = vmul.f32 %v1822, 1.442695
        %v1834 = vpow.pop %v1833
        %v1835 = vmul.f32 %v1823, 1.442695
        %v1836 = vpow.pop %v1835
        %v1837 = vmul.f32 %v1824, 1.442695
        %v1838 = vpow.pop %v1837
        %v1839 = vmul.f32 %v1825, 1.442695
        %v1840 = vpow.pop %v1839
        %v1841 = vmul.f32 %v1826, 1.442695
        %v1842 = vpow.pop %v1841
        %v1843 = vsel %vm1794, %v1828, 0.0
        %1844 = vadd.xlane.f32.xlu0 %v1843
        %v1845 = vpop.xlane.xlu0 %1844
        %v1846 = vsel %vm1794, %v1830, 0.0
        %1847 = vadd.xlane.f32.xlu0 %v1846
        %v1848 = vpop.xlane.xlu0 %1847
        %v1849 = vsel %vm1794, %v1832, 0.0
        %1850 = vadd.xlane.f32.xlu0 %v1849
        %v1851 = vpop.xlane.xlu0 %1850
        %v1852 = vsel %vm1794, %v1834, 0.0
        %1853 = vadd.xlane.f32.xlu0 %v1852
        %v1854 = vpop.xlane.xlu0 %1853
        %v1855 = vsel %vm1794, %v1836, 0.0
        %1856 = vadd.xlane.f32.xlu0 %v1855
        %v1857 = vpop.xlane.xlu0 %1856
        %v1858 = vsel %vm1794, %v1838, 0.0
        %1859 = vadd.xlane.f32.xlu0 %v1858
        %v1860 = vpop.xlane.xlu0 %1859
        %v1861 = vsel %vm1794, %v1840, 0.0
        %1862 = vadd.xlane.f32.xlu0 %v1861
        %v1863 = vpop.xlane.xlu0 %1862
        %v1864 = vsel %vm1794, %v1842, 0.0
        %1865 = vadd.xlane.f32.xlu0 %v1864
        %v1866 = vpop.xlane.xlu0 %1865
        %v1867 = vpack.c.bf16 %v1828, %v1828
        %v1868 = vpack.c.bf16 %v1830, %v1830
        %v1869 = vpack.c.bf16 %v1832, %v1832
        %v1870 = vpack.c.bf16 %v1834, %v1834
        %v1871 = vpack.c.bf16 %v1836, %v1836
        %v1872 = vpack.c.bf16 %v1838, %v1838
        %v1873 = vpack.c.bf16 %v1840, %v1840
        %v1874 = vpack.c.bf16 %v1842, %v1842
        %v1876 = vsel %vm1794, %v1867, 0
        %vm1878 = vcmask 1043456
        %v1880 = vsel %vm1878, %v1026, 0
        %1882 = vmatprep.subr.bf16.mxu0 0
        %1883 = vmatpush1.bf16.msra.mxu0 %v1880
        %1884 = vmatprep.subr.bf16.mxu0 0
        %1885 = vmatpush1.bf16.msra.mxu0 0
        %1886 = vmatprep.subr.bf16.mxu0 0
        %1887 = vmatpush1.bf16.msra.mxu0 0
        %1888 = vmatprep.subr.bf16.mxu0 0
        %1889 = vmatpush1.bf16.msra.mxu0 0
        %1890 = vmatprep.subr.bf16.mxu0 0
        %1891 = vmatpush1.bf16.msra.mxu0 0
        %1892 = vmatprep.subr.bf16.mxu0 0
        %1893 = vmatpush1.bf16.msra.mxu0 0
        %1894 = vmatprep.subr.bf16.mxu0 0
        %1895 = vmatpush1.bf16.msra.mxu0 0
        %1896 = vmatprep.subr.bf16.mxu0 0
        %1897 = vmatpush1.bf16.msra.mxu0 0
        %1898 = vmatprep.subr.bf16.mxu0 0
        %1899 = vmatpush1.bf16.msra.mxu0 0
        %1900 = vmatprep.subr.bf16.mxu0 0
        %1901 = vmatpush1.bf16.msra.mxu0 0
        %1902 = vmatprep.subr.bf16.mxu0 0
        %1903 = vmatpush1.bf16.msra.mxu0 0
        %1904 = vmatprep.subr.bf16.mxu0 0
        %1905 = vmatpush1.bf16.msra.mxu0 0
        %1906 = vmatprep.subr.bf16.mxu0 0
        %1907 = vmatpush1.bf16.msra.mxu0 0
        %1908 = vmatprep.subr.bf16.mxu0 0
        %1909 = vmatpush1.bf16.msra.mxu0 0
        %1910 = vmatprep.subr.bf16.mxu0 0
        %1911 = vmatpush1.bf16.msra.mxu0 0
        %1912 = vmatprep.subr.bf16.mxu0 0
        %1913 = vmatpush1.bf16.msra.mxu0 0
        %1914 = vmatprep.mubr.bf16.mxu0 0
        %1915 = vmatmul.mubr.bf16.gmra.mrb[0].mxu0 %v1876
        %v1916 = vpop.f32.mrb[0].mxu0
        %v1917 = vadd.f32 0.0, %v1916
        %v1918 = vpop.f32.mrb[0].mxu0
        %v1919 = vpop.f32.mrb[0].mxu0
        %v1920 = vpop.f32.mrb[0].mxu0
        %1921 = vdwg.mxu0
        %v1923 = vsel %vm1794, %v1868, 0
        %v1926 = vsel %vm1878, %v1027, 0
        %1928 = vmatprep.subr.bf16.mxu0 0
        %1929 = vmatpush1.bf16.msra.mxu0 %v1926
        %1930 = vmatprep.subr.bf16.mxu0 0
        %1931 = vmatpush1.bf16.msra.mxu0 0
        %1932 = vmatprep.subr.bf16.mxu0 0
        %1933 = vmatpush1.bf16.msra.mxu0 0
        %1934 = vmatprep.subr.bf16.mxu0 0
        %1935 = vmatpush1.bf16.msra.mxu0 0
        %1936 = vmatprep.subr.bf16.mxu0 0
        %1937 = vmatpush1.bf16.msra.mxu0 0
        %1938 = vmatprep.subr.bf16.mxu0 0
        %1939 = vmatpush1.bf16.msra.mxu0 0
        %1940 = vmatprep.subr.bf16.mxu0 0
        %1941 = vmatpush1.bf16.msra.mxu0 0
        %1942 = vmatprep.subr.bf16.mxu0 0
        %1943 = vmatpush1.bf16.msra.mxu0 0
        %1944 = vmatprep.subr.bf16.mxu0 0
        %1945 = vmatpush1.bf16.msra.mxu0 0
        %1946 = vmatprep.subr.bf16.mxu0 0
        %1947 = vmatpush1.bf16.msra.mxu0 0
        %1948 = vmatprep.subr.bf16.mxu0 0
        %1949 = vmatpush1.bf16.msra.mxu0 0
        %1950 = vmatprep.subr.bf16.mxu0 0
        %1951 = vmatpush1.bf16.msra.mxu0 0
        %1952 = vmatprep.subr.bf16.mxu0 0
        %1953 = vmatpush1.bf16.msra.mxu0 0
        %1954 = vmatprep.subr.bf16.mxu0 0
        %1955 = vmatpush1.bf16.msra.mxu0 0
        %1956 = vmatprep.subr.bf16.mxu0 0
        %1957 = vmatpush1.bf16.msra.mxu0 0
        %1958 = vmatprep.subr.bf16.mxu0 0
        %1959 = vmatpush1.bf16.msra.mxu0 0
        %1960 = vmatprep.mubr.bf16.mxu0 0
        %1961 = vmatmul.mubr.bf16.gmra.mrb[0].mxu0 %v1923
        %v1962 = vpop.f32.mrb[0].mxu0
        %v1963 = vadd.f32 0.0, %v1962
        %v1964 = vpop.f32.mrb[0].mxu0
        %v1965 = vpop.f32.mrb[0].mxu0
        %v1966 = vpop.f32.mrb[0].mxu0
        %1967 = vdwg.mxu0
        %v1969 = vsel %vm1794, %v1869, 0
        %v1972 = vsel %vm1878, %v1028, 0
        %1974 = vmatprep.subr.bf16.mxu0 0
        %1975 = vmatpush1.bf16.msra.mxu0 %v1972
        %1976 = vmatprep.subr.bf16.mxu0 0
        %1977 = vmatpush1.bf16.msra.mxu0 0
        %1978 = vmatprep.subr.bf16.mxu0 0
        %1979 = vmatpush1.bf16.msra.mxu0 0
        %1980 = vmatprep.subr.bf16.mxu0 0
        %1981 = vmatpush1.bf16.msra.mxu0 0
        %1982 = vmatprep.subr.bf16.mxu0 0
        %1983 = vmatpush1.bf16.msra.mxu0 0
        %1984 = vmatprep.subr.bf16.mxu0 0
        %1985 = vmatpush1.bf16.msra.mxu0 0
        %1986 = vmatprep.subr.bf16.mxu0 0
        %1987 = vmatpush1.bf16.msra.mxu0 0
        %1988 = vmatprep.subr.bf16.mxu0 0
        %1989 = vmatpush1.bf16.msra.mxu0 0
        %1990 = vmatprep.subr.bf16.mxu0 0
        %1991 = vmatpush1.bf16.msra.mxu0 0
        %1992 = vmatprep.subr.bf16.mxu0 0
        %1993 = vmatpush1.bf16.msra.mxu0 0
        %1994 = vmatprep.subr.bf16.mxu0 0
        %1995 = vmatpush1.bf16.msra.mxu0 0
        %1996 = vmatprep.subr.bf16.mxu0 0
        %1997 = vmatpush1.bf16.msra.mxu0 0
        %1998 = vmatprep.subr.bf16.mxu0 0
        %1999 = vmatpush1.bf16.msra.mxu0 0
        %2000 = vmatprep.subr.bf16.mxu0 0
        %2001 = vmatpush1.bf16.msra.mxu0 0
        %2002 = vmatprep.subr.bf16.mxu0 0
        %2003 = vmatpush1.bf16.msra.mxu0 0
        %2004 = vmatprep.subr.bf16.mxu0 0
        %2005 = vmatpush1.bf16.msra.mxu0 0
        %2006 = vmatprep.mubr.bf16.mxu0 0
        %2007 = vmatmul.mubr.bf16.gmra.mrb[0].mxu0 %v1969
        %v2008 = vpop.f32.mrb[0].mxu0
        %v2009 = vadd.f32 0.0, %v2008
        %v2010 = vpop.f32.mrb[0].mxu0
        %v2011 = vpop.f32.mrb[0].mxu0
        %v2012 = vpop.f32.mrb[0].mxu0
        %2013 = vdwg.mxu0
        %v2015 = vsel %vm1794, %v1870, 0
        %v2018 = vsel %vm1878, %v1029, 0
        %2020 = vmatprep.subr.bf16.mxu0 0
        %2021 = vmatpush1.bf16.msra.mxu0 %v2018
        %2022 = vmatprep.subr.bf16.mxu0 0
        %2023 = vmatpush1.bf16.msra.mxu0 0
        %2024 = vmatprep.subr.bf16.mxu0 0
        %2025 = vmatpush1.bf16.msra.mxu0 0
        %2026 = vmatprep.subr.bf16.mxu0 0
        %2027 = vmatpush1.bf16.msra.mxu0 0
        %2028 = vmatprep.subr.bf16.mxu0 0
        %2029 = vmatpush1.bf16.msra.mxu0 0
        %2030 = vmatprep.subr.bf16.mxu0 0
        %2031 = vmatpush1.bf16.msra.mxu0 0
        %2032 = vmatprep.subr.bf16.mxu0 0
        %2033 = vmatpush1.bf16.msra.mxu0 0
        %2034 = vmatprep.subr.bf16.mxu0 0
        %2035 = vmatpush1.bf16.msra.mxu0 0
        %2036 = vmatprep.subr.bf16.mxu0 0
        %2037 = vmatpush1.bf16.msra.mxu0 0
        %2038 = vmatprep.subr.bf16.mxu0 0
        %2039 = vmatpush1.bf16.msra.mxu0 0
        %2040 = vmatprep.subr.bf16.mxu0 0
        %2041 = vmatpush1.bf16.msra.mxu0 0
        %2042 = vmatprep.subr.bf16.mxu0 0
        %2043 = vmatpush1.bf16.msra.mxu0 0
        %2044 = vmatprep.subr.bf16.mxu0 0
        %2045 = vmatpush1.bf16.msra.mxu0 0
        %2046 = vmatprep.subr.bf16.mxu0 0
        %2047 = vmatpush1.bf16.msra.mxu0 0
        %2048 = vmatprep.subr.bf16.mxu0 0
        %2049 = vmatpush1.bf16.msra.mxu0 0
        %2050 = vmatprep.subr.bf16.mxu0 0
        %2051 = vmatpush1.bf16.msra.mxu0 0
        %2052 = vmatprep.mubr.bf16.mxu0 0
        %2053 = vmatmul.mubr.bf16.gmra.mrb[0].mxu0 %v2015
        %v2054 = vpop.f32.mrb[0].mxu0
        %v2055 = vadd.f32 0.0, %v2054
        %v2056 = vpop.f32.mrb[0].mxu0
        %v2057 = vpop.f32.mrb[0].mxu0
        %v2058 = vpop.f32.mrb[0].mxu0
        %2059 = vdwg.mxu0
        %v2061 = vsel %vm1794, %v1871, 0
        %v2064 = vsel %vm1878, %v1030, 0
        %2066 = vmatprep.subr.bf16.mxu0 0
        %2067 = vmatpush1.bf16.msra.mxu0 %v2064
        %2068 = vmatprep.subr.bf16.mxu0 0
        %2069 = vmatpush1.bf16.msra.mxu0 0
        %2070 = vmatprep.subr.bf16.mxu0 0
        %2071 = vmatpush1.bf16.msra.mxu0 0
        %2072 = vmatprep.subr.bf16.mxu0 0
        %2073 = vmatpush1.bf16.msra.mxu0 0
        %2074 = vmatprep.subr.bf16.mxu0 0
        %2075 = vmatpush1.bf16.msra.mxu0 0
        %2076 = vmatprep.subr.bf16.mxu0 0
        %2077 = vmatpush1.bf16.msra.mxu0 0
        %2078 = vmatprep.subr.bf16.mxu0 0
        %2079 = vmatpush1.bf16.msra.mxu0 0
        %2080 = vmatprep.subr.bf16.mxu0 0
        %2081 = vmatpush1.bf16.msra.mxu0 0
        %2082 = vmatprep.subr.bf16.mxu0 0
        %2083 = vmatpush1.bf16.msra.mxu0 0
        %2084 = vmatprep.subr.bf16.mxu0 0
        %2085 = vmatpush1.bf16.msra.mxu0 0
        %2086 = vmatprep.subr.bf16.mxu0 0
        %2087 = vmatpush1.bf16.msra.mxu0 0
        %2088 = vmatprep.subr.bf16.mxu0 0
        %2089 = vmatpush1.bf16.msra.mxu0 0
        %2090 = vmatprep.subr.bf16.mxu0 0
        %2091 = vmatpush1.bf16.msra.mxu0 0
        %2092 = vmatprep.subr.bf16.mxu0 0
        %2093 = vmatpush1.bf16.msra.mxu0 0
        %2094 = vmatprep.subr.bf16.mxu0 0
        %2095 = vmatpush1.bf16.msra.mxu0 0
        %2096 = vmatprep.subr.bf16.mxu0 0
        %2097 = vmatpush1.bf16.msra.mxu0 0
        %2098 = vmatprep.mubr.bf16.mxu0 0
        %2099 = vmatmul.mubr.bf16.gmra.mrb[0].mxu0 %v2061
        %v2100 = vpop.f32.mrb[0].mxu0
        %v2101 = vadd.f32 0.0, %v2100
        %v2102 = vpop.f32.mrb[0].mxu0
        %v2103 = vpop.f32.mrb[0].mxu0
        %v2104 = vpop.f32.mrb[0].mxu0
        %2105 = vdwg.mxu0
        %v2107 = vsel %vm1794, %v1872, 0
        %v2110 = vsel %vm1878, %v1031, 0
        %2112 = vmatprep.subr.bf16.mxu0 0
        %2113 = vmatpush1.bf16.msra.mxu0 %v2110
        %2114 = vmatprep.subr.bf16.mxu0 0
        %2115 = vmatpush1.bf16.msra.mxu0 0
        %2116 = vmatprep.subr.bf16.mxu0 0
        %2117 = vmatpush1.bf16.msra.mxu0 0
        %2118 = vmatprep.subr.bf16.mxu0 0
        %2119 = vmatpush1.bf16.msra.mxu0 0
        %2120 = vmatprep.subr.bf16.mxu0 0
        %2121 = vmatpush1.bf16.msra.mxu0 0
        %2122 = vmatprep.subr.bf16.mxu0 0
        %2123 = vmatpush1.bf16.msra.mxu0 0
        %2124 = vmatprep.subr.bf16.mxu0 0
        %2125 = vmatpush1.bf16.msra.mxu0 0
        %2126 = vmatprep.subr.bf16.mxu0 0
        %2127 = vmatpush1.bf16.msra.mxu0 0
        %2128 = vmatprep.subr.bf16.mxu0 0
        %2129 = vmatpush1.bf16.msra.mxu0 0
        %2130 = vmatprep.subr.bf16.mxu0 0
        %2131 = vmatpush1.bf16.msra.mxu0 0
        %2132 = vmatprep.subr.bf16.mxu0 0
        %2133 = vmatpush1.bf16.msra.mxu0 0
        %2134 = vmatprep.subr.bf16.mxu0 0
        %2135 = vmatpush1.bf16.msra.mxu0 0
        %2136 = vmatprep.subr.bf16.mxu0 0
        %2137 = vmatpush1.bf16.msra.mxu0 0
        %2138 = vmatprep.subr.bf16.mxu0 0
        %2139 = vmatpush1.bf16.msra.mxu0 0
        %2140 = vmatprep.subr.bf16.mxu0 0
        %2141 = vmatpush1.bf16.msra.mxu0 0
        %2142 = vmatprep.subr.bf16.mxu0 0
        %2143 = vmatpush1.bf16.msra.mxu0 0
        %2144 = vmatprep.mubr.bf16.mxu0 0
        %2145 = vmatmul.mubr.bf16.gmra.mrb[0].mxu0 %v2107
        %v2146 = vpop.f32.mrb[0].mxu0
        %v2147 = vadd.f32 0.0, %v2146
        %v2148 = vpop.f32.mrb[0].mxu0
        %v2149 = vpop.f32.mrb[0].mxu0
        %v2150 = vpop.f32.mrb[0].mxu0
        %2151 = vdwg.mxu0
        %v2153 = vsel %vm1794, %v1873, 0
        %v2156 = vsel %vm1878, %v1032, 0
        %2158 = vmatprep.subr.bf16.mxu0 0
        %2159 = vmatpush1.bf16.msra.mxu0 %v2156
        %2160 = vmatprep.subr.bf16.mxu0 0
        %2161 = vmatpush1.bf16.msra.mxu0 0
        %2162 = vmatprep.subr.bf16.mxu0 0
        %2163 = vmatpush1.bf16.msra.mxu0 0
        %2164 = vmatprep.subr.bf16.mxu0 0
        %2165 = vmatpush1.bf16.msra.mxu0 0
        %2166 = vmatprep.subr.bf16.mxu0 0
        %2167 = vmatpush1.bf16.msra.mxu0 0
        %2168 = vmatprep.subr.bf16.mxu0 0
        %2169 = vmatpush1.bf16.msra.mxu0 0
        %2170 = vmatprep.subr.bf16.mxu0 0
        %2171 = vmatpush1.bf16.msra.mxu0 0
        %2172 = vmatprep.subr.bf16.mxu0 0
        %2173 = vmatpush1.bf16.msra.mxu0 0
        %2174 = vmatprep.subr.bf16.mxu0 0
        %2175 = vmatpush1.bf16.msra.mxu0 0
        %2176 = vmatprep.subr.bf16.mxu0 0
        %2177 = vmatpush1.bf16.msra.mxu0 0
        %2178 = vmatprep.subr.bf16.mxu0 0
        %2179 = vmatpush1.bf16.msra.mxu0 0
        %2180 = vmatprep.subr.bf16.mxu0 0
        %2181 = vmatpush1.bf16.msra.mxu0 0
        %2182 = vmatprep.subr.bf16.mxu0 0
        %2183 = vmatpush1.bf16.msra.mxu0 0
        %2184 = vmatprep.subr.bf16.mxu0 0
        %2185 = vmatpush1.bf16.msra.mxu0 0
        %2186 = vmatprep.subr.bf16.mxu0 0
        %2187 = vmatpush1.bf16.msra.mxu0 0
        %2188 = vmatprep.subr.bf16.mxu0 0
        %2189 = vmatpush1.bf16.msra.mxu0 0
        %2190 = vmatprep.mubr.bf16.mxu0 0
        %2191 = vmatmul.mubr.bf16.gmra.mrb[0].mxu0 %v2153
        %v2192 = vpop.f32.mrb[0].mxu0
        %v2193 = vadd.f32 0.0, %v2192
        %v2194 = vpop.f32.mrb[0].mxu0
        %v2195 = vpop.f32.mrb[0].mxu0
        %v2196 = vpop.f32.mrb[0].mxu0
        %2197 = vdwg.mxu0
        %v2199 = vsel %vm1794, %v1874, 0
        %v2202 = vsel %vm1878, %v1033, 0
        %2204 = vmatprep.subr.bf16.mxu0 0
        %2205 = vmatpush1.bf16.msra.mxu0 %v2202
        %2206 = vmatprep.subr.bf16.mxu0 0
        %2207 = vmatpush1.bf16.msra.mxu0 0
        %2208 = vmatprep.subr.bf16.mxu0 0
        %2209 = vmatpush1.bf16.msra.mxu0 0
        %2210 = vmatprep.subr.bf16.mxu0 0
        %2211 = vmatpush1.bf16.msra.mxu0 0
        %2212 = vmatprep.subr.bf16.mxu0 0
        %2213 = vmatpush1.bf16.msra.mxu0 0
        %2214 = vmatprep.subr.bf16.mxu0 0
        %2215 = vmatpush1.bf16.msra.mxu0 0
        %2216 = vmatprep.subr.bf16.mxu0 0
        %2217 = vmatpush1.bf16.msra.mxu0 0
        %2218 = vmatprep.subr.bf16.mxu0 0
        %2219 = vmatpush1.bf16.msra.mxu0 0
        %2220 = vmatprep.subr.bf16.mxu0 0
        %2221 = vmatpush1.bf16.msra.mxu0 0
        %2222 = vmatprep.subr.bf16.mxu0 0
        %2223 = vmatpush1.bf16.msra.mxu0 0
        %2224 = vmatprep.subr.bf16.mxu0 0
        %2225 = vmatpush1.bf16.msra.mxu0 0
        %2226 = vmatprep.subr.bf16.mxu0 0
        %2227 = vmatpush1.bf16.msra.mxu0 0
        %2228 = vmatprep.subr.bf16.mxu0 0
        %2229 = vmatpush1.bf16.msra.mxu0 0
        %2230 = vmatprep.subr.bf16.mxu0 0
        %2231 = vmatpush1.bf16.msra.mxu0 0
        %2232 = vmatprep.subr.bf16.mxu0 0
        %2233 = vmatpush1.bf16.msra.mxu0 0
        %2234 = vmatprep.subr.bf16.mxu0 0
        %2235 = vmatpush1.bf16.msra.mxu0 0
        %2236 = vmatprep.mubr.bf16.mxu0 0
        %2237 = vmatmul.mubr.bf16.gmra.mrb[0].mxu0 %v2199
        %v2238 = vpop.f32.mrb[0].mxu0
        %v2239 = vadd.f32 0.0, %v2238
        %v2240 = vpop.f32.mrb[0].mxu0
        %v2241 = vpop.f32.mrb[0].mxu0
        %v2242 = vpop.f32.mrb[0].mxu0
        %2243 = vdwg.mxu0
        %v2244 = vrcp.pop %v1845
        %v2245 = vrcp.pop %v1848
        %v2246 = vrcp.pop %v1851
        %v2247 = vrcp.pop %v1854
        %v2248 = vrcp.pop %v1857
        %v2249 = vrcp.pop %v1860
        %v2250 = vrcp.pop %v1863
        %v2251 = vrcp.pop %v1866
        %v2252 = vmul.f32 %v1917, %v2244
        %v2253 = vmul.f32 %v1963, %v2245
        %v2254 = vmul.f32 %v2009, %v2246
        %v2255 = vmul.f32 %v2055, %v2247
        %v2256 = vmul.f32 %v2101, %v2248
        %v2257 = vmul.f32 %v2147, %v2249
        %v2258 = vmul.f32 %v2193, %v2250
        %v2259 = vmul.f32 %v2239, %v2251
        %v2260 = vcombine.low %v2252, %v2254
        %v2261 = vcombine.high %v2252, %v2254
        %v2263 = vunpack.c.l.s4 1983009808
        %v2264 = vunpack.c.0.s8 %v2263
        %v2265 = vlaneseq
        %v2266 = vshrl.u32 %v2265, 7
        %v2267 = vsub.s32 %v2264, %v2266
        %v2268 = vrot.slane %v2260, %v2267
        %v2270 = vunpack.c.l.s4 1983009808
        %v2271 = vunpack.c.0.s8 %v2270
        %v2272 = vlaneseq
        %v2273 = vshrl.u32 %v2272, 7
        %v2274 = vsub.s32 %v2271, %v2273
        %v2275 = vrot.slane %v2261, %v2274
        %v2276 = vcombine.low %v2253, %v2255
        %v2277 = vcombine.high %v2253, %v2255
        %v2279 = vunpack.c.l.s4 1983009808
        %v2280 = vunpack.c.0.s8 %v2279
        %v2281 = vlaneseq
        %v2282 = vshrl.u32 %v2281, 7
        %v2283 = vsub.s32 %v2280, %v2282
        %v2284 = vrot.slane %v2276, %v2283
        %v2286 = vunpack.c.l.s4 1983009808
        %v2287 = vunpack.c.0.s8 %v2286
        %v2288 = vlaneseq
        %v2289 = vshrl.u32 %v2288, 7
        %v2290 = vsub.s32 %v2287, %v2289
        %v2291 = vrot.slane %v2277, %v2290
        %v2292 = vcombine.low %v2256, %v2258
        %v2293 = vcombine.high %v2256, %v2258
        %v2295 = vunpack.c.l.s4 1983009808
        %v2296 = vunpack.c.0.s8 %v2295
        %v2297 = vlaneseq
        %v2298 = vshrl.u32 %v2297, 7
        %v2299 = vsub.s32 %v2296, %v2298
        %v2300 = vrot.slane %v2292, %v2299
        %v2302 = vunpack.c.l.s4 1983009808
        %v2303 = vunpack.c.0.s8 %v2302
        %v2304 = vlaneseq
        %v2305 = vshrl.u32 %v2304, 7
        %v2306 = vsub.s32 %v2303, %v2305
        %v2307 = vrot.slane %v2293, %v2306
        %v2308 = vcombine.low %v2257, %v2259
        %v2309 = vcombine.high %v2257, %v2259
        %v2311 = vunpack.c.l.s4 1983009808
        %v2312 = vunpack.c.0.s8 %v2311
        %v2313 = vlaneseq
        %v2314 = vshrl.u32 %v2313, 7
        %v2315 = vsub.s32 %v2312, %v2314
        %v2316 = vrot.slane %v2308, %v2315
        %v2318 = vunpack.c.l.s4 1983009808
        %v2319 = vunpack.c.0.s8 %v2318
        %v2320 = vlaneseq
        %v2321 = vshrl.u32 %v2320, 7
        %v2322 = vsub.s32 %v2319, %v2321
        %v2323 = vrot.slane %v2309, %v2322
        %v2324 = vcombine.low %v2268, %v2284
        %v2325 = vcombine.high %v2268, %v2284
        %v2327 = vunpack.c.l.s4 1934713408
        %v2328 = vunpack.c.0.s8 %v2327
        %v2329 = vlaneseq
        %v2330 = vshrl.u32 %v2329, 7
        %v2331 = vsub.s32 %v2328, %v2330
        %v2332 = vrot.slane %v2324, %v2331
        %v2334 = vunpack.c.l.s4 1934713408
        %v2335 = vunpack.c.0.s8 %v2334
        %v2336 = vlaneseq
        %v2337 = vshrl.u32 %v2336, 7
        %v2338 = vsub.s32 %v2335, %v2337
        %v2339 = vrot.slane %v2325, %v2338
        %v2340 = vcombine.low %v2275, %v2291
        %v2341 = vcombine.high %v2275, %v2291
        %v2343 = vunpack.c.l.s4 1934713408
        %v2344 = vunpack.c.0.s8 %v2343
        %v2345 = vlaneseq
        %v2346 = vshrl.u32 %v2345, 7
        %v2347 = vsub.s32 %v2344, %v2346
        %v2348 = vrot.slane %v2340, %v2347
        %v2350 = vunpack.c.l.s4 1934713408
        %v2351 = vunpack.c.0.s8 %v2350
        %v2352 = vlaneseq
        %v2353 = vshrl.u32 %v2352, 7
        %v2354 = vsub.s32 %v2351, %v2353
        %v2355 = vrot.slane %v2341, %v2354
        %v2356 = vcombine.low %v2300, %v2316
        %v2357 = vcombine.high %v2300, %v2316
        %v2359 = vunpack.c.l.s4 1934713408
        %v2360 = vunpack.c.0.s8 %v2359
        %v2361 = vlaneseq
        %v2362 = vshrl.u32 %v2361, 7
        %v2363 = vsub.s32 %v2360, %v2362
        %v2364 = vrot.slane %v2356, %v2363
        %v2366 = vunpack.c.l.s4 1934713408
        %v2367 = vunpack.c.0.s8 %v2366
        %v2368 = vlaneseq
        %v2369 = vshrl.u32 %v2368, 7
        %v2370 = vsub.s32 %v2367, %v2369
        %v2371 = vrot.slane %v2357, %v2370
        %v2372 = vcombine.low %v2307, %v2323
        %v2373 = vcombine.high %v2307, %v2323
        %v2375 = vunpack.c.l.s4 1934713408
        %v2376 = vunpack.c.0.s8 %v2375
        %v2377 = vlaneseq
        %v2378 = vshrl.u32 %v2377, 7
        %v2379 = vsub.s32 %v2376, %v2378
        %v2380 = vrot.slane %v2372, %v2379
        %v2382 = vunpack.c.l.s4 1934713408
        %v2383 = vunpack.c.0.s8 %v2382
        %v2384 = vlaneseq
        %v2385 = vshrl.u32 %v2384, 7
        %v2386 = vsub.s32 %v2383, %v2385
        %v2387 = vrot.slane %v2373, %v2386
        %v2388 = vcombine.low %v2332, %v2364
        %v2389 = vcombine.high %v2332, %v2364
        %v2390 = vcombine.low %v2339, %v2371
        %v2391 = vcombine.high %v2339, %v2371
        %v2392 = vcombine.low %v2348, %v2380
        %v2393 = vcombine.high %v2348, %v2380
        %v2394 = vcombine.low %v2355, %v2387
        %v2395 = vcombine.high %v2355, %v2387
        %v2396 = vcombine.low %v2388, %v2390
        %v2397 = vcombine.high %v2388, %v2390
        %v2399 = vunpack.c.l.s4 1983009808
        %v2400 = vunpack.c.0.s8 %v2399
        %v2401 = vlaneseq
        %v2402 = vshrl.u32 %v2401, 7
        %v2403 = vsub.s32 %v2400, %v2402
        %v2404 = vrot.slane %v2396, %v2403
        %v2406 = vunpack.c.l.s4 1983009808
        %v2407 = vunpack.c.0.s8 %v2406
        %v2408 = vlaneseq
        %v2409 = vshrl.u32 %v2408, 7
        %v2410 = vsub.s32 %v2407, %v2409
        %v2411 = vrot.slane %v2397, %v2410
        %v2412 = vcombine.low %v2389, %v2391
        %v2413 = vcombine.high %v2389, %v2391
        %v2415 = vunpack.c.l.s4 1983009808
        %v2416 = vunpack.c.0.s8 %v2415
        %v2417 = vlaneseq
        %v2418 = vshrl.u32 %v2417, 7
        %v2419 = vsub.s32 %v2416, %v2418
        %v2420 = vrot.slane %v2412, %v2419
        %v2422 = vunpack.c.l.s4 1983009808
        %v2423 = vunpack.c.0.s8 %v2422
        %v2424 = vlaneseq
        %v2425 = vshrl.u32 %v2424, 7
        %v2426 = vsub.s32 %v2423, %v2425
        %v2427 = vrot.slane %v2413, %v2426
        %v2428 = vcombine.low %v2392, %v2394
        %v2429 = vcombine.high %v2392, %v2394
        %v2431 = vunpack.c.l.s4 1983009808
        %v2432 = vunpack.c.0.s8 %v2431
        %v2433 = vlaneseq
        %v2434 = vshrl.u32 %v2433, 7
        %v2435 = vsub.s32 %v2432, %v2434
        %v2436 = vrot.slane %v2428, %v2435
        %v2438 = vunpack.c.l.s4 1983009808
        %v2439 = vunpack.c.0.s8 %v2438
        %v2440 = vlaneseq
        %v2441 = vshrl.u32 %v2440, 7
        %v2442 = vsub.s32 %v2439, %v2441
        %v2443 = vrot.slane %v2429, %v2442
        %v2444 = vcombine.low %v2393, %v2395
        %v2445 = vcombine.high %v2393, %v2395
        %v2447 = vunpack.c.l.s4 1983009808
        %v2448 = vunpack.c.0.s8 %v2447
        %v2449 = vlaneseq
        %v2450 = vshrl.u32 %v2449, 7
        %v2451 = vsub.s32 %v2448, %v2450
        %v2452 = vrot.slane %v2444, %v2451
        %v2454 = vunpack.c.l.s4 1983009808
        %v2455 = vunpack.c.0.s8 %v2454
        %v2456 = vlaneseq
        %v2457 = vshrl.u32 %v2456, 7
        %v2458 = vsub.s32 %v2455, %v2457
        %v2459 = vrot.slane %v2445, %v2458
        %v2460 = vcombine.low %v2404, %v2420
        %v2461 = vcombine.high %v2404, %v2420
        %v2463 = vunpack.c.l.s4 1934713408
        %v2464 = vunpack.c.0.s8 %v2463
        %v2465 = vlaneseq
        %v2466 = vshrl.u32 %v2465, 7
        %v2467 = vsub.s32 %v2464, %v2466
        %v2468 = vrot.slane %v2460, %v2467
        %v2470 = vunpack.c.l.s4 1934713408
        %v2471 = vunpack.c.0.s8 %v2470
        %v2472 = vlaneseq
        %v2473 = vshrl.u32 %v2472, 7
        %v2474 = vsub.s32 %v2471, %v2473
        %v2475 = vrot.slane %v2461, %v2474
        %v2476 = vcombine.low %v2411, %v2427
        %v2477 = vcombine.high %v2411, %v2427
        %v2479 = vunpack.c.l.s4 1934713408
        %v2480 = vunpack.c.0.s8 %v2479
        %v2481 = vlaneseq
        %v2482 = vshrl.u32 %v2481, 7
        %v2483 = vsub.s32 %v2480, %v2482
        %v2484 = vrot.slane %v2476, %v2483
        %v2486 = vunpack.c.l.s4 1934713408
        %v2487 = vunpack.c.0.s8 %v2486
        %v2488 = vlaneseq
        %v2489 = vshrl.u32 %v2488, 7
        %v2490 = vsub.s32 %v2487, %v2489
        %v2491 = vrot.slane %v2477, %v2490
        %v2492 = vcombine.low %v2436, %v2452
        %v2493 = vcombine.high %v2436, %v2452
        %v2495 = vunpack.c.l.s4 1934713408
        %v2496 = vunpack.c.0.s8 %v2495
        %v2497 = vlaneseq
        %v2498 = vshrl.u32 %v2497, 7
        %v2499 = vsub.s32 %v2496, %v2498
        %v2500 = vrot.slane %v2492, %v2499
        %v2502 = vunpack.c.l.s4 1934713408
        %v2503 = vunpack.c.0.s8 %v2502
        %v2504 = vlaneseq
        %v2505 = vshrl.u32 %v2504, 7
        %v2506 = vsub.s32 %v2503, %v2505
        %v2507 = vrot.slane %v2493, %v2506
        %v2508 = vcombine.low %v2443, %v2459
        %v2509 = vcombine.high %v2443, %v2459
        %v2511 = vunpack.c.l.s4 1934713408
        %v2512 = vunpack.c.0.s8 %v2511
        %v2513 = vlaneseq
        %v2514 = vshrl.u32 %v2513, 7
        %v2515 = vsub.s32 %v2512, %v2514
        %v2516 = vrot.slane %v2508, %v2515
        %v2518 = vunpack.c.l.s4 1934713408
        %v2519 = vunpack.c.0.s8 %v2518
        %v2520 = vlaneseq
        %v2521 = vshrl.u32 %v2520, 7
        %v2522 = vsub.s32 %v2519, %v2521
        %v2523 = vrot.slane %v2509, %v2522
        %v2524 = vcombine.low %v2468, %v2500
        %v2525 = vcombine.high %v2468, %v2500
        %v2526 = vcombine.low %v2475, %v2507
        %v2527 = vcombine.high %v2475, %v2507
        %v2528 = vcombine.low %v2484, %v2516
        %v2529 = vcombine.high %v2484, %v2516
        %v2530 = vcombine.low %v2491, %v2523
        %v2531 = vcombine.high %v2491, %v2523
        %2533 = vrot.lane.b32.xlu0 %v2525, 4
        %v2534 = vpop.permute.xlu0 %2533
        %2537 = vrot.lane.b32.xlu0 %v2526, 8
        %v2538 = vpop.permute.xlu0 %2537
        %2541 = vrot.lane.b32.xlu0 %v2527, 12
        %v2542 = vpop.permute.xlu0 %2541
        %2545 = vrot.lane.b32.xlu0 %v2528, 16
        %v2546 = vpop.permute.xlu0 %2545
        %2549 = vrot.lane.b32.xlu0 %v2529, 20
        %v2550 = vpop.permute.xlu0 %2549
        %2553 = vrot.lane.b32.xlu0 %v2530, 24
        %v2554 = vpop.permute.xlu0 %2553
        %2557 = vrot.lane.b32.xlu0 %v2531, 28
        %v2558 = vpop.permute.xlu0 %2557
        %v2560 = vsel %vm1425, %v2524, %v2534
        %v2561 = vsel %vm1794, %v2560, %v2538
        %vm2562 = vcmask 97280
        %v2563 = vsel %vm2562, %v2561, %v2542
        %vm2564 = vcmask 130048
        %v2565 = vsel %vm2564, %v2563, %v2546
        %vm2566 = vcmask 162816
        %v2567 = vsel %vm2566, %v2565, %v2550
        %vm2568 = vcmask 195584
        %v2569 = vsel %vm2568, %v2567, %v2554
        %vm2570 = vcmask 228352
        %v2571 = vsel %vm2570, %v2569, %v2558
        %v2572 = vpack.c.bf16 %v2571, %v2571
        %v2573 = vld [vmem:[#allocation9] sm:$0xf]
        %v2574 = vld [vmem:[#allocation9 + $0x4] sm:$0xf]
        %v2575 = vld [vmem:[#allocation9 + $0x8] sm:$0xf]
        %v2576 = vld [vmem:[#allocation9 + $0xc] sm:$0xf]
        %v2577 = vlaneseq
        %v2578 = vshrl.u32 %v2577, 7
        %v2579 = vsub.s32 5, %v2578
        %v2580 = vrot.slane %v456, %v2579
        %v2585 = vunpack.c.l.b16 %v2573
        %v2586 = vunpack.c.l.b16 %v2574
        %v2587 = vunpack.c.l.b16 %v2575
        %v2588 = vunpack.c.l.b16 %v2576
        %v2589 = vpack.c.b16 %v2586, %v2585
        %v2590 = vpack.c.b16 %v2588, %v2587
        %v2594 = vsel %vm1034, %v2572, 0
        %2596 = vmatprep.subr.bf16.mxu0 0
        %2597 = vmatpush1.bf16.msra.mxu0 %v2589
        %2598 = vmatprep.subr.bf16.mxu0 0
        %2599 = vmatpush1.bf16.msra.mxu0 %v2590
        %2600 = vmatprep.subr.bf16.mxu0 0
        %2601 = vmatpush1.bf16.msra.mxu0 0
        %2602 = vmatprep.subr.bf16.mxu0 0
        %2603 = vmatpush1.bf16.msra.mxu0 0
        %2604 = vmatprep.subr.bf16.mxu0 0
        %2605 = vmatpush1.bf16.msra.mxu0 0
        %2606 = vmatprep.subr.bf16.mxu0 0
        %2607 = vmatpush1.bf16.msra.mxu0 0
        %2608 = vmatprep.subr.bf16.mxu0 0
        %2609 = vmatpush1.bf16.msra.mxu0 0
        %2610 = vmatprep.subr.bf16.mxu0 0
        %2611 = vmatpush1.bf16.msra.mxu0 0
        %2612 = vmatprep.subr.bf16.mxu0 0
        %2613 = vmatpush1.bf16.msra.mxu0 0
        %2614 = vmatprep.subr.bf16.mxu0 0
        %2615 = vmatpush1.bf16.msra.mxu0 0
        %2616 = vmatprep.subr.bf16.mxu0 0
        %2617 = vmatpush1.bf16.msra.mxu0 0
        %2618 = vmatprep.subr.bf16.mxu0 0
        %2619 = vmatpush1.bf16.msra.mxu0 0
        %2620 = vmatprep.subr.bf16.mxu0 0
        %2621 = vmatpush1.bf16.msra.mxu0 0
        %2622 = vmatprep.subr.bf16.mxu0 0
        %2623 = vmatpush1.bf16.msra.mxu0 0
        %2624 = vmatprep.subr.bf16.mxu0 0
        %2625 = vmatpush1.bf16.msra.mxu0 0
        %2626 = vmatprep.subr.bf16.mxu0 0
        %2627 = vmatpush1.bf16.msra.mxu0 0
        %2628 = vmatprep.mubr.bf16.mxu0 0
        %2629 = vmatmul.mubr.bf16.gmra.mrb[0].mxu0 %v2594
        %v2630 = vpop.f32.mrb[0].mxu0
        %v2631 = vadd.f32 %v2580, %v2630
        %v2632 = vpop.f32.mrb[0].mxu0
        %v2633 = vpop.f32.mrb[0].mxu0
        %v2634 = vpop.f32.mrb[0].mxu0
        %2635 = vdwg.mxu0
        %v2636 = vadd.f32 %v455, %v2631
        %v2637 = vsel %vm1034, %v2636, 0.0
        %2638 = vadd.xlane.f32.xlu0 %v2637
        %v2639 = vpop.xlane.xlu0 %2638
        %v2640 = vmul.f32 %v2639, %v1038
        %v2641 = vsub.f32 %v2636, %v2640
        %v2642 = vmul.f32 %v2641, %v2641
        %v2643 = vsel %vm1034, %v2642, 0.0
        %2644 = vadd.xlane.f32.xlu0 %v2643
        %v2645 = vpop.xlane.xlu0 %2644
        %v2646 = vmul.f32 %v2645, %v1038
        %v2647 = vadd.f32 %v2646, 1e-05
        %v2648 = vrsqrt.pop %v2647
        %v2649 = vmul.f32 %v2641, %v2648
        %v2650 = vlaneseq
        %v2651 = vshrl.u32 %v2650, 7
        %v2652 = vsub.s32 2, %v2651
        %v2653 = vrot.slane %v456, %v2652
        %v2654 = vmul.f32 %v2649, %v2653
        %v2655 = vlaneseq
        %v2656 = vshrl.u32 %v2655, 7
        %v2657 = vsub.s32 3, %v2656
        %v2658 = vrot.slane %v456, %v2657
        %v2659 = vadd.f32 %v2654, %v2658
        %v2660 = vpack.c.bf16 %v2659, %v2659
        %v2661 = vld [vmem:[#allocation10] sm:$0xf]
        %v2662 = vld [vmem:[#allocation10 + $0x4] sm:$0xf]
        %v2663 = vld [vmem:[#allocation10 + $0x8] sm:$0xf]
        %v2664 = vld [vmem:[#allocation10 + $0xc] sm:$0xf]
        %v2665 = vld [vmem:[%s8] sm:$0x1]
        %v2667 = vlaneseq
        %v2668 = vshrl.u32 %v2667, 7
        %v2669 = vsub.s32 0, %v2668
        %v2670 = vrot.slane %v2665, %v2669
        %v2676 = vunpack.c.l.b16 %v2661
        %v2677 = vunpack.c.l.b16 %v2662
        %v2678 = vunpack.c.l.b16 %v2663
        %v2679 = vunpack.c.l.b16 %v2664
        %v2680 = vpack.c.b16 %v2677, %v2676
        %v2681 = vpack.c.b16 %v2679, %v2678
        %v2685 = vsel %vm1034, %v2660, 0
        %2687 = vmatprep.subr.bf16.mxu0 0
        %2688 = vmatpush1.bf16.msra.mxu0 %v2680
        %2689 = vmatprep.subr.bf16.mxu0 0
        %2690 = vmatpush1.bf16.msra.mxu0 %v2681
        %2691 = vmatprep.subr.bf16.mxu0 0
        %2692 = vmatpush1.bf16.msra.mxu0 0
        %2693 = vmatprep.subr.bf16.mxu0 0
        %2694 = vmatpush1.bf16.msra.mxu0 0
        %2695 = vmatprep.subr.bf16.mxu0 0
        %2696 = vmatpush1.bf16.msra.mxu0 0
        %2697 = vmatprep.subr.bf16.mxu0 0
        %2698 = vmatpush1.bf16.msra.mxu0 0
        %2699 = vmatprep.subr.bf16.mxu0 0
        %2700 = vmatpush1.bf16.msra.mxu0 0
        %2701 = vmatprep.subr.bf16.mxu0 0
        %2702 = vmatpush1.bf16.msra.mxu0 0
        %2703 = vmatprep.subr.bf16.mxu0 0
        %2704 = vmatpush1.bf16.msra.mxu0 0
        %2705 = vmatprep.subr.bf16.mxu0 0
        %2706 = vmatpush1.bf16.msra.mxu0 0
        %2707 = vmatprep.subr.bf16.mxu0 0
        %2708 = vmatpush1.bf16.msra.mxu0 0
        %2709 = vmatprep.subr.bf16.mxu0 0
        %2710 = vmatpush1.bf16.msra.mxu0 0
        %2711 = vmatprep.subr.bf16.mxu0 0
        %2712 = vmatpush1.bf16.msra.mxu0 0
        %2713 = vmatprep.subr.bf16.mxu0 0
        %2714 = vmatpush1.bf16.msra.mxu0 0
        %2715 = vmatprep.subr.bf16.mxu0 0
        %2716 = vmatpush1.bf16.msra.mxu0 0
        %2717 = vmatprep.subr.bf16.mxu0 0
        %2718 = vmatpush1.bf16.msra.mxu0 0
        %2719 = vmatprep.mubr.bf16.mxu0 0
        %2720 = vmatmul.mubr.bf16.gmra.mrb[0].mxu0 %v2685
        %v2721 = vpop.f32.mrb[0].mxu0
        %v2722 = vadd.f32 %v2670, %v2721
        %v2723 = vpop.f32.mrb[0].mxu0
        %v2724 = vpop.f32.mrb[0].mxu0
        %v2725 = vpop.f32.mrb[0].mxu0
        %2726 = vdwg.mxu0
        %v2727 = vmax.f32 %v2722, 0.0
        %v2728 = vpack.c.bf16 %v2727, %v2727
        %v2729 = vld [vmem:[%s9] sm:$0xf]
        %v2730 = vld [vmem:[%s9 + $0x4] sm:$0xf]
        %v2731 = vld [vmem:[%s9 + $0x8] sm:$0xf]
        %v2732 = vld [vmem:[%s9 + $0xc] sm:$0xf]
        %v2733 = vld [vmem:[%s9 + $0x10] sm:$0xf]
        %v2734 = vld [vmem:[%s9 + $0x14] sm:$0xf]
        %v2735 = vld [vmem:[%s9 + $0x18] sm:$0xf]
        %v2736 = vld [vmem:[%s9 + $0x1c] sm:$0xf]
        %v2737 = vlaneseq
        %v2738 = vshrl.u32 %v2737, 7
        %v2739 = vsub.s32 6, %v2738
        %v2740 = vrot.slane %v456, %v2739
        %v2749 = vunpack.c.l.b16 %v2729
        %v2750 = vunpack.c.l.b16 %v2730
        %v2751 = vunpack.c.l.b16 %v2731
        %v2752 = vunpack.c.l.b16 %v2732
        %v2753 = vunpack.c.l.b16 %v2733
        %v2754 = vunpack.c.l.b16 %v2734
        %v2755 = vunpack.c.l.b16 %v2735
        %v2756 = vunpack.c.l.b16 %v2736
        %v2757 = vpack.c.b16 %v2750, %v2749
        %v2758 = vpack.c.b16 %v2752, %v2751
        %v2759 = vpack.c.b16 %v2754, %v2753
        %v2760 = vpack.c.b16 %v2756, %v2755
        %vm2765 = vcmask 523264
        %v2767 = vsel %vm2765, %v2728, 0
        %2769 = vmatprep.subr.bf16.mxu0 0
        %2770 = vmatpush1.bf16.msra.mxu0 %v2757
        %2771 = vmatprep.subr.bf16.mxu0 0
        %2772 = vmatpush1.bf16.msra.mxu0 %v2758
        %2773 = vmatprep.subr.bf16.mxu0 0
        %2774 = vmatpush1.bf16.msra.mxu0 %v2759
        %2775 = vmatprep.subr.bf16.mxu0 0
        %2776 = vmatpush1.bf16.msra.mxu0 %v2760
        %2777 = vmatprep.subr.bf16.mxu0 0
        %2778 = vmatpush1.bf16.msra.mxu0 0
        %2779 = vmatprep.subr.bf16.mxu0 0
        %2780 = vmatpush1.bf16.msra.mxu0 0
        %2781 = vmatprep.subr.bf16.mxu0 0
        %2782 = vmatpush1.bf16.msra.mxu0 0
        %2783 = vmatprep.subr.bf16.mxu0 0
        %2784 = vmatpush1.bf16.msra.mxu0 0
        %2785 = vmatprep.subr.bf16.mxu0 0
        %2786 = vmatpush1.bf16.msra.mxu0 0
        %2787 = vmatprep.subr.bf16.mxu0 0
        %2788 = vmatpush1.bf16.msra.mxu0 0
        %2789 = vmatprep.subr.bf16.mxu0 0
        %2790 = vmatpush1.bf16.msra.mxu0 0
        %2791 = vmatprep.subr.bf16.mxu0 0
        %2792 = vmatpush1.bf16.msra.mxu0 0
        %2793 = vmatprep.subr.bf16.mxu0 0
        %2794 = vmatpush1.bf16.msra.mxu0 0
        %2795 = vmatprep.subr.bf16.mxu0 0
        %2796 = vmatpush1.bf16.msra.mxu0 0
        %2797 = vmatprep.subr.bf16.mxu0 0
        %2798 = vmatpush1.bf16.msra.mxu0 0
        %2799 = vmatprep.subr.bf16.mxu0 0
        %2800 = vmatpush1.bf16.msra.mxu0 0
        %2801 = vmatprep.mubr.bf16.mxu0 0
        %2802 = vmatmul.mubr.bf16.gmra.mrb[0].mxu0 %v2767
        %v2803 = vpop.f32.mrb[0].mxu0
        %v2804 = vadd.f32 %v2740, %v2803
        %v2805 = vpop.f32.mrb[0].mxu0
        %v2806 = vpop.f32.mrb[0].mxu0
        %v2807 = vpop.f32.mrb[0].mxu0
        %2808 = vdwg.mxu0
        %v2809 = vadd.f32 %v2636, %v2804
        %2810 = vst.msk [vmem:[%s442] sm:$0xff] %vm1034, %v2809
        %s2811 = sand.u32 %s271, 1
        %s2812 = scalar_lea.sflag [#allocation6], %s2811
        %s2813 = sand.u32 %s271, 1
        %s2814 = smul.addr %s2813, 8
        %s2815 = scalar_lea.vmem [#allocation12], %s2814
        // Predicated region
        $region81: #{tpu_custom_call.1} parent=59 // pred_check
          %p2816 = pneg %p281
        $region82: #{tpu_custom_call.1} parent=59 // pred_check_branch
          %2818 = sbr.rel (%p2816) target = $region84
        $region83: #{tpu_custom_call.1} parent=59 // pred_region
          %s2820 = ssub.s32 128, 128
          %2821 = vsyncadd %s2812, %s2820
          %s2822 = sadd.s32 %s32, %s31
          %s2823 = smul.addr %s2822, 128
          %s2824 = scalar_lea.hbm %s10, %s2823
          %s2826 = sshll.u32 %s2815, 4
          %s2827 = int_to_ptr.vmem [resolvable:$true] %s2826
          %2829 = dma.vmem_to_hbm [thread:$0]  %s2827, 128, %s2824, %s2812
        $region84: #{tpu_custom_call.1} parent=59 // pred_fallthru
          _
      $region60: #{tpu_custom_call.1} parent=5 // pred_fallthru
        _
      %p2830 = scmp.le.s32.totalorder 2, %s22
      // Predicated region
      $region85: #{tpu_custom_call.1} parent=5 // pred_check
        %p2831 = pneg %p2830
      $region86: #{tpu_custom_call.1} parent=5 // pred_check_branch
        %2833 = sbr.rel (%p2831) target = $region88
      $region87: #{tpu_custom_call.1} parent=5 // pred_region
        %s2834 = ssub.s32 %s22, 2
        // Predicated region
        $region89: #{tpu_custom_call.1} parent=87 // pred_check
          %p2835 = pneg %p287
        $region90: #{tpu_custom_call.1} parent=87 // pred_check_branch
          %2837 = sbr.rel (%p2835) target = $region92
        $region91: #{tpu_custom_call.1} parent=87 // pred_region
          %s2838 = sand.u32 %s272, 1
          %s2839 = scalar_lea.sflag [#allocation6], %s2838
          %s2840 = sand.u32 %s272, 1
          %s2841 = smul.addr %s2840, 8
          %s2842 = scalar_lea.vmem [#allocation12], %s2841
          %2843 = dma.done %s2839, 128
        $region92: #{tpu_custom_call.1} parent=87 // pred_fallthru
          _
      $region88: #{tpu_custom_call.1} parent=5 // pred_fallthru
        _
    $region6: #{tpu_custom_call.1} parent=1 // loop_footer
      %s26 = sadd.s32 1, %s22
    $region7: #{tpu_custom_call.1} parent=1 // loop_footer_branch
      %21 = sbr.rel target = $region3
    $region8: #{tpu_custom_call.1} parent=1 // loop_exit
      _
    %2844 = vsyncpa [#allocation5], 1
    %s2845 = scalar_lea.sflag [#allocation5], 1
    %2846 = vsyncpa %s2845, 1
    %2847 = vsyncpa [#allocation8], 1
    %2848 = vsyncpa [#allocation11], 1
    %2849 = vsyncpa [#allocation6], 1
    %s2850 = scalar_lea.sflag [#allocation6], 1
    %2851 = vsyncpa %s2850, 1

</llo_original>
